<compile_context>
chip_gen: v7x
topology: tpu7x:2x2x1
jax: 0.10.0
libtpu: 0.0.40
codegen_flags: <defaults>
</compile_context>

<pallas_src>
import functools
import math

import jax
import jax.numpy as jnp
from jax.experimental import pallas as pl
from jax.experimental.pallas import tpu as pltpu


# ----------------------------------------------------------------------------
# Fused kernel: num_layers x TransformerEncoderLayer (post-norm, relu, eval-mode
# dropout) + mean-pool over tokens 1: + fc_multiclass.
# Grid = (batch_blocks, num_layers).  Activations live in a VMEM scratch across the
# layer axis; the batch axis is independent ("parallel").
# ----------------------------------------------------------------------------
def _dronelog_kernel(
    x_ref,        # (bb, S, D)  f32   input embeddings (constant over layer axis)
    kb_ref,       # (bb, 1, S)  f32   additive key-padding bias (-1e9 on pads)
    qkvw_ref,     # (1, D, 3D)  bf16  fused, pre-transposed Q|K|V weights (Q pre-scaled)
    qkvb_ref,     # (1, 1, 3D)  f32   fused Q|K|V bias (Q part pre-scaled)
    wo_ref,       # (1, D, D)   bf16  attention out-proj weight (in->out)
    w1_ref,       # (1, D, F)   bf16  FFN weight 1 (in->out)
    b1_ref,       # (1, 1, F)   f32   FFN bias 1
    w2_ref,       # (1, F, D)   bf16  FFN weight 2 (in->out)
    vec_ref,      # (1, 6, D)   f32   rows: bo, ln1_g, ln1_b, b2, ln2_g, ln2_b
    wfc_ref,      # (D, Cp)     bf16  classifier weight (in->out), lane-padded
    bfc_ref,      # (1, Cp)     f32   classifier bias, lane-padded
    out_ref,      # (bb, Cp)    f32   padded logits (written on last layer only)
    act_ref,      # scratch (bb*S, D) f32 : resident activations
    *, n_heads: int,
):
    layer = pl.program_id(1)
    B, S, D = x_ref.shape
    BS = B * S
    hd = D // n_heads

    # Load the token embeddings into the resident activation buffer on layer 0.
    @pl.when(layer == 0)
    def _():
        act_ref[...] = x_ref[...].reshape(BS, D)

    x = act_ref[...]                                   # (BS, D) f32
    kb_add = kb_ref[...]                               # (B, 1, S) f32

    # ---- multi-head self attention (torch MultiheadAttention semantics) ----
    # fused QKV projection: bf16 weights, f32 accumulation; 1/sqrt(hd) already folded
    # into the Q columns.
    qkv = jnp.dot(x.astype(jnp.bfloat16), qkvw_ref[0],
                  preferred_element_type=jnp.float32) + qkvb_ref[0]    # (BS, 3D) f32
    qkv_bf = qkv.astype(jnp.bfloat16)                                  # single cast
    q3 = qkv_bf[:, 0 * D:1 * D].reshape(B, S, D)
    k3 = qkv_bf[:, 1 * D:2 * D].reshape(B, S, D)
    v3 = qkv_bf[:, 2 * D:3 * D].reshape(B, S, D)

    vecs = vec_ref[0]                                  # (6, D) f32
    bo, ln1_g, ln1_b = vecs[0:1, :], vecs[1:2, :], vecs[2:3, :]
    b2, ln2_g, ln2_b = vecs[3:4, :], vecs[4:5, :], vecs[5:6, :]

    # Static unroll over heads (leading-batch einsums lower cleanly on Mosaic).
    # bf16 operands everywhere, f32 accumulation; head outputs are concatenated once
    # and consumed by a single full-K out-projection matmul.
    head_outs = []
    for h in range(n_heads):
        sl = slice(h * hd, (h + 1) * hd)
        qh, kh, vh = q3[:, :, sl], k3[:, :, sl], v3[:, :, sl]          # (B, S, hd) bf16
        s = jnp.einsum('bqd,bkd->bqk', qh, kh,
                       preferred_element_type=jnp.float32)              # (B, S, S) f32
        s = s + kb_add                                                  # mask pads
        s = s - jnp.max(s, axis=-1, keepdims=True)
        p = jnp.exp(s)
        p = p * pl.reciprocal(jnp.sum(p, axis=-1, keepdims=True), approx=True)
        oh = jnp.einsum('bqk,bkd->bqd', p.astype(jnp.bfloat16), vh,
                        preferred_element_type=jnp.float32)             # (B, S, hd) f32
        head_outs.append(oh.astype(jnp.bfloat16))
    o_cat = jnp.concatenate(head_outs, axis=-1).reshape(BS, D)          # (BS, D) bf16
    attn = jnp.dot(o_cat, wo_ref[0],
                   preferred_element_type=jnp.float32) + bo             # (BS, D) f32

    # ---- residual + LayerNorm 1 (f32 elementwise) ----
    r1 = x + attn
    mu1 = jnp.mean(r1, axis=-1, keepdims=True)
    var1 = jnp.mean((r1 - mu1) ** 2, axis=-1, keepdims=True)
    y1 = (r1 - mu1) * jax.lax.rsqrt(var1 + 1e-5) * ln1_g + ln1_b

    # ---- feed-forward (D -> F -> D, relu); bias+relu+bf16 cast fused in one expr ----
    h1 = jnp.maximum(
        jnp.dot(y1.astype(jnp.bfloat16), w1_ref[0],
                preferred_element_type=jnp.float32) + b1_ref[0], 0.0
    ).astype(jnp.bfloat16)                                              # (BS, F) bf16
    ff = jnp.dot(h1, w2_ref[0], preferred_element_type=jnp.float32) + b2  # (BS, D) f32

    # ---- residual + LayerNorm 2 ----
    r2 = y1 + ff
    mu2 = jnp.mean(r2, axis=-1, keepdims=True)
    var2 = jnp.mean((r2 - mu2) ** 2, axis=-1, keepdims=True)
    y2 = (r2 - mu2) * jax.lax.rsqrt(var2 + 1e-5) * ln2_g + ln2_b

    act_ref[...] = y2

    # ---- final layer: mean-pool over tokens 1: and classify (lane-dense Cp) ----
    @pl.when(layer == pl.num_programs(1) - 1)
    def _():
        y = y2.reshape(B, S, D)
        pooled = (jnp.sum(y, axis=1) - y[:, 0, :]) * (1.0 / (S - 1))    # (B, D)
        logits = jnp.dot(pooled.astype(jnp.bfloat16), wfc_ref[...],
                         preferred_element_type=jnp.float32) + bfc_ref[...]
        out_ref[...] = logits.astype(out_ref.dtype)


def dronelog_fused(x, key_bias, p, *, n_heads, batch_block=None):
    """x: (B, S, D) f32, key_bias: (B, 1, S) f32, p: prepared/stacked params (arrays)."""
    B, S, D = x.shape
    L = p["qkv_w"].shape[0]
    F = p["w1"].shape[-1]
    Cp = p["wfc"].shape[-1]

    bb = B if batch_block is None else batch_block
    assert B % bb == 0, "batch_block must divide batch"
    # (8,128) rule on the output block: the sublane dim must be divisible by 8 unless
    # it spans the whole batch.
    assert bb == B or bb % 8 == 0, "batch_block must be B or a multiple of 8"
    nb = B // bb

    def per_layer(shape):
        nz = len(shape) - 1
        return pl.BlockSpec((1,) + shape[1:], lambda b, l, nz=nz: (l,) + (0,) * nz)

    def per_batch(shape):
        nz = len(shape) - 1
        return pl.BlockSpec((bb,) + shape[1:], lambda b, l, nz=nz: (b,) + (0,) * nz)

    def whole(shape):
        nd = len(shape)
        return pl.BlockSpec(shape, lambda b, l, nd=nd: (0,) * nd)

    in_specs = [
        per_batch((B, S, D)),        # x
        per_batch((B, 1, S)),        # key bias
        per_layer((L, D, 3 * D)),    # fused QKV weight (Q pre-scaled)
        per_layer((L, 1, 3 * D)),    # fused QKV bias
        per_layer((L, D, D)),        # out-proj weight
        per_layer((L, D, F)),        # FFN w1
        per_layer((L, 1, F)),        # FFN b1
        per_layer((L, F, D)),        # FFN w2
        per_layer((L, 6, D)),        # packed small vectors
        whole((D, Cp)),              # classifier weight
        whole((1, Cp)),              # classifier bias
    ]
    out_spec = pl.BlockSpec((bb, Cp), lambda b, l: (b, 0))

    # NOTE: at BERT-like sizes (D=768, F=3072) raise vmem_limit_bytes / tile the FFN
    # weights; at the shapes used here the default scoped-VMEM limit is ample.
    return pl.pallas_call(
        functools.partial(_dronelog_kernel, n_heads=n_heads),
        out_shape=jax.ShapeDtypeStruct((B, Cp), jnp.float32),
        grid_spec=pltpu.PrefetchScalarGridSpec(
            num_scalar_prefetch=0,
            grid=(nb, L),
            in_specs=in_specs,
            out_specs=out_spec,
            scratch_shapes=[pltpu.VMEM((bb * S, D), jnp.float32)],
        ),
        compiler_params=pltpu.CompilerParams(
            dimension_semantics=("parallel", "arbitrary")),
    )(x, key_bias, p["qkv_w"], p["qkv_b"], p["wo"], p["w1"], p["b1"],
      p["w2"], p["vecs"], p["wfc"], p["bfc"])


# ----------------------------------------------------------------------------
# Parameter init (torch-style layouts) and one-time packing for the fused kernel.
# ----------------------------------------------------------------------------
def init_params(key, *, vocab, hidden, n_heads, num_layers, ff, num_classes):
    keys = iter(jax.random.split(key, 128))

    def lin(out_d, in_d):
        # torch nn.Linear layout: weight (out, in), bias (out,)
        w = 0.02 * jax.random.normal(next(keys), (out_d, in_d), jnp.float32)
        b = 0.02 * jax.random.normal(next(keys), (1, out_d), jnp.float32)
        return w, b

    params = {
        "embed": 0.02 * jax.random.normal(next(keys), (vocab, hidden), jnp.float32),
        "layers": [],
    }
    for _ in range(num_layers):
        wq, bq = lin(hidden, hidden)   # = in_proj_weight[0:D],   in_proj_bias[0:D]
        wk, bk = lin(hidden, hidden)   # = in_proj_weight[D:2D],  in_proj_bias[D:2D]
        wv, bv = lin(hidden, hidden)   # = in_proj_weight[2D:3D], in_proj_bias[2D:3D]
        wo, bo = lin(hidden, hidden)
        w1, b1 = lin(ff, hidden)
        w2, b2 = lin(hidden, ff)
        params["layers"].append(dict(
            wq=wq, bq=bq, wk=wk, bk=bk, wv=wv, bv=bv, wo=wo, bo=bo,
            ln1_g=jnp.ones((1, hidden), jnp.float32), ln1_b=jnp.zeros((1, hidden), jnp.float32),
            w1=w1, b1=b1, w2=w2, b2=b2,
            ln2_g=jnp.ones((1, hidden), jnp.float32), ln2_b=jnp.zeros((1, hidden), jnp.float32),
        ))
    params["fc_w"], params["fc_b"] = lin(num_classes, hidden)
    return params


def prepare_params(params, *, n_heads):
    """One-time model-load packing: pre-transpose (in->out), fuse QKV (with the
    1/sqrt(hd) softmax scale folded into the Q columns and Q bias), pack vectors,
    stack layers, cast big weights to bf16, lane-pad the classifier head.
    Call this ONCE outside the jitted forward; its outputs are the only weights the
    kernel ever reads."""
    hidden = params["embed"].shape[1]
    scale = 1.0 / math.sqrt(hidden // n_heads)

    def stack(fn):
        return jnp.stack([fn(lp) for lp in params["layers"]], axis=0)

    qkv_w = stack(lambda lp: jnp.concatenate(
        [lp["wq"].T * scale, lp["wk"].T, lp["wv"].T], axis=1)).astype(jnp.bfloat16)  # (L, D, 3D)
    qkv_b = stack(lambda lp: jnp.concatenate(
        [lp["bq"] * scale, lp["bk"], lp["bv"]], axis=1))                             # (L, 1, 3D)
    wo = stack(lambda lp: lp["wo"].T).astype(jnp.bfloat16)                           # (L, D, D)
    w1 = stack(lambda lp: lp["w1"].T).astype(jnp.bfloat16)                           # (L, D, F)
    b1 = stack(lambda lp: lp["b1"])                                                  # (L, 1, F)
    w2 = stack(lambda lp: lp["w2"].T).astype(jnp.bfloat16)                           # (L, F, D)
    vecs = stack(lambda lp: jnp.concatenate(
        [lp["bo"], lp["ln1_g"], lp["ln1_b"],
         lp["b2"], lp["ln2_g"], lp["ln2_b"]], axis=0))                               # (L, 6, D)

    num_classes, hidden = params["fc_w"].shape
    c_pad = max(128, pl.cdiv(num_classes, 128) * 128)
    wfc = jnp.zeros((hidden, c_pad), jnp.float32)
    wfc = wfc.at[:, :num_classes].set(params["fc_w"].T).astype(jnp.bfloat16)         # (D, Cp)
    bfc = jnp.zeros((1, c_pad), jnp.float32).at[:, :num_classes].set(params["fc_b"])

    prep = dict(qkv_w=qkv_w, qkv_b=qkv_b, wo=wo, w1=w1, b1=b1, w2=w2, vecs=vecs,
                wfc=wfc, bfc=bfc)
    return jax.device_put(prep), num_classes


# ----------------------------------------------------------------------------
# Full forward (weights already prepared at load time).
# ----------------------------------------------------------------------------
def dronelog_forward(embed, prep, input_ids, attention_mask, *, n_heads, num_classes):
    # --- "bert_model(...).last_hidden_state" stand-in: embedding lookup (glue) ---
    # TODO(synk): real pretrained BERT encoder not reproduced here.
    x = jnp.take(embed, input_ids, axis=0)                               # (B, S, D)
    B, S, _ = x.shape

    # src_key_padding_mask = (1 - attention_mask).bool() -> additive -1e9 bias on pads
    key_bias = jnp.where(attention_mask == 0, -1e9, 0.0).astype(jnp.float32)
    key_bias = key_bias.reshape(B, 1, S)

    logits_padded = dronelog_fused(x, key_bias, prep, n_heads=n_heads)   # (B, Cp)
    return logits_padded[:, :num_classes]


if __name__ == "__main__":
    # small shapes consistent with the module
    B, S = 2, 8
    HIDDEN = 32          # bert_model.config.hidden_size
    N_HEADS = 4
    NUM_LAYERS = 2
    FF = 2048            # dim_feedforward hardcoded in the module
    NUM_CLASSES = 5
    VOCAB = 64

    key = jax.random.PRNGKey(0)
    k_ids, k_params = jax.random.split(key)

    input_ids = jax.random.randint(k_ids, (B, S), 0, VOCAB, dtype=jnp.int32)
    attention_mask = jnp.array(
        [[1, 1, 1, 1, 1, 1, 1, 1],
         [1, 1, 1, 1, 1, 1, 0, 0]], dtype=jnp.int32)

    params = init_params(k_params, vocab=VOCAB, hidden=HIDDEN, n_heads=N_HEADS,
                         num_layers=NUM_LAYERS, ff=FF, num_classes=NUM_CLASSES)

    # One-time weight packing at model load time (outside the jitted forward).
    prep, num_classes = prepare_params(params, n_heads=N_HEADS)

    fwd = jax.jit(functools.partial(dronelog_forward, n_heads=N_HEADS,
                                    num_classes=num_classes))
    logits = fwd(params["embed"], prep, input_ids, attention_mask)
    jax.block_until_ready(logits)
    assert logits.shape == (B, NUM_CLASSES)
    print("KERNEL_OK")
</pallas_src>

<mosaic_0001>
module attributes {stable_mosaic.version = 11 : i64} {
  func.func @_dronelog_kernel(%arg0: i32, %arg1: i32, %arg2: memref<2x8x32xf32, #tpu.memory_space<vmem>>, %arg3: memref<2x1x8xf32, #tpu.memory_space<vmem>>, %arg4: memref<1x32x96xbf16, #tpu.memory_space<vmem>>, %arg5: memref<1x1x96xf32, #tpu.memory_space<vmem>>, %arg6: memref<1x32x32xbf16, #tpu.memory_space<vmem>>, %arg7: memref<1x32x2048xbf16, #tpu.memory_space<vmem>>, %arg8: memref<1x1x2048xf32, #tpu.memory_space<vmem>>, %arg9: memref<1x2048x32xbf16, #tpu.memory_space<vmem>>, %arg10: memref<1x6x32xf32, #tpu.memory_space<vmem>>, %arg11: memref<32x128xbf16, #tpu.memory_space<vmem>>, %arg12: memref<1x128xf32, #tpu.memory_space<vmem>>, %arg13: memref<2x128xf32, #tpu.memory_space<vmem>>, %arg14: memref<16x32xf32, #tpu.memory_space<vmem>>) attributes {dimension_semantics = [#tpu.dimension_semantics<parallel>, #tpu.dimension_semantics<arbitrary>], iteration_bounds = array<i64: 1, 2>, scalar_prefetch = 0 : i64, scratch_operands = 1 : i64, tpu.core_type = #tpu.core_type<tc>, window_params = [{transform_indices = @transform_0, window_bounds = array<i64: 2, 8, 32>}, {transform_indices = @transform_1, window_bounds = array<i64: 2, 1, 8>}, {transform_indices = @transform_2, window_bounds = array<i64: 1, 32, 96>}, {transform_indices = @transform_3, window_bounds = array<i64: 1, 1, 96>}, {transform_indices = @transform_4, window_bounds = array<i64: 1, 32, 32>}, {transform_indices = @transform_5, window_bounds = array<i64: 1, 32, 2048>}, {transform_indices = @transform_6, window_bounds = array<i64: 1, 1, 2048>}, {transform_indices = @transform_7, window_bounds = array<i64: 1, 2048, 32>}, {transform_indices = @transform_8, window_bounds = array<i64: 1, 6, 32>}, {pipeline_mode = #tpu.pipeline_mode<synchronous>, transform_indices = @transform_9, window_bounds = array<i64: 32, 128>}, {pipeline_mode = #tpu.pipeline_mode<synchronous>, transform_indices = @transform_10, window_bounds = array<i64: 1, 128>}, {transform_indices = @transform_11, window_bounds = array<i64: 2, 128>}]} {
    %c0_i32 = arith.constant 0 : i32
    %0 = arith.cmpi eq, %arg1, %c0_i32 : i32
    %1 = arith.extui %0 : i1 to i32
    %c0_i32_0 = arith.constant 0 : i32
    %2 = arith.cmpi ne, %1, %c0_i32_0 : i32
    scf.if %2 {
      %c0_59 = arith.constant 0 : index
      %c0_60 = arith.constant 0 : index
      %c0_61 = arith.constant 0 : index
      %177 = vector.load %arg2[%c0_59, %c0_60, %c0_61] : memref<2x8x32xf32, #tpu.memory_space<vmem>>, vector<2x8x32xf32>
      %178 = vector.shape_cast %177 : vector<2x8x32xf32> to vector<16x32xf32>
      %c0_62 = arith.constant 0 : index
      %c0_63 = arith.constant 0 : index
      %179 = vector.load %arg14[%c0_62, %c0_63] : memref<16x32xf32, #tpu.memory_space<vmem>>, vector<16x32xf32>
      tpu.vector_store %arg14[%c0_62, %c0_63], %178 {strides = array<i32>} : memref<16x32xf32, #tpu.memory_space<vmem>>, vector<16x32xf32>,
    } else {
    }
    %c0 = arith.constant 0 : index
    %c0_1 = arith.constant 0 : index
    %3 = vector.load %arg14[%c0, %c0_1] : memref<16x32xf32, #tpu.memory_space<vmem>>, vector<16x32xf32>
    %c0_2 = arith.constant 0 : index
    %c0_3 = arith.constant 0 : index
    %c0_4 = arith.constant 0 : index
    %4 = vector.load %arg3[%c0_2, %c0_3, %c0_4] : memref<2x1x8xf32, #tpu.memory_space<vmem>>, vector<2x1x8xf32>
    %5 = arith.truncf %3 : vector<16x32xf32> to vector<16x32xbf16>
    %c0_5 = arith.constant 0 : index
    %c0_6 = arith.constant 0 : index
    %c0_7 = arith.constant 0 : index
    %6 = vector.load %arg4[%c0_5, %c0_6, %c0_7] : memref<1x32x96xbf16, #tpu.memory_space<vmem>>, vector<1x32x96xbf16>
    %7 = vector.shape_cast %6 : vector<1x32x96xbf16> to vector<32x96xbf16>
    %cst = arith.constant dense<0.000000e+00> : vector<16x96xf32>
    %8 = tpu.matmul %5, %7, %cst {dimension_numbers = #tpu.dot_dimension_numbers<[1], [0], [0], [1], [0, 0, 1, 1], [], []>} : vector<16x32xbf16>, vector<32x96xbf16>, vector<16x96xf32> -> vector<16x96xf32>
    %c0_8 = arith.constant 0 : index
    %c0_9 = arith.constant 0 : index
    %c0_10 = arith.constant 0 : index
    %9 = vector.load %arg5[%c0_8, %c0_9, %c0_10] : memref<1x1x96xf32, #tpu.memory_space<vmem>>, vector<1x1x96xf32>
    %10 = vector.shape_cast %9 : vector<1x1x96xf32> to vector<1x96xf32>
    %11 = vector.broadcast %10 : vector<1x96xf32> to vector<16x96xf32>
    %12 = arith.addf %8, %11 : vector<16x96xf32>
    %13 = arith.truncf %12 : vector<16x96xf32> to vector<16x96xbf16>
    %14 = vector.extract_strided_slice %13 {offsets = [0, 0], sizes = [16, 32], strides = [1, 1]} : vector<16x96xbf16> to vector<16x32xbf16>
    %15 = vector.shape_cast %14 : vector<16x32xbf16> to vector<2x8x32xbf16>
    %16 = vector.extract_strided_slice %13 {offsets = [0, 32], sizes = [16, 32], strides = [1, 1]} : vector<16x96xbf16> to vector<16x32xbf16>
    %17 = vector.shape_cast %16 : vector<16x32xbf16> to vector<2x8x32xbf16>
    %18 = vector.extract_strided_slice %13 {offsets = [0, 64], sizes = [16, 32], strides = [1, 1]} : vector<16x96xbf16> to vector<16x32xbf16>
    %19 = vector.shape_cast %18 : vector<16x32xbf16> to vector<2x8x32xbf16>
    %c0_11 = arith.constant 0 : index
    %c0_12 = arith.constant 0 : index
    %c0_13 = arith.constant 0 : index
    %20 = vector.load %arg10[%c0_11, %c0_12, %c0_13] : memref<1x6x32xf32, #tpu.memory_space<vmem>>, vector<1x6x32xf32>
    %21 = vector.shape_cast %20 : vector<1x6x32xf32> to vector<6x32xf32>
    %22 = vector.extract_strided_slice %21 {offsets = [0, 0], sizes = [1, 32], strides = [1, 1]} : vector<6x32xf32> to vector<1x32xf32>
    %23 = vector.extract_strided_slice %21 {offsets = [1, 0], sizes = [1, 32], strides = [1, 1]} : vector<6x32xf32> to vector<1x32xf32>
    %24 = vector.extract_strided_slice %21 {offsets = [2, 0], sizes = [1, 32], strides = [1, 1]} : vector<6x32xf32> to vector<1x32xf32>
    %25 = vector.extract_strided_slice %21 {offsets = [3, 0], sizes = [1, 32], strides = [1, 1]} : vector<6x32xf32> to vector<1x32xf32>
    %26 = vector.extract_strided_slice %21 {offsets = [4, 0], sizes = [1, 32], strides = [1, 1]} : vector<6x32xf32> to vector<1x32xf32>
    %27 = vector.extract_strided_slice %21 {offsets = [5, 0], sizes = [1, 32], strides = [1, 1]} : vector<6x32xf32> to vector<1x32xf32>
    %28 = vector.extract_strided_slice %15 {offsets = [0, 0, 0], sizes = [2, 8, 8], strides = [1, 1, 1]} : vector<2x8x32xbf16> to vector<2x8x8xbf16>
    %29 = vector.extract_strided_slice %17 {offsets = [0, 0, 0], sizes = [2, 8, 8], strides = [1, 1, 1]} : vector<2x8x32xbf16> to vector<2x8x8xbf16>
    %30 = vector.extract_strided_slice %19 {offsets = [0, 0, 0], sizes = [2, 8, 8], strides = [1, 1, 1]} : vector<2x8x32xbf16> to vector<2x8x8xbf16>
    "tpu.trace_start"() <{level = 10 : i32, message = "bqd,bkd->bqk"}> : () -> ()
    %cst_14 = arith.constant dense<0.000000e+00> : vector<2x8x8xf32>
    %31 = tpu.matmul %28, %29, %cst_14 {dimension_numbers = #tpu.dot_dimension_numbers<[2], [2], [1], [1], [0, 0, 0, 1, 1, 1], [0], [0]>} : vector<2x8x8xbf16>, vector<2x8x8xbf16>, vector<2x8x8xf32> -> vector<2x8x8xf32>
    "tpu.trace_stop"() : () -> ()
    %32 = vector.broadcast %4 : vector<2x1x8xf32> to vector<2x8x8xf32>
    %33 = arith.addf %31, %32 : vector<2x8x8xf32>
    %cst_15 = arith.constant dense<0xFF800000> : vector<2x8xf32>
    %34 = vector.multi_reduction <maximumf>, %33, %cst_15 [2] : vector<2x8x8xf32> to vector<2x8xf32>
    %35 = vector.shape_cast %34 : vector<2x8xf32> to vector<2x8x1xf32>
    %36 = vector.broadcast %35 : vector<2x8x1xf32> to vector<2x8x8xf32>
    %37 = arith.subf %33, %36 : vector<2x8x8xf32>
    %38 = math.exp %37 : vector<2x8x8xf32>
    %cst_16 = arith.constant dense<0.000000e+00> : vector<2x8xf32>
    %39 = vector.multi_reduction <add>, %38, %cst_16 [2] : vector<2x8x8xf32> to vector<2x8xf32>
    %40 = vector.shape_cast %39 : vector<2x8xf32> to vector<2x8x1xf32>
    %41 = tpu.reciprocal %40 {approx = true} : vector<2x8x1xf32> -> vector<2x8x1xf32>
    %42 = vector.broadcast %41 : vector<2x8x1xf32> to vector<2x8x8xf32>
    %43 = arith.mulf %38, %42 : vector<2x8x8xf32>
    %44 = arith.truncf %43 : vector<2x8x8xf32> to vector<2x8x8xbf16>
    "tpu.trace_start"() <{level = 10 : i32, message = "bqk,bkd->bqd"}> : () -> ()
    %cst_17 = arith.constant dense<0.000000e+00> : vector<2x8x8xf32>
    %45 = tpu.matmul %44, %30, %cst_17 {dimension_numbers = #tpu.dot_dimension_numbers<[2], [1], [1], [2], [0, 0, 0, 1, 1, 2], [0], [0]>} : vector<2x8x8xbf16>, vector<2x8x8xbf16>, vector<2x8x8xf32> -> vector<2x8x8xf32>
    "tpu.trace_stop"() : () -> ()
    %46 = arith.truncf %45 : vector<2x8x8xf32> to vector<2x8x8xbf16>
    %47 = vector.extract_strided_slice %15 {offsets = [0, 0, 8], sizes = [2, 8, 8], strides = [1, 1, 1]} : vector<2x8x32xbf16> to vector<2x8x8xbf16>
    %48 = vector.extract_strided_slice %17 {offsets = [0, 0, 8], sizes = [2, 8, 8], strides = [1, 1, 1]} : vector<2x8x32xbf16> to vector<2x8x8xbf16>
    %49 = vector.extract_strided_slice %19 {offsets = [0, 0, 8], sizes = [2, 8, 8], strides = [1, 1, 1]} : vector<2x8x32xbf16> to vector<2x8x8xbf16>
    "tpu.trace_start"() <{level = 10 : i32, message = "bqd,bkd->bqk"}> : () -> ()
    %cst_18 = arith.constant dense<0.000000e+00> : vector<2x8x8xf32>
    %50 = tpu.matmul %47, %48, %cst_18 {dimension_numbers = #tpu.dot_dimension_numbers<[2], [2], [1], [1], [0, 0, 0, 1, 1, 1], [0], [0]>} : vector<2x8x8xbf16>, vector<2x8x8xbf16>, vector<2x8x8xf32> -> vector<2x8x8xf32>
    "tpu.trace_stop"() : () -> ()
    %51 = vector.broadcast %4 : vector<2x1x8xf32> to vector<2x8x8xf32>
    %52 = arith.addf %50, %51 : vector<2x8x8xf32>
    %cst_19 = arith.constant dense<0xFF800000> : vector<2x8xf32>
    %53 = vector.multi_reduction <maximumf>, %52, %cst_19 [2] : vector<2x8x8xf32> to vector<2x8xf32>
    %54 = vector.shape_cast %53 : vector<2x8xf32> to vector<2x8x1xf32>
    %55 = vector.broadcast %54 : vector<2x8x1xf32> to vector<2x8x8xf32>
    %56 = arith.subf %52, %55 : vector<2x8x8xf32>
    %57 = math.exp %56 : vector<2x8x8xf32>
    %cst_20 = arith.constant dense<0.000000e+00> : vector<2x8xf32>
    %58 = vector.multi_reduction <add>, %57, %cst_20 [2] : vector<2x8x8xf32> to vector<2x8xf32>
    %59 = vector.shape_cast %58 : vector<2x8xf32> to vector<2x8x1xf32>
    %60 = tpu.reciprocal %59 {approx = true} : vector<2x8x1xf32> -> vector<2x8x1xf32>
    %61 = vector.broadcast %60 : vector<2x8x1xf32> to vector<2x8x8xf32>
    %62 = arith.mulf %57, %61 : vector<2x8x8xf32>
    %63 = arith.truncf %62 : vector<2x8x8xf32> to vector<2x8x8xbf16>
    "tpu.trace_start"() <{level = 10 : i32, message = "bqk,bkd->bqd"}> : () -> ()
    %cst_21 = arith.constant dense<0.000000e+00> : vector<2x8x8xf32>
    %64 = tpu.matmul %63, %49, %cst_21 {dimension_numbers = #tpu.dot_dimension_numbers<[2], [1], [1], [2], [0, 0, 0, 1, 1, 2], [0], [0]>} : vector<2x8x8xbf16>, vector<2x8x8xbf16>, vector<2x8x8xf32> -> vector<2x8x8xf32>
    "tpu.trace_stop"() : () -> ()
    %65 = arith.truncf %64 : vector<2x8x8xf32> to vector<2x8x8xbf16>
    %66 = vector.extract_strided_slice %15 {offsets = [0, 0, 16], sizes = [2, 8, 8], strides = [1, 1, 1]} : vector<2x8x32xbf16> to vector<2x8x8xbf16>
    %67 = vector.extract_strided_slice %17 {offsets = [0, 0, 16], sizes = [2, 8, 8], strides = [1, 1, 1]} : vector<2x8x32xbf16> to vector<2x8x8xbf16>
    %68 = vector.extract_strided_slice %19 {offsets = [0, 0, 16], sizes = [2, 8, 8], strides = [1, 1, 1]} : vector<2x8x32xbf16> to vector<2x8x8xbf16>
    "tpu.trace_start"() <{level = 10 : i32, message = "bqd,bkd->bqk"}> : () -> ()
    %cst_22 = arith.constant dense<0.000000e+00> : vector<2x8x8xf32>
    %69 = tpu.matmul %66, %67, %cst_22 {dimension_numbers = #tpu.dot_dimension_numbers<[2], [2], [1], [1], [0, 0, 0, 1, 1, 1], [0], [0]>} : vector<2x8x8xbf16>, vector<2x8x8xbf16>, vector<2x8x8xf32> -> vector<2x8x8xf32>
    "tpu.trace_stop"() : () -> ()
    %70 = vector.broadcast %4 : vector<2x1x8xf32> to vector<2x8x8xf32>
    %71 = arith.addf %69, %70 : vector<2x8x8xf32>
    %cst_23 = arith.constant dense<0xFF800000> : vector<2x8xf32>
    %72 = vector.multi_reduction <maximumf>, %71, %cst_23 [2] : vector<2x8x8xf32> to vector<2x8xf32>
    %73 = vector.shape_cast %72 : vector<2x8xf32> to vector<2x8x1xf32>
    %74 = vector.broadcast %73 : vector<2x8x1xf32> to vector<2x8x8xf32>
    %75 = arith.subf %71, %74 : vector<2x8x8xf32>
    %76 = math.exp %75 : vector<2x8x8xf32>
    %cst_24 = arith.constant dense<0.000000e+00> : vector<2x8xf32>
    %77 = vector.multi_reduction <add>, %76, %cst_24 [2] : vector<2x8x8xf32> to vector<2x8xf32>
    %78 = vector.shape_cast %77 : vector<2x8xf32> to vector<2x8x1xf32>
    %79 = tpu.reciprocal %78 {approx = true} : vector<2x8x1xf32> -> vector<2x8x1xf32>
    %80 = vector.broadcast %79 : vector<2x8x1xf32> to vector<2x8x8xf32>
    %81 = arith.mulf %76, %80 : vector<2x8x8xf32>
    %82 = arith.truncf %81 : vector<2x8x8xf32> to vector<2x8x8xbf16>
    "tpu.trace_start"() <{level = 10 : i32, message = "bqk,bkd->bqd"}> : () -> ()
    %cst_25 = arith.constant dense<0.000000e+00> : vector<2x8x8xf32>
    %83 = tpu.matmul %82, %68, %cst_25 {dimension_numbers = #tpu.dot_dimension_numbers<[2], [1], [1], [2], [0, 0, 0, 1, 1, 2], [0], [0]>} : vector<2x8x8xbf16>, vector<2x8x8xbf16>, vector<2x8x8xf32> -> vector<2x8x8xf32>
    "tpu.trace_stop"() : () -> ()
    %84 = arith.truncf %83 : vector<2x8x8xf32> to vector<2x8x8xbf16>
    %85 = vector.extract_strided_slice %15 {offsets = [0, 0, 24], sizes = [2, 8, 8], strides = [1, 1, 1]} : vector<2x8x32xbf16> to vector<2x8x8xbf16>
    %86 = vector.extract_strided_slice %17 {offsets = [0, 0, 24], sizes = [2, 8, 8], strides = [1, 1, 1]} : vector<2x8x32xbf16> to vector<2x8x8xbf16>
    %87 = vector.extract_strided_slice %19 {offsets = [0, 0, 24], sizes = [2, 8, 8], strides = [1, 1, 1]} : vector<2x8x32xbf16> to vector<2x8x8xbf16>
    "tpu.trace_start"() <{level = 10 : i32, message = "bqd,bkd->bqk"}> : () -> ()
    %cst_26 = arith.constant dense<0.000000e+00> : vector<2x8x8xf32>
    %88 = tpu.matmul %85, %86, %cst_26 {dimension_numbers = #tpu.dot_dimension_numbers<[2], [2], [1], [1], [0, 0, 0, 1, 1, 1], [0], [0]>} : vector<2x8x8xbf16>, vector<2x8x8xbf16>, vector<2x8x8xf32> -> vector<2x8x8xf32>
    "tpu.trace_stop"() : () -> ()
    %89 = vector.broadcast %4 : vector<2x1x8xf32> to vector<2x8x8xf32>
    %90 = arith.addf %88, %89 : vector<2x8x8xf32>
    %cst_27 = arith.constant dense<0xFF800000> : vector<2x8xf32>
    %91 = vector.multi_reduction <maximumf>, %90, %cst_27 [2] : vector<2x8x8xf32> to vector<2x8xf32>
    %92 = vector.shape_cast %91 : vector<2x8xf32> to vector<2x8x1xf32>
    %93 = vector.broadcast %92 : vector<2x8x1xf32> to vector<2x8x8xf32>
    %94 = arith.subf %90, %93 : vector<2x8x8xf32>
    %95 = math.exp %94 : vector<2x8x8xf32>
    %cst_28 = arith.constant dense<0.000000e+00> : vector<2x8xf32>
    %96 = vector.multi_reduction <add>, %95, %cst_28 [2] : vector<2x8x8xf32> to vector<2x8xf32>
    %97 = vector.shape_cast %96 : vector<2x8xf32> to vector<2x8x1xf32>
    %98 = tpu.reciprocal %97 {approx = true} : vector<2x8x1xf32> -> vector<2x8x1xf32>
    %99 = vector.broadcast %98 : vector<2x8x1xf32> to vector<2x8x8xf32>
    %100 = arith.mulf %95, %99 : vector<2x8x8xf32>
    %101 = arith.truncf %100 : vector<2x8x8xf32> to vector<2x8x8xbf16>
    "tpu.trace_start"() <{level = 10 : i32, message = "bqk,bkd->bqd"}> : () -> ()
    %cst_29 = arith.constant dense<0.000000e+00> : vector<2x8x8xf32>
    %102 = tpu.matmul %101, %87, %cst_29 {dimension_numbers = #tpu.dot_dimension_numbers<[2], [1], [1], [2], [0, 0, 0, 1, 1, 2], [0], [0]>} : vector<2x8x8xbf16>, vector<2x8x8xbf16>, vector<2x8x8xf32> -> vector<2x8x8xf32>
    "tpu.trace_stop"() : () -> ()
    %103 = arith.truncf %102 : vector<2x8x8xf32> to vector<2x8x8xbf16>
    %104 = tpu.concatenate %46, %65, %84, %103 in 2 : vector<2x8x8xbf16>, vector<2x8x8xbf16>, vector<2x8x8xbf16>, vector<2x8x8xbf16> -> vector<2x8x32xbf16>
    %105 = vector.shape_cast %104 : vector<2x8x32xbf16> to vector<16x32xbf16>
    %c0_30 = arith.constant 0 : index
    %c0_31 = arith.constant 0 : index
    %c0_32 = arith.constant 0 : index
    %106 = vector.load %arg6[%c0_30, %c0_31, %c0_32] : memref<1x32x32xbf16, #tpu.memory_space<vmem>>, vector<1x32x32xbf16>
    %107 = vector.shape_cast %106 : vector<1x32x32xbf16> to vector<32x32xbf16>
    %cst_33 = arith.constant dense<0.000000e+00> : vector<16x32xf32>
    %108 = tpu.matmul %105, %107, %cst_33 {dimension_numbers = #tpu.dot_dimension_numbers<[1], [0], [0], [1], [0, 0, 1, 1], [], []>} : vector<16x32xbf16>, vector<32x32xbf16>, vector<16x32xf32> -> vector<16x32xf32>
    %109 = vector.broadcast %22 : vector<1x32xf32> to vector<16x32xf32>
    %110 = arith.addf %108, %109 : vector<16x32xf32>
    %111 = arith.addf %3, %110 : vector<16x32xf32>
    %cst_34 = arith.constant dense<0.000000e+00> : vector<16xf32>
    %112 = vector.multi_reduction <add>, %111, %cst_34 [1] : vector<16x32xf32> to vector<16xf32>
    %113 = vector.shape_cast %112 : vector<16xf32> to vector<16x1xf32>
    %cst_35 = arith.constant 3.200000e+01 : f32
    %114 = vector.broadcast %cst_35 : f32 to vector<16x1xf32>
    %115 = arith.divf %113, %114 : vector<16x1xf32>
    %116 = vector.broadcast %115 : vector<16x1xf32> to vector<16x32xf32>
    %117 = arith.subf %111, %116 : vector<16x32xf32>
    %118 = arith.mulf %117, %117 : vector<16x32xf32>
    %cst_36 = arith.constant dense<0.000000e+00> : vector<16xf32>
    %119 = vector.multi_reduction <add>, %118, %cst_36 [1] : vector<16x32xf32> to vector<16xf32>
    %120 = vector.shape_cast %119 : vector<16xf32> to vector<16x1xf32>
    %cst_37 = arith.constant 3.200000e+01 : f32
    %121 = vector.broadcast %cst_37 : f32 to vector<16x1xf32>
    %122 = arith.divf %120, %121 : vector<16x1xf32>
    %123 = vector.broadcast %115 : vector<16x1xf32> to vector<16x32xf32>
    %124 = arith.subf %111, %123 : vector<16x32xf32>
    %cst_38 = arith.constant 9.99999974E-6 : f32
    %125 = vector.broadcast %cst_38 : f32 to vector<16x1xf32>
    %126 = arith.addf %122, %125 : vector<16x1xf32>
    %127 = math.rsqrt %126 : vector<16x1xf32>
    %128 = vector.broadcast %127 : vector<16x1xf32> to vector<16x32xf32>
    %129 = arith.mulf %124, %128 : vector<16x32xf32>
    %130 = vector.broadcast %23 : vector<1x32xf32> to vector<16x32xf32>
    %131 = arith.mulf %129, %130 : vector<16x32xf32>
    %132 = vector.broadcast %24 : vector<1x32xf32> to vector<16x32xf32>
    %133 = arith.addf %131, %132 : vector<16x32xf32>
    %134 = arith.truncf %133 : vector<16x32xf32> to vector<16x32xbf16>
    %c0_39 = arith.constant 0 : index
    %c0_40 = arith.constant 0 : index
    %c0_41 = arith.constant 0 : index
    %135 = vector.load %arg7[%c0_39, %c0_40, %c0_41] : memref<1x32x2048xbf16, #tpu.memory_space<vmem>>, vector<1x32x2048xbf16>
    %136 = vector.shape_cast %135 : vector<1x32x2048xbf16> to vector<32x2048xbf16>
    %cst_42 = arith.constant dense<0.000000e+00> : vector<16x2048xf32>
    %137 = tpu.matmul %134, %136, %cst_42 {dimension_numbers = #tpu.dot_dimension_numbers<[1], [0], [0], [1], [0, 0, 1, 1], [], []>} : vector<16x32xbf16>, vector<32x2048xbf16>, vector<16x2048xf32> -> vector<16x2048xf32>
    %c0_43 = arith.constant 0 : index
    %c0_44 = arith.constant 0 : index
    %c0_45 = arith.constant 0 : index
    %138 = vector.load %arg8[%c0_43, %c0_44, %c0_45] : memref<1x1x2048xf32, #tpu.memory_space<vmem>>, vector<1x1x2048xf32>
    %139 = vector.shape_cast %138 : vector<1x1x2048xf32> to vector<1x2048xf32>
    %140 = vector.broadcast %139 : vector<1x2048xf32> to vector<16x2048xf32>
    %141 = arith.addf %137, %140 : vector<16x2048xf32>
    %cst_46 = arith.constant 0.000000e+00 : f32
    %142 = vector.broadcast %cst_46 : f32 to vector<16x2048xf32>
    %143 = arith.maximumf %141, %142 : vector<16x2048xf32>
    %144 = arith.truncf %143 : vector<16x2048xf32> to vector<16x2048xbf16>
    %c0_47 = arith.constant 0 : index
    %c0_48 = arith.constant 0 : index
    %c0_49 = arith.constant 0 : index
    %145 = vector.load %arg9[%c0_47, %c0_48, %c0_49] : memref<1x2048x32xbf16, #tpu.memory_space<vmem>>, vector<1x2048x32xbf16>
    %146 = vector.shape_cast %145 : vector<1x2048x32xbf16> to vector<2048x32xbf16>
    %cst_50 = arith.constant dense<0.000000e+00> : vector<16x32xf32>
    %147 = tpu.matmul %144, %146, %cst_50 {dimension_numbers = #tpu.dot_dimension_numbers<[1], [0], [0], [1], [0, 0, 1, 1], [], []>} : vector<16x2048xbf16>, vector<2048x32xbf16>, vector<16x32xf32> -> vector<16x32xf32>
    %148 = vector.broadcast %25 : vector<1x32xf32> to vector<16x32xf32>
    %149 = arith.addf %147, %148 : vector<16x32xf32>
    %150 = arith.addf %133, %149 : vector<16x32xf32>
    %cst_51 = arith.constant dense<0.000000e+00> : vector<16xf32>
    %151 = vector.multi_reduction <add>, %150, %cst_51 [1] : vector<16x32xf32> to vector<16xf32>
    %152 = vector.shape_cast %151 : vector<16xf32> to vector<16x1xf32>
    %cst_52 = arith.constant 3.200000e+01 : f32
    %153 = vector.broadcast %cst_52 : f32 to vector<16x1xf32>
    %154 = arith.divf %152, %153 : vector<16x1xf32>
    %155 = vector.broadcast %154 : vector<16x1xf32> to vector<16x32xf32>
    %156 = arith.subf %150, %155 : vector<16x32xf32>
    %157 = arith.mulf %156, %156 : vector<16x32xf32>
    %cst_53 = arith.constant dense<0.000000e+00> : vector<16xf32>
    %158 = vector.multi_reduction <add>, %157, %cst_53 [1] : vector<16x32xf32> to vector<16xf32>
    %159 = vector.shape_cast %158 : vector<16xf32> to vector<16x1xf32>
    %cst_54 = arith.constant 3.200000e+01 : f32
    %160 = vector.broadcast %cst_54 : f32 to vector<16x1xf32>
    %161 = arith.divf %159, %160 : vector<16x1xf32>
    %162 = vector.broadcast %154 : vector<16x1xf32> to vector<16x32xf32>
    %163 = arith.subf %150, %162 : vector<16x32xf32>
    %cst_55 = arith.constant 9.99999974E-6 : f32
    %164 = vector.broadcast %cst_55 : f32 to vector<16x1xf32>
    %165 = arith.addf %161, %164 : vector<16x1xf32>
    %166 = math.rsqrt %165 : vector<16x1xf32>
    %167 = vector.broadcast %166 : vector<16x1xf32> to vector<16x32xf32>
    %168 = arith.mulf %163, %167 : vector<16x32xf32>
    %169 = vector.broadcast %26 : vector<1x32xf32> to vector<16x32xf32>
    %170 = arith.mulf %168, %169 : vector<16x32xf32>
    %171 = vector.broadcast %27 : vector<1x32xf32> to vector<16x32xf32>
    %172 = arith.addf %170, %171 : vector<16x32xf32>
    %c0_56 = arith.constant 0 : index
    %c0_57 = arith.constant 0 : index
    %173 = vector.load %arg14[%c0_56, %c0_57] : memref<16x32xf32, #tpu.memory_space<vmem>>, vector<16x32xf32>
    tpu.vector_store %arg14[%c0_56, %c0_57], %172 {strides = array<i32>} : memref<16x32xf32, #tpu.memory_space<vmem>>, vector<16x32xf32>,
    %c1_i32 = arith.constant 1 : i32
    %174 = arith.cmpi eq, %arg1, %c1_i32 : i32
    %175 = arith.extui %174 : i1 to i32
    %c0_i32_58 = arith.constant 0 : i32
    %176 = arith.cmpi ne, %175, %c0_i32_58 : i32
    scf.if %176 {
      %177 = vector.shape_cast %172 : vector<16x32xf32> to vector<2x8x32xf32>
      %cst_59 = arith.constant dense<0.000000e+00> : vector<2x32xf32>
      %178 = vector.multi_reduction <add>, %177, %cst_59 [1] : vector<2x8x32xf32> to vector<2x32xf32>
      %179 = vector.extract_strided_slice %177 {offsets = [0, 0, 0], sizes = [2, 1, 32], strides = [1, 1, 1]} : vector<2x8x32xf32> to vector<2x1x32xf32>
      %180 = vector.shape_cast %179 : vector<2x1x32xf32> to vector<2x32xf32>
      %181 = arith.subf %178, %180 : vector<2x32xf32>
      %cst_60 = arith.constant 0.142857149 : f32
      %182 = vector.broadcast %cst_60 : f32 to vector<2x32xf32>
      %183 = arith.mulf %181, %182 : vector<2x32xf32>
      %184 = arith.truncf %183 : vector<2x32xf32> to vector<2x32xbf16>
      %c0_61 = arith.constant 0 : index
      %c0_62 = arith.constant 0 : index
      %185 = vector.load %arg11[%c0_61, %c0_62] : memref<32x128xbf16, #tpu.memory_space<vmem>>, vector<32x128xbf16>
      %cst_63 = arith.constant dense<0.000000e+00> : vector<2x128xf32>
      %186 = tpu.matmul %184, %185, %cst_63 {dimension_numbers = #tpu.dot_dimension_numbers<[1], [0], [0], [1], [0, 0, 1, 1], [], []>} : vector<2x32xbf16>, vector<32x128xbf16>, vector<2x128xf32> -> vector<2x128xf32>
      %c0_64 = arith.constant 0 : index
      %c0_65 = arith.constant 0 : index
      %187 = vector.load %arg12[%c0_64, %c0_65] : memref<1x128xf32, #tpu.memory_space<vmem>>, vector<1x128xf32>
      %188 = vector.broadcast %187 : vector<1x128xf32> to vector<2x128xf32>
      %189 = arith.addf %186, %188 : vector<2x128xf32>
      %c0_66 = arith.constant 0 : index
      %c0_67 = arith.constant 0 : index
      %190 = vector.load %arg13[%c0_66, %c0_67] : memref<2x128xf32, #tpu.memory_space<vmem>>, vector<2x128xf32>
      tpu.vector_store %arg13[%c0_66, %c0_67], %189 {strides = array<i32>} : memref<2x128xf32, #tpu.memory_space<vmem>>, vector<2x128xf32>,
    } else {
    }
    return
  }
  func.func @transform_0(%arg0: i32, %arg1: i32) -> (i32, i32, i32) {
    %c0_i32 = arith.constant 0 : i32
    %c0_i32_0 = arith.constant 0 : i32
    %c0_i32_1 = arith.constant 0 : i32
    return %arg0, %c0_i32, %c0_i32_0 : i32, i32, i32
  }
  func.func @transform_1(%arg0: i32, %arg1: i32) -> (i32, i32, i32) {
    %c0_i32 = arith.constant 0 : i32
    %c0_i32_0 = arith.constant 0 : i32
    %c0_i32_1 = arith.constant 0 : i32
    return %arg0, %c0_i32, %c0_i32_0 : i32, i32, i32
  }
  func.func @transform_2(%arg0: i32, %arg1: i32) -> (i32, i32, i32) {
    %c0_i32 = arith.constant 0 : i32
    %c0_i32_0 = arith.constant 0 : i32
    %c0_i32_1 = arith.constant 0 : i32
    return %arg1, %c0_i32, %c0_i32_0 : i32, i32, i32
  }
  func.func @transform_3(%arg0: i32, %arg1: i32) -> (i32, i32, i32) {
    %c0_i32 = arith.constant 0 : i32
    %c0_i32_0 = arith.constant 0 : i32
    %c0_i32_1 = arith.constant 0 : i32
    return %arg1, %c0_i32, %c0_i32_0 : i32, i32, i32
  }
  func.func @transform_4(%arg0: i32, %arg1: i32) -> (i32, i32, i32) {
    %c0_i32 = arith.constant 0 : i32
    %c0_i32_0 = arith.constant 0 : i32
    %c0_i32_1 = arith.constant 0 : i32
    return %arg1, %c0_i32, %c0_i32_0 : i32, i32, i32
  }
  func.func @transform_5(%arg0: i32, %arg1: i32) -> (i32, i32, i32) {
    %c0_i32 = arith.constant 0 : i32
    %c0_i32_0 = arith.constant 0 : i32
    %c0_i32_1 = arith.constant 0 : i32
    return %arg1, %c0_i32, %c0_i32_0 : i32, i32, i32
  }
  func.func @transform_6(%arg0: i32, %arg1: i32) -> (i32, i32, i32) {
    %c0_i32 = arith.constant 0 : i32
    %c0_i32_0 = arith.constant 0 : i32
    %c0_i32_1 = arith.constant 0 : i32
    return %arg1, %c0_i32, %c0_i32_0 : i32, i32, i32
  }
  func.func @transform_7(%arg0: i32, %arg1: i32) -> (i32, i32, i32) {
    %c0_i32 = arith.constant 0 : i32
    %c0_i32_0 = arith.constant 0 : i32
    %c0_i32_1 = arith.constant 0 : i32
    return %arg1, %c0_i32, %c0_i32_0 : i32, i32, i32
  }
  func.func @transform_8(%arg0: i32, %arg1: i32) -> (i32, i32, i32) {
    %c0_i32 = arith.constant 0 : i32
    %c0_i32_0 = arith.constant 0 : i32
    %c0_i32_1 = arith.constant 0 : i32
    return %arg1, %c0_i32, %c0_i32_0 : i32, i32, i32
  }
  func.func @transform_9(%arg0: i32, %arg1: i32) -> (i32, i32) {
    %c0_i32 = arith.constant 0 : i32
    %c0_i32_0 = arith.constant 0 : i32
    %c0_i32_1 = arith.constant 0 : i32
    return %c0_i32, %c0_i32_0 : i32, i32
  }
  func.func @transform_10(%arg0: i32, %arg1: i32) -> (i32, i32) {
    %c0_i32 = arith.constant 0 : i32
    %c0_i32_0 = arith.constant 0 : i32
    %c0_i32_1 = arith.constant 0 : i32
    return %c0_i32, %c0_i32_0 : i32, i32
  }
  func.func @transform_11(%arg0: i32, %arg1: i32) -> (i32, i32) {
    %c0_i32 = arith.constant 0 : i32
    %c0_i32_0 = arith.constant 0 : i32
    return %arg0, %c0_i32 : i32, i32
  }
}

</mosaic_0001>

<llo_original>
// kernel: dronelog_forward.1
$region0: #{dronelog_forward.1}
  #allocation0 [shape = 'u32[]', space=smem, size = 0x4, offset = 0x4, fixed_abs, tag = 'smem constant byte address 0x4 - core index']
  #allocation1 [shape = 'u32[144,128]{1,0:T(1,128)}', space=vmem, size = 0x12000, scoped, tag = 'internal scratch']
  #allocation2 [shape = 'f32[16,32]{1,0:T(8,128)}', space=vmem, size = 0x2000, scoped, tag = 'scratch operand']
  %s0 = inlined_call_operand.vmem [shape: f32[2,8,32], index: 0, kind: input, shape index: {}]
  %s1 = inlined_call_operand.vmem [shape: f32[2,1,8], index: 1, kind: input, shape index: {}]
  %s2 = inlined_call_operand.vmem [shape: bf16[2,32,96], index: 2, kind: input, shape index: {}]
  %s3 = inlined_call_operand.vmem [shape: f32[2,1,96], index: 3, kind: input, shape index: {}]
  %s4 = inlined_call_operand.vmem [shape: bf16[2,32,32], index: 4, kind: input, shape index: {}]
  %s5 = inlined_call_operand.vmem [shape: bf16[2,32,2048], index: 5, kind: input, shape index: {}]
  %s6 = inlined_call_operand.vmem [shape: f32[2,1,2048], index: 6, kind: input, shape index: {}]
  %s7 = inlined_call_operand.vmem [shape: bf16[2,2048,32], index: 7, kind: input, shape index: {}]
  %s8 = inlined_call_operand.vmem [shape: f32[2,6,32], index: 8, kind: input, shape index: {}]
  %s9 = inlined_call_operand.vmem [shape: bf16[32,128], index: 9, kind: input, shape index: {}]
  %s10 = inlined_call_operand.vmem [shape: f32[1,128], index: 10, kind: input, shape index: {}]
  %s11 = inlined_call_operand.hbm [shape: f32[2,128], index: 11, kind: output, shape index: {}]
  %s12 = sld [smem:[#allocation0]]
  $region85: #{dronelog_forward.1} parent=0
    _
  %s14 = ssub.s32 1, %s12
  %s15 = scalar_select 0, %s14, %s12
  $region1: #{dronelog_forward.1} parent=0
    #allocation3 [shape = 'u8[1024]{0}', space=vmem, size = 0x400, scoped, tag = 'output window, operand 0, single buffered']
    #allocation4 [shape = 's32[2]{0}', space=sflag, size = 0x8, scoped, tag = 'scoped memory for dronelog_forward.1']
    %16 = vsyncpa [#allocation4], 0
    loop: start=0, step=1, limit=4
    $region2: #{dronelog_forward.1} parent=1 // loop_pre_header
      _
    $region3: #{dronelog_forward.1} parent=1 // loop_header
      %s18 = sphi 0, %s22
      %p19 = scmp.ge.s32.totalorder %s18, 4
      %s25 = sphi 0, %s37
      %s26 = sphi 0, %s33
      %s27 = sphi 0, %s25
      %s28 = sphi 0, %s26
      %s29 = sphi 0, %s27
      %s30 = sphi 0, %s28
      %s40 = sphi 0, %s42
      %s43 = sphi 0, %s40
      %s44 = sphi 0, %s43
      %s60 = sphi 0, %s44
      %s66 = sphi 0, %s68
      %s69 = sphi 0, %s66
      %s70 = sphi 0, %s69
      %s86 = sphi 0, %s70
      %s92 = sphi 0, %s94
      %s95 = sphi 0, %s92
      %s96 = sphi 0, %s95
      %s112 = sphi 0, %s96
      %s118 = sphi 0, %s120
      %s121 = sphi 0, %s118
      %s122 = sphi 0, %s121
      %s138 = sphi 0, %s122
      %s144 = sphi 0, %s146
      %s147 = sphi 0, %s144
      %s148 = sphi 0, %s147
      %s164 = sphi 0, %s148
      %s170 = sphi 0, %s172
      %s173 = sphi 0, %s170
      %s174 = sphi 0, %s173
      %s190 = sphi 0, %s174
      %s196 = sphi 0, %s198
      %s199 = sphi 0, %s196
      %s200 = sphi 0, %s199
      %s216 = sphi 0, %s200
      %s222 = sphi 0, %s224
      %s225 = sphi 0, %s222
      %s226 = sphi 0, %s225
      %s242 = sphi 0, %s226
      %s248 = sphi 0, %s250
      %s251 = sphi 0, %s248
      %s252 = sphi 0, %s251
      %s268 = sphi 0, %s252
      %s272 = sphi 0, %s272
      %s274 = sphi 0, %s272
      %s275 = sphi 0, %s274
      %s289 = sphi 0, %s275
      %s293 = sphi 0, %s293
      %s295 = sphi 0, %s293
      %s296 = sphi 0, %s295
      %s310 = sphi 0, %s296
      %s316 = sphi 0, %s318
      %s319 = sphi 0, %s316
      %s320 = sphi 0, %s319
      %s336 = sphi 0, %s320
    $region4: #{dronelog_forward.1} parent=1 // loop_header_branch
      %21 = sbr.rel (%p19) target = $region8
    $region5: #{dronelog_forward.1} parent=1 // loop_body
      %s23 = ssub.s32 %s18, 1
      %s24 = ssub.s32 %s18, 2
      %s31 = sadd.s32 1, %s26
      %p32 = scmp.ge.s32.totalorder %s31, 2
      %s33 = scalar_select %p32, 0, %s31
      %s34 = sadd.s32 1, %s25
      %s35 = scalar_select %p32, %s34, %s25
      %p36 = scmp.ge.s32.totalorder %s35, 1
      %s37 = scalar_select %p36, 0, %s35
      %s38 = ssub.s32 %s25, %s37
      %p39 = scmp.eq.s32.totalorder %s38, 0
      %s41 = sadd.s32 %s40, 1
      %s42 = scalar_select %p39, %s40, %s41
      %p45 = pneg %p39
      %p46 = scmp.eq.s32.totalorder %s18, 1
      %p47 = por %p45, %p46
      %p48 = scmp.ne.s32.totalorder %s40, %s43
      %p49 = scmp.eq.s32.totalorder %s18, 0
      %p50 = por %p48, %p49
      %p51 = scmp.ne.s32.totalorder %s40, %s43
      %p52 = scmp.eq.s32.totalorder %s23, 1
      %p53 = por %p51, %p52
      %p54 = scmp.ne.s32.totalorder %s43, %s44
      %p55 = scmp.eq.s32.totalorder %s23, 0
      %p56 = por %p54, %p55
      %p57 = scmp.ne.s32.totalorder %s43, %s44
      %p58 = scmp.eq.s32.totalorder %s24, 1
      %p59 = por %p57, %p58
      %p61 = scmp.ne.s32.totalorder %s44, %s60
      %p62 = scmp.eq.s32.totalorder %s24, 0
      %p63 = por %p61, %p62
      %s64 = ssub.s32 %s25, %s37
      %p65 = scmp.eq.s32.totalorder %s64, 0
      %s67 = sadd.s32 %s66, 1
      %s68 = scalar_select %p65, %s66, %s67
      %p71 = pneg %p65
      %p72 = scmp.eq.s32.totalorder %s18, 1
      %p73 = por %p71, %p72
      %p74 = scmp.ne.s32.totalorder %s66, %s69
      %p75 = scmp.eq.s32.totalorder %s18, 0
      %p76 = por %p74, %p75
      %p77 = scmp.ne.s32.totalorder %s66, %s69
      %p78 = scmp.eq.s32.totalorder %s23, 1
      %p79 = por %p77, %p78
      %p80 = scmp.ne.s32.totalorder %s69, %s70
      %p81 = scmp.eq.s32.totalorder %s23, 0
      %p82 = por %p80, %p81
      %p83 = scmp.ne.s32.totalorder %s69, %s70
      %p84 = scmp.eq.s32.totalorder %s24, 1
      %p85 = por %p83, %p84
      %p87 = scmp.ne.s32.totalorder %s70, %s86
      %p88 = scmp.eq.s32.totalorder %s24, 0
      %p89 = por %p87, %p88
      %s90 = ssub.s32 %s26, %s33
      %p91 = scmp.eq.s32.totalorder %s90, 0
      %s93 = sadd.s32 %s92, 1
      %s94 = scalar_select %p91, %s92, %s93
      %p97 = pneg %p91
      %p98 = scmp.eq.s32.totalorder %s18, 1
      %p99 = por %p97, %p98
      %p100 = scmp.ne.s32.totalorder %s92, %s95
      %p101 = scmp.eq.s32.totalorder %s18, 0
      %p102 = por %p100, %p101
      %p103 = scmp.ne.s32.totalorder %s92, %s95
      %p104 = scmp.eq.s32.totalorder %s23, 1
      %p105 = por %p103, %p104
      %p106 = scmp.ne.s32.totalorder %s95, %s96
      %p107 = scmp.eq.s32.totalorder %s23, 0
      %p108 = por %p106, %p107
      %p109 = scmp.ne.s32.totalorder %s95, %s96
      %p110 = scmp.eq.s32.totalorder %s24, 1
      %p111 = por %p109, %p110
      %p113 = scmp.ne.s32.totalorder %s96, %s112
      %p114 = scmp.eq.s32.totalorder %s24, 0
      %p115 = por %p113, %p114
      %s116 = ssub.s32 %s26, %s33
      %p117 = scmp.eq.s32.totalorder %s116, 0
      %s119 = sadd.s32 %s118, 1
      %s120 = scalar_select %p117, %s118, %s119
      %p123 = pneg %p117
      %p124 = scmp.eq.s32.totalorder %s18, 1
      %p125 = por %p123, %p124
      %p126 = scmp.ne.s32.totalorder %s118, %s121
      %p127 = scmp.eq.s32.totalorder %s18, 0
      %p128 = por %p126, %p127
      %p129 = scmp.ne.s32.totalorder %s118, %s121
      %p130 = scmp.eq.s32.totalorder %s23, 1
      %p131 = por %p129, %p130
      %p132 = scmp.ne.s32.totalorder %s121, %s122
      %p133 = scmp.eq.s32.totalorder %s23, 0
      %p134 = por %p132, %p133
      %p135 = scmp.ne.s32.totalorder %s121, %s122
      %p136 = scmp.eq.s32.totalorder %s24, 1
      %p137 = por %p135, %p136
      %p139 = scmp.ne.s32.totalorder %s122, %s138
      %p140 = scmp.eq.s32.totalorder %s24, 0
      %p141 = por %p139, %p140
      %s142 = ssub.s32 %s26, %s33
      %p143 = scmp.eq.s32.totalorder %s142, 0
      %s145 = sadd.s32 %s144, 1
      %s146 = scalar_select %p143, %s144, %s145
      %p149 = pneg %p143
      %p150 = scmp.eq.s32.totalorder %s18, 1
      %p151 = por %p149, %p150
      %p152 = scmp.ne.s32.totalorder %s144, %s147
      %p153 = scmp.eq.s32.totalorder %s18, 0
      %p154 = por %p152, %p153
      %p155 = scmp.ne.s32.totalorder %s144, %s147
      %p156 = scmp.eq.s32.totalorder %s23, 1
      %p157 = por %p155, %p156
      %p158 = scmp.ne.s32.totalorder %s147, %s148
      %p159 = scmp.eq.s32.totalorder %s23, 0
      %p160 = por %p158, %p159
      %p161 = scmp.ne.s32.totalorder %s147, %s148
      %p162 = scmp.eq.s32.totalorder %s24, 1
      %p163 = por %p161, %p162
      %p165 = scmp.ne.s32.totalorder %s148, %s164
      %p166 = scmp.eq.s32.totalorder %s24, 0
      %p167 = por %p165, %p166
      %s168 = ssub.s32 %s26, %s33
      %p169 = scmp.eq.s32.totalorder %s168, 0
      %s171 = sadd.s32 %s170, 1
      %s172 = scalar_select %p169, %s170, %s171
      %p175 = pneg %p169
      %p176 = scmp.eq.s32.totalorder %s18, 1
      %p177 = por %p175, %p176
      %p178 = scmp.ne.s32.totalorder %s170, %s173
      %p179 = scmp.eq.s32.totalorder %s18, 0
      %p180 = por %p178, %p179
      %p181 = scmp.ne.s32.totalorder %s170, %s173
      %p182 = scmp.eq.s32.totalorder %s23, 1
      %p183 = por %p181, %p182
      %p184 = scmp.ne.s32.totalorder %s173, %s174
      %p185 = scmp.eq.s32.totalorder %s23, 0
      %p186 = por %p184, %p185
      %p187 = scmp.ne.s32.totalorder %s173, %s174
      %p188 = scmp.eq.s32.totalorder %s24, 1
      %p189 = por %p187, %p188
      %p191 = scmp.ne.s32.totalorder %s174, %s190
      %p192 = scmp.eq.s32.totalorder %s24, 0
      %p193 = por %p191, %p192
      %s194 = ssub.s32 %s26, %s33
      %p195 = scmp.eq.s32.totalorder %s194, 0
      %s197 = sadd.s32 %s196, 1
      %s198 = scalar_select %p195, %s196, %s197
      %p201 = pneg %p195
      %p202 = scmp.eq.s32.totalorder %s18, 1
      %p203 = por %p201, %p202
      %p204 = scmp.ne.s32.totalorder %s196, %s199
      %p205 = scmp.eq.s32.totalorder %s18, 0
      %p206 = por %p204, %p205
      %p207 = scmp.ne.s32.totalorder %s196, %s199
      %p208 = scmp.eq.s32.totalorder %s23, 1
      %p209 = por %p207, %p208
      %p210 = scmp.ne.s32.totalorder %s199, %s200
      %p211 = scmp.eq.s32.totalorder %s23, 0
      %p212 = por %p210, %p211
      %p213 = scmp.ne.s32.totalorder %s199, %s200
      %p214 = scmp.eq.s32.totalorder %s24, 1
      %p215 = por %p213, %p214
      %p217 = scmp.ne.s32.totalorder %s200, %s216
      %p218 = scmp.eq.s32.totalorder %s24, 0
      %p219 = por %p217, %p218
      %s220 = ssub.s32 %s26, %s33
      %p221 = scmp.eq.s32.totalorder %s220, 0
      %s223 = sadd.s32 %s222, 1
      %s224 = scalar_select %p221, %s222, %s223
      %p227 = pneg %p221
      %p228 = scmp.eq.s32.totalorder %s18, 1
      %p229 = por %p227, %p228
      %p230 = scmp.ne.s32.totalorder %s222, %s225
      %p231 = scmp.eq.s32.totalorder %s18, 0
      %p232 = por %p230, %p231
      %p233 = scmp.ne.s32.totalorder %s222, %s225
      %p234 = scmp.eq.s32.totalorder %s23, 1
      %p235 = por %p233, %p234
      %p236 = scmp.ne.s32.totalorder %s225, %s226
      %p237 = scmp.eq.s32.totalorder %s23, 0
      %p238 = por %p236, %p237
      %p239 = scmp.ne.s32.totalorder %s225, %s226
      %p240 = scmp.eq.s32.totalorder %s24, 1
      %p241 = por %p239, %p240
      %p243 = scmp.ne.s32.totalorder %s226, %s242
      %p244 = scmp.eq.s32.totalorder %s24, 0
      %p245 = por %p243, %p244
      %s246 = ssub.s32 %s26, %s33
      %p247 = scmp.eq.s32.totalorder %s246, 0
      %s249 = sadd.s32 %s248, 1
      %s250 = scalar_select %p247, %s248, %s249
      %p253 = pneg %p247
      %p254 = scmp.eq.s32.totalorder %s18, 1
      %p255 = por %p253, %p254
      %p256 = scmp.ne.s32.totalorder %s248, %s251
      %p257 = scmp.eq.s32.totalorder %s18, 0
      %p258 = por %p256, %p257
      %p259 = scmp.ne.s32.totalorder %s248, %s251
      %p260 = scmp.eq.s32.totalorder %s23, 1
      %p261 = por %p259, %p260
      %p262 = scmp.ne.s32.totalorder %s251, %s252
      %p263 = scmp.eq.s32.totalorder %s23, 0
      %p264 = por %p262, %p263
      %p265 = scmp.ne.s32.totalorder %s251, %s252
      %p266 = scmp.eq.s32.totalorder %s24, 1
      %p267 = por %p265, %p266
      %p269 = scmp.ne.s32.totalorder %s252, %s268
      %p270 = scmp.eq.s32.totalorder %s24, 0
      %p271 = por %p269, %p270
      %s273 = sadd.s32 %s272, 1
      %p276 = scmp.eq.s32.totalorder %s18, 1
      %p277 = scmp.ne.s32.totalorder %s272, %s274
      %p278 = scmp.eq.s32.totalorder %s18, 0
      %p279 = por %p277, %p278
      %p280 = scmp.ne.s32.totalorder %s272, %s274
      %p281 = scmp.eq.s32.totalorder %s23, 1
      %p282 = por %p280, %p281
      %p283 = scmp.ne.s32.totalorder %s274, %s275
      %p284 = scmp.eq.s32.totalorder %s23, 0
      %p285 = por %p283, %p284
      %p286 = scmp.ne.s32.totalorder %s274, %s275
      %p287 = scmp.eq.s32.totalorder %s24, 1
      %p288 = por %p286, %p287
      %p290 = scmp.ne.s32.totalorder %s275, %s289
      %p291 = scmp.eq.s32.totalorder %s24, 0
      %p292 = por %p290, %p291
      %s294 = sadd.s32 %s293, 1
      %p297 = scmp.eq.s32.totalorder %s18, 1
      %p298 = scmp.ne.s32.totalorder %s293, %s295
      %p299 = scmp.eq.s32.totalorder %s18, 0
      %p300 = por %p298, %p299
      %p301 = scmp.ne.s32.totalorder %s293, %s295
      %p302 = scmp.eq.s32.totalorder %s23, 1
      %p303 = por %p301, %p302
      %p304 = scmp.ne.s32.totalorder %s295, %s296
      %p305 = scmp.eq.s32.totalorder %s23, 0
      %p306 = por %p304, %p305
      %p307 = scmp.ne.s32.totalorder %s295, %s296
      %p308 = scmp.eq.s32.totalorder %s24, 1
      %p309 = por %p307, %p308
      %p311 = scmp.ne.s32.totalorder %s296, %s310
      %p312 = scmp.eq.s32.totalorder %s24, 0
      %p313 = por %p311, %p312
      %s314 = ssub.s32 %s25, %s37
      %p315 = scmp.eq.s32.totalorder %s314, 0
      %s317 = sadd.s32 %s316, 1
      %s318 = scalar_select %p315, %s316, %s317
      %p321 = pneg %p315
      %p322 = scmp.eq.s32.totalorder %s18, 1
      %p323 = por %p321, %p322
      %p324 = scmp.ne.s32.totalorder %s316, %s319
      %p325 = scmp.eq.s32.totalorder %s18, 0
      %p326 = por %p324, %p325
      %p327 = scmp.ne.s32.totalorder %s316, %s319
      %p328 = scmp.eq.s32.totalorder %s23, 1
      %p329 = por %p327, %p328
      %p330 = scmp.ne.s32.totalorder %s319, %s320
      %p331 = scmp.eq.s32.totalorder %s23, 0
      %p332 = por %p330, %p331
      %p333 = scmp.ne.s32.totalorder %s319, %s320
      %p334 = scmp.eq.s32.totalorder %s24, 1
      %p335 = por %p333, %p334
      %p337 = scmp.ne.s32.totalorder %s320, %s336
      %p338 = scmp.eq.s32.totalorder %s24, 0
      %p339 = por %p337, %p338
      %p340 = scmp.le.s32.totalorder 1, %s18
      %p341 = scmp.lt.s32.totalorder %s18, 3
      %p342 = pnand %p340, %p341
      %p343 = pneg %p342
      // Predicated region
      $region9: #{dronelog_forward.1} parent=5 // pred_check
        _
      $region10: #{dronelog_forward.1} parent=5 // pred_check_branch
        %345 = sbr.rel (%p342) target = $region12
      $region11: #{dronelog_forward.1} parent=5 // pred_region
        %s346 = ssub.s32 %s18, 1
        // Predicated region
        $region13: #{dronelog_forward.1} parent=11 // pred_check
          %p347 = pneg %p56
        $region14: #{dronelog_forward.1} parent=11 // pred_check_branch
          %349 = sbr.rel (%p347) target = $region16
        $region15: #{dronelog_forward.1} parent=11 // pred_region
          %s350 = smul.u32 2, %s27
          %p351 = scmp.lt.s32.totalorder %s350, 1
          %s352 = scalar_select %p351, %s350, 1
          %s353 = smul.addr %s352, 8
          %s354 = scalar_lea.vmem %s0, %s353
          %s355 = smul.u32 2, %s27
        $region16: #{dronelog_forward.1} parent=11 // pred_fallthru
          _
        // Predicated region
        $region17: #{dronelog_forward.1} parent=11 // pred_check
          %p356 = pneg %p82
        $region18: #{dronelog_forward.1} parent=11 // pred_check_branch
          %358 = sbr.rel (%p356) target = $region20
        $region19: #{dronelog_forward.1} parent=11 // pred_region
          %s359 = smul.u32 2, %s27
          %p360 = scmp.lt.s32.totalorder %s359, 1
          %s361 = scalar_select %p360, %s359, 1
          %s362 = scalar_lea.vmem %s1, %s361
          %s363 = smul.u32 2, %s27
        $region20: #{dronelog_forward.1} parent=11 // pred_fallthru
          _
        // Predicated region
        $region21: #{dronelog_forward.1} parent=11 // pred_check
          %p364 = pneg %p285
        $region22: #{dronelog_forward.1} parent=11 // pred_check_branch
          %366 = sbr.rel (%p364) target = $region24
        $region23: #{dronelog_forward.1} parent=11 // pred_region
          _
        $region24: #{dronelog_forward.1} parent=11 // pred_fallthru
          _
        // Predicated region
        $region25: #{dronelog_forward.1} parent=11 // pred_check
          %p367 = pneg %p306
        $region26: #{dronelog_forward.1} parent=11 // pred_check_branch
          %369 = sbr.rel (%p367) target = $region28
        $region27: #{dronelog_forward.1} parent=11 // pred_region
          _
        $region28: #{dronelog_forward.1} parent=11 // pred_fallthru
          _
      $region12: #{dronelog_forward.1} parent=5 // pred_fallthru
        _
      %p370 = scmp.lt.s32.totalorder %s18, 2
      // Predicated region
      $region29: #{dronelog_forward.1} parent=5 // pred_check
        %p371 = pneg %p370
      $region30: #{dronelog_forward.1} parent=5 // pred_check_branch
        %373 = sbr.rel (%p371) target = $region32
      $region31: #{dronelog_forward.1} parent=5 // pred_region
        // Predicated region
        $region33: #{dronelog_forward.1} parent=31 // pred_check
          %p374 = pneg %p102
        $region34: #{dronelog_forward.1} parent=31 // pred_check_branch
          %376 = sbr.rel (%p374) target = $region36
        $region35: #{dronelog_forward.1} parent=31 // pred_region
          %p377 = scmp.lt.s32.totalorder %s26, 1
          %s378 = scalar_select %p377, %s26, 1
          %s379 = smul.addr %s378, 4
          %s380 = smul.addr %s379, 4
          %s381 = scalar_lea.vmem %s2, %s380
        $region36: #{dronelog_forward.1} parent=31 // pred_fallthru
          _
        // Predicated region
        $region37: #{dronelog_forward.1} parent=31 // pred_check
          %p382 = pneg %p128
        $region38: #{dronelog_forward.1} parent=31 // pred_check_branch
          %384 = sbr.rel (%p382) target = $region40
        $region39: #{dronelog_forward.1} parent=31 // pred_region
          %p385 = scmp.lt.s32.totalorder %s26, 1
          %s386 = scalar_select %p385, %s26, 1
          %s387 = scalar_lea.vmem %s3, %s386
        $region40: #{dronelog_forward.1} parent=31 // pred_fallthru
          _
        // Predicated region
        $region41: #{dronelog_forward.1} parent=31 // pred_check
          %p388 = pneg %p154
        $region42: #{dronelog_forward.1} parent=31 // pred_check_branch
          %390 = sbr.rel (%p388) target = $region44
        $region43: #{dronelog_forward.1} parent=31 // pred_region
          %p391 = scmp.lt.s32.totalorder %s26, 1
          %s392 = scalar_select %p391, %s26, 1
          %s393 = smul.addr %s392, 4
          %s394 = smul.addr %s393, 4
          %s395 = scalar_lea.vmem %s4, %s394
        $region44: #{dronelog_forward.1} parent=31 // pred_fallthru
          _
        // Predicated region
        $region45: #{dronelog_forward.1} parent=31 // pred_check
          %p396 = pneg %p180
        $region46: #{dronelog_forward.1} parent=31 // pred_check_branch
          %398 = sbr.rel (%p396) target = $region48
        $region47: #{dronelog_forward.1} parent=31 // pred_region
          %p399 = scmp.lt.s32.totalorder %s26, 1
          %s400 = scalar_select %p399, %s26, 1
          %s401 = smul.addr %s400, 64
          %s402 = smul.addr %s401, 4
          %s403 = scalar_lea.vmem %s5, %s402
        $region48: #{dronelog_forward.1} parent=31 // pred_fallthru
          _
        // Predicated region
        $region49: #{dronelog_forward.1} parent=31 // pred_check
          %p404 = pneg %p206
        $region50: #{dronelog_forward.1} parent=31 // pred_check_branch
          %406 = sbr.rel (%p404) target = $region52
        $region51: #{dronelog_forward.1} parent=31 // pred_region
          %p407 = scmp.lt.s32.totalorder %s26, 1
          %s408 = scalar_select %p407, %s26, 1
          %s409 = smul.addr %s408, 16
          %s410 = scalar_lea.vmem %s6, %s409
        $region52: #{dronelog_forward.1} parent=31 // pred_fallthru
          _
        // Predicated region
        $region53: #{dronelog_forward.1} parent=31 // pred_check
          %p411 = pneg %p232
        $region54: #{dronelog_forward.1} parent=31 // pred_check_branch
          %413 = sbr.rel (%p411) target = $region56
        $region55: #{dronelog_forward.1} parent=31 // pred_region
          %p414 = scmp.lt.s32.totalorder %s26, 1
          %s415 = scalar_select %p414, %s26, 1
          %s416 = smul.addr %s415, 256
          %s417 = smul.addr %s416, 4
          %s418 = scalar_lea.vmem %s7, %s417
        $region56: #{dronelog_forward.1} parent=31 // pred_fallthru
          _
        // Predicated region
        $region57: #{dronelog_forward.1} parent=31 // pred_check
          %p419 = pneg %p258
        $region58: #{dronelog_forward.1} parent=31 // pred_check_branch
          %421 = sbr.rel (%p419) target = $region60
        $region59: #{dronelog_forward.1} parent=31 // pred_region
          %p422 = scmp.lt.s32.totalorder %s26, 1
          %s423 = scalar_select %p422, %s26, 1
          %s424 = smul.addr %s423, 8
          %s425 = scalar_lea.vmem %s8, %s424
        $region60: #{dronelog_forward.1} parent=31 // pred_fallthru
          _
      $region32: #{dronelog_forward.1} parent=5 // pred_fallthru
        _
      %p426 = scmp.le.s32.totalorder 1, %s18
      %p427 = scmp.lt.s32.totalorder %s18, 3
      %p428 = pnand %p426, %p427
      %p429 = pneg %p428
      // Predicated region
      $region61: #{dronelog_forward.1} parent=5 // pred_check
        _
      $region62: #{dronelog_forward.1} parent=5 // pred_check_branch
        %431 = sbr.rel (%p428) target = $region64
      $region63: #{dronelog_forward.1} parent=5 // pred_region
        %s432 = ssub.s32 %s18, 1
        %s433 = smul.u32 2, %s27
        %p434 = scmp.lt.s32.totalorder %s433, 1
        %s435 = scalar_select %p434, %s433, 1
        %s436 = smul.addr %s435, 8
        %s437 = scalar_lea.vmem %s0, %s436
        %p438 = pneg %p56
        %p439 = pneg %p53
        %s440 = smul.u32 2, %s27
        %p441 = scmp.lt.s32.totalorder %s440, 1
        %s442 = scalar_select %p441, %s440, 1
        %s443 = scalar_lea.vmem %s1, %s442
        %p444 = pneg %p82
        %p445 = pneg %p79
        %p446 = scmp.lt.s32.totalorder %s28, 1
        %s447 = scalar_select %p446, %s28, 1
        %s448 = smul.addr %s447, 4
        %s449 = smul.addr %s448, 4
        %s450 = scalar_lea.vmem %s2, %s449
        %p451 = pneg %p108
        %p452 = pneg %p105
        %p453 = scmp.lt.s32.totalorder %s28, 1
        %s454 = scalar_select %p453, %s28, 1
        %s455 = scalar_lea.vmem %s3, %s454
        %p456 = pneg %p134
        %p457 = pneg %p131
        %p458 = scmp.lt.s32.totalorder %s28, 1
        %s459 = scalar_select %p458, %s28, 1
        %s460 = smul.addr %s459, 4
        %s461 = smul.addr %s460, 4
        %s462 = scalar_lea.vmem %s4, %s461
        %p463 = pneg %p160
        %p464 = pneg %p157
        %p465 = scmp.lt.s32.totalorder %s28, 1
        %s466 = scalar_select %p465, %s28, 1
        %s467 = smul.addr %s466, 64
        %s468 = smul.addr %s467, 4
        %s469 = scalar_lea.vmem %s5, %s468
        %p470 = pneg %p186
        %p471 = pneg %p183
        %p472 = scmp.lt.s32.totalorder %s28, 1
        %s473 = scalar_select %p472, %s28, 1
        %s474 = smul.addr %s473, 16
        %s475 = scalar_lea.vmem %s6, %s474
        %p476 = pneg %p212
        %p477 = pneg %p209
        %p478 = scmp.lt.s32.totalorder %s28, 1
        %s479 = scalar_select %p478, %s28, 1
        %s480 = smul.addr %s479, 256
        %s481 = smul.addr %s480, 4
        %s482 = scalar_lea.vmem %s7, %s481
        %p483 = pneg %p238
        %p484 = pneg %p235
        %p485 = scmp.lt.s32.totalorder %s28, 1
        %s486 = scalar_select %p485, %s28, 1
        %s487 = smul.addr %s486, 8
        %s488 = scalar_lea.vmem %s8, %s487
        %p489 = pneg %p264
        %p490 = pneg %p261
        %p491 = pneg %p285
        %p492 = pneg %p282
        %p493 = pneg %p306
        %p494 = pneg %p303
        %p495 = pneg %p332
        %p496 = pneg %p329
        %s497 = smul.u32 2, %s27
        %p498 = scmp.lt.s32.totalorder %s497, 1
        %s499 = scalar_select %p498, %s497, 1
        %s500 = smul.addr %s499, 8
        %s501 = scalar_lea.vmem %s0, %s500
        %s502 = smul.u32 2, %s27
        %s503 = smul.u32 2, %s27
        %p504 = scmp.lt.s32.totalorder %s503, 1
        %s505 = scalar_select %p504, %s503, 1
        %s506 = scalar_lea.vmem %s1, %s505
        %s507 = smul.u32 2, %s27
        %p508 = scmp.lt.s32.totalorder %s28, 1
        %s509 = scalar_select %p508, %s28, 1
        %s510 = smul.addr %s509, 4
        %s511 = smul.addr %s510, 4
        %s512 = scalar_lea.vmem %s2, %s511
        %p513 = scmp.lt.s32.totalorder %s28, 1
        %s514 = scalar_select %p513, %s28, 1
        %s515 = scalar_lea.vmem %s3, %s514
        %p516 = scmp.lt.s32.totalorder %s28, 1
        %s517 = scalar_select %p516, %s28, 1
        %s518 = smul.addr %s517, 4
        %s519 = smul.addr %s518, 4
        %s520 = scalar_lea.vmem %s4, %s519
        %p521 = scmp.lt.s32.totalorder %s28, 1
        %s522 = scalar_select %p521, %s28, 1
        %s523 = smul.addr %s522, 64
        %s524 = smul.addr %s523, 4
        %s525 = scalar_lea.vmem %s5, %s524
        %p526 = scmp.lt.s32.totalorder %s28, 1
        %s527 = scalar_select %p526, %s28, 1
        %s528 = smul.addr %s527, 16
        %s529 = scalar_lea.vmem %s6, %s528
        %p530 = scmp.lt.s32.totalorder %s28, 1
        %s531 = scalar_select %p530, %s28, 1
        %s532 = smul.addr %s531, 256
        %s533 = smul.addr %s532, 4
        %s534 = scalar_lea.vmem %s7, %s533
        %p535 = scmp.lt.s32.totalorder %s28, 1
        %s536 = scalar_select %p535, %s28, 1
        %s537 = smul.addr %s536, 8
        %s538 = scalar_lea.vmem %s8, %s537
        %p540 = scmp.eq.s32.totalorder %s28, 0
        // Predicated region
        $region65: #{dronelog_forward.1} parent=63 // pred_check
          %p541 = pneg %p540
        $region66: #{dronelog_forward.1} parent=63 // pred_check_branch
          %543 = sbr.rel (%p541) target = $region68
        $region67: #{dronelog_forward.1} parent=63 // pred_region
          %v544 = vld [vmem:[%s501] sm:$0xff]
          %v545 = vld [vmem:[%s501 + $0x8] sm:$0xff]
          %vm546 = vcmask 261120
          %547 = vst.msk [vmem:[#allocation2] sm:$0xff] %vm546, %v544
          %548 = vst.msk [vmem:[#allocation2 + $0x8] sm:$0xff] %vm546, %v545
        $region68: #{dronelog_forward.1} parent=63 // pred_fallthru
          _
        %v549 = vld [vmem:[#allocation2] sm:$0xff]
        %v550 = vld [vmem:[#allocation2 + $0x8] sm:$0xff]
        %v551 = vld [vmem:[%s506] sm:$0x1]
        %v552 = vld [vmem:[%s506 + $0x1] sm:$0x1]
        %v553 = vpack.c.bf16 %v550, %v549
        %v554 = vld [vmem:[%s512] sm:$0xf]
        %v555 = vld [vmem:[%s512 + $0x4] sm:$0xf]
        %v556 = vld [vmem:[%s512 + $0x8] sm:$0xf]
        %v557 = vld [vmem:[%s512 + $0xc] sm:$0xf]
        %v558 = vld [vmem:[%s515] sm:$0x1]
        %v560 = vlaneseq
        %v561 = vshrl.u32 %v560, 7
        %v562 = vsub.s32 0, %v561
        %v563 = vrot.slane %v558, %v562
        %v569 = vunpack.c.l.b16 %v554
        %v570 = vunpack.c.l.b16 %v555
        %v571 = vunpack.c.l.b16 %v556
        %v572 = vunpack.c.l.b16 %v557
        %v573 = vpack.c.b16 %v570, %v569
        %v574 = vpack.c.b16 %v572, %v571
        %vm577 = vcmask 261120
        %v579 = vsel %vm577, %v553, 0
        %581 = vmatprep.subr.bf16.mxu0 0
        %582 = vmatpush1.bf16.msra.mxu0 %v573
        %583 = vmatprep.subr.bf16.mxu0 0
        %584 = vmatpush1.bf16.msra.mxu0 %v574
        %585 = vmatprep.subr.bf16.mxu0 0
        %586 = vmatpush1.bf16.msra.mxu0 0
        %587 = vmatprep.subr.bf16.mxu0 0
        %588 = vmatpush1.bf16.msra.mxu0 0
        %589 = vmatprep.subr.bf16.mxu0 0
        %590 = vmatpush1.bf16.msra.mxu0 0
        %591 = vmatprep.subr.bf16.mxu0 0
        %592 = vmatpush1.bf16.msra.mxu0 0
        %593 = vmatprep.subr.bf16.mxu0 0
        %594 = vmatpush1.bf16.msra.mxu0 0
        %595 = vmatprep.subr.bf16.mxu0 0
        %596 = vmatpush1.bf16.msra.mxu0 0
        %597 = vmatprep.subr.bf16.mxu0 0
        %598 = vmatpush1.bf16.msra.mxu0 0
        %599 = vmatprep.subr.bf16.mxu0 0
        %600 = vmatpush1.bf16.msra.mxu0 0
        %601 = vmatprep.subr.bf16.mxu0 0
        %602 = vmatpush1.bf16.msra.mxu0 0
        %603 = vmatprep.subr.bf16.mxu0 0
        %604 = vmatpush1.bf16.msra.mxu0 0
        %605 = vmatprep.subr.bf16.mxu0 0
        %606 = vmatpush1.bf16.msra.mxu0 0
        %607 = vmatprep.subr.bf16.mxu0 0
        %608 = vmatpush1.bf16.msra.mxu0 0
        %609 = vmatprep.subr.bf16.mxu0 0
        %610 = vmatpush1.bf16.msra.mxu0 0
        %611 = vmatprep.subr.bf16.mxu0 0
        %612 = vmatpush1.bf16.msra.mxu0 0
        %613 = vmatprep.mubr.bf16.mxu0 0
        %614 = vmatmul.mubr.bf16.gmra.mrb[0].mxu0 %v579
        %v615 = vpop.f32.mrb[0].mxu0
        %v616 = vadd.f32 %v563, %v615
        %v617 = vpop.f32.mrb[0].mxu0
        %v618 = vpop.f32.mrb[0].mxu0
        %v619 = vadd.f32 %v563, %v618
        %v620 = vpop.f32.mrb[0].mxu0
        %621 = vdwg.mxu0
        %v622 = vpack.c.bf16 %v619, %v616
        %v624 = vunpack.c.l.b16 %v622
        %v625 = vunpack.c.h.b16 %v622
        %v626 = vpack.c.b16 %v624, %v624
        %v627 = vpack.c.b16 %v625, %v625
        %v628 = vld [vmem:[%s538] sm:$0x3f]
        %v631 = vlaneseq
        %v632 = vshrl.u32 %v631, 7
        %v633 = vsub.s32 0, %v632
        %v634 = vrot.slane %v551, %v633
        %v635 = vlaneseq
        %v636 = vshrl.u32 %v635, 7
        %v637 = vsub.s32 0, %v636
        %v638 = vrot.slane %v552, %v637
        %641 = vrot.lane.b32.xlu0 %v626, 96
        %v642 = vpop.permute.xlu0 %641
        %vm643 = vcmask 64512
        %v645 = vsel %vm643, %v626, 0
        %v648 = vsel %vm643, %v642, 0
        %650 = vmatprep.subr.bf16.mxu0 0
        %651 = vmatpush1.bf16.xpose.msra.mxu0 %v648
        %652 = vmatprep.subr.bf16.mxu0 0
        %653 = vmatpush1.bf16.xpose.msra.mxu0 0
        %654 = vmatprep.subr.bf16.mxu0 0
        %655 = vmatpush1.bf16.xpose.msra.mxu0 0
        %656 = vmatprep.subr.bf16.mxu0 0
        %657 = vmatpush1.bf16.xpose.msra.mxu0 0
        %658 = vmatprep.subr.bf16.mxu0 0
        %659 = vmatpush1.bf16.xpose.msra.mxu0 0
        %660 = vmatprep.subr.bf16.mxu0 0
        %661 = vmatpush1.bf16.xpose.msra.mxu0 0
        %662 = vmatprep.subr.bf16.mxu0 0
        %663 = vmatpush1.bf16.xpose.msra.mxu0 0
        %664 = vmatprep.subr.bf16.mxu0 0
        %665 = vmatpush1.bf16.xpose.msra.mxu0 0
        %666 = vmatprep.subr.bf16.mxu0 0
        %667 = vmatpush1.bf16.xpose.msra.mxu0 0
        %668 = vmatprep.subr.bf16.mxu0 0
        %669 = vmatpush1.bf16.xpose.msra.mxu0 0
        %670 = vmatprep.subr.bf16.mxu0 0
        %671 = vmatpush1.bf16.xpose.msra.mxu0 0
        %672 = vmatprep.subr.bf16.mxu0 0
        %673 = vmatpush1.bf16.xpose.msra.mxu0 0
        %674 = vmatprep.subr.bf16.mxu0 0
        %675 = vmatpush1.bf16.xpose.msra.mxu0 0
        %676 = vmatprep.subr.bf16.mxu0 0
        %677 = vmatpush1.bf16.xpose.msra.mxu0 0
        %678 = vmatprep.subr.bf16.mxu0 0
        %679 = vmatpush1.bf16.xpose.msra.mxu0 0
        %680 = vmatprep.subr.bf16.mxu0 0
        %681 = vmatpush1.bf16.xpose.msra.mxu0 0
        %682 = vmatprep.mubr.bf16.mxu0 0
        %683 = vmatmul.mubr.bf16.gmra.mrb[0].mxu0 %v645
        %v684 = vpop.f32.mrb[0].mxu0
        %v685 = vadd.f32 %v634, %v684
        %v686 = vpop.f32.mrb[0].mxu0
        %v687 = vpop.f32.mrb[0].mxu0
        %v688 = vpop.f32.mrb[0].mxu0
        %689 = vdwg.mxu0
        %690 = vrot.lane.b32.xlu0 %v627, 96
        %v691 = vpop.permute.xlu0 %690
        %v693 = vsel %vm643, %v627, 0
        %v696 = vsel %vm643, %v691, 0
        %698 = vmatprep.subr.bf16.mxu0 0
        %699 = vmatpush1.bf16.xpose.msra.mxu0 %v696
        %700 = vmatprep.subr.bf16.mxu0 0
        %701 = vmatpush1.bf16.xpose.msra.mxu0 0
        %702 = vmatprep.subr.bf16.mxu0 0
        %703 = vmatpush1.bf16.xpose.msra.mxu0 0
        %704 = vmatprep.subr.bf16.mxu0 0
        %705 = vmatpush1.bf16.xpose.msra.mxu0 0
        %706 = vmatprep.subr.bf16.mxu0 0
        %707 = vmatpush1.bf16.xpose.msra.mxu0 0
        %708 = vmatprep.subr.bf16.mxu0 0
        %709 = vmatpush1.bf16.xpose.msra.mxu0 0
        %710 = vmatprep.subr.bf16.mxu0 0
        %711 = vmatpush1.bf16.xpose.msra.mxu0 0
        %712 = vmatprep.subr.bf16.mxu0 0
        %713 = vmatpush1.bf16.xpose.msra.mxu0 0
        %714 = vmatprep.subr.bf16.mxu0 0
        %715 = vmatpush1.bf16.xpose.msra.mxu0 0
        %716 = vmatprep.subr.bf16.mxu0 0
        %717 = vmatpush1.bf16.xpose.msra.mxu0 0
        %718 = vmatprep.subr.bf16.mxu0 0
        %719 = vmatpush1.bf16.xpose.msra.mxu0 0
        %720 = vmatprep.subr.bf16.mxu0 0
        %721 = vmatpush1.bf16.xpose.msra.mxu0 0
        %722 = vmatprep.subr.bf16.mxu0 0
        %723 = vmatpush1.bf16.xpose.msra.mxu0 0
        %724 = vmatprep.subr.bf16.mxu0 0
        %725 = vmatpush1.bf16.xpose.msra.mxu0 0
        %726 = vmatprep.subr.bf16.mxu0 0
        %727 = vmatpush1.bf16.xpose.msra.mxu0 0
        %728 = vmatprep.subr.bf16.mxu0 0
        %729 = vmatpush1.bf16.xpose.msra.mxu0 0
        %730 = vmatprep.mubr.bf16.mxu0 0
        %731 = vmatmul.mubr.bf16.gmra.mrb[0].mxu0 %v693
        %v732 = vpop.f32.mrb[0].mxu0
        %v733 = vadd.f32 %v638, %v732
        %v734 = vpop.f32.mrb[0].mxu0
        %v735 = vpop.f32.mrb[0].mxu0
        %v736 = vpop.f32.mrb[0].mxu0
        %737 = vdwg.mxu0
        %v738 = vsel %vm643, %v685, -inf
        %739 = vmax.xlane.f32.xlu0 %v738
        %v740 = vpop.xlane.xlu0 %739
        %v741 = vsel %vm643, %v733, -inf
        %742 = vmax.xlane.f32.xlu0 %v741
        %v743 = vpop.xlane.xlu0 %742
        %v744 = vsub.f32 %v685, %v740
        %v745 = vsub.f32 %v733, %v743
        %v746 = vmul.f32 %v744, 1.442695
        %v747 = vpow.pop %v746
        %v748 = vmul.f32 %v745, 1.442695
        %v749 = vpow.pop %v748
        %v750 = vsel %vm643, %v747, 0.0
        %751 = vadd.xlane.f32.xlu0 %v750
        %v752 = vpop.xlane.xlu0 %751
        %v753 = vsel %vm643, %v749, 0.0
        %754 = vadd.xlane.f32.xlu0 %v753
        %v755 = vpop.xlane.xlu0 %754
        %v756 = vrcp.pop %v752
        %v757 = vrcp.pop %v755
        %v758 = vmul.f32 %v747, %v756
        %v759 = vmul.f32 %v749, %v757
        %v760 = vpack.c.bf16 %v758, %v758
        %v761 = vpack.c.bf16 %v759, %v759
        %762 = vrot.lane.b32.xlu0 %v626, 64
        %v763 = vpop.permute.xlu0 %762
        %v765 = vsel %vm643, %v760, 0
        %vm767 = vcmask 1043456
        %v769 = vsel %vm767, %v763, 0
        %771 = vmatprep.subr.bf16.mxu0 0
        %772 = vmatpush1.bf16.msra.mxu0 %v769
        %773 = vmatprep.subr.bf16.mxu0 0
        %774 = vmatpush1.bf16.msra.mxu0 0
        %775 = vmatprep.subr.bf16.mxu0 0
        %776 = vmatpush1.bf16.msra.mxu0 0
        %777 = vmatprep.subr.bf16.mxu0 0
        %778 = vmatpush1.bf16.msra.mxu0 0
        %779 = vmatprep.subr.bf16.mxu0 0
        %780 = vmatpush1.bf16.msra.mxu0 0
        %781 = vmatprep.subr.bf16.mxu0 0
        %782 = vmatpush1.bf16.msra.mxu0 0
        %783 = vmatprep.subr.bf16.mxu0 0
        %784 = vmatpush1.bf16.msra.mxu0 0
        %785 = vmatprep.subr.bf16.mxu0 0
        %786 = vmatpush1.bf16.msra.mxu0 0
        %787 = vmatprep.subr.bf16.mxu0 0
        %788 = vmatpush1.bf16.msra.mxu0 0
        %789 = vmatprep.subr.bf16.mxu0 0
        %790 = vmatpush1.bf16.msra.mxu0 0
        %791 = vmatprep.subr.bf16.mxu0 0
        %792 = vmatpush1.bf16.msra.mxu0 0
        %793 = vmatprep.subr.bf16.mxu0 0
        %794 = vmatpush1.bf16.msra.mxu0 0
        %795 = vmatprep.subr.bf16.mxu0 0
        %796 = vmatpush1.bf16.msra.mxu0 0
        %797 = vmatprep.subr.bf16.mxu0 0
        %798 = vmatpush1.bf16.msra.mxu0 0
        %799 = vmatprep.subr.bf16.mxu0 0
        %800 = vmatpush1.bf16.msra.mxu0 0
        %801 = vmatprep.subr.bf16.mxu0 0
        %802 = vmatpush1.bf16.msra.mxu0 0
        %803 = vmatprep.mubr.bf16.mxu0 0
        %804 = vmatmul.mubr.bf16.gmra.mrb[0].mxu0 %v765
        %v805 = vpop.f32.mrb[0].mxu0
        %v806 = vadd.f32 0.0, %v805
        %v807 = vpop.f32.mrb[0].mxu0
        %v808 = vpop.f32.mrb[0].mxu0
        %v809 = vpop.f32.mrb[0].mxu0
        %810 = vdwg.mxu0
        %811 = vrot.lane.b32.xlu0 %v627, 64
        %v812 = vpop.permute.xlu0 %811
        %v814 = vsel %vm643, %v761, 0
        %v817 = vsel %vm767, %v812, 0
        %819 = vmatprep.subr.bf16.mxu0 0
        %820 = vmatpush1.bf16.msra.mxu0 %v817
        %821 = vmatprep.subr.bf16.mxu0 0
        %822 = vmatpush1.bf16.msra.mxu0 0
        %823 = vmatprep.subr.bf16.mxu0 0
        %824 = vmatpush1.bf16.msra.mxu0 0
        %825 = vmatprep.subr.bf16.mxu0 0
        %826 = vmatpush1.bf16.msra.mxu0 0
        %827 = vmatprep.subr.bf16.mxu0 0
        %828 = vmatpush1.bf16.msra.mxu0 0
        %829 = vmatprep.subr.bf16.mxu0 0
        %830 = vmatpush1.bf16.msra.mxu0 0
        %831 = vmatprep.subr.bf16.mxu0 0
        %832 = vmatpush1.bf16.msra.mxu0 0
        %833 = vmatprep.subr.bf16.mxu0 0
        %834 = vmatpush1.bf16.msra.mxu0 0
        %835 = vmatprep.subr.bf16.mxu0 0
        %836 = vmatpush1.bf16.msra.mxu0 0
        %837 = vmatprep.subr.bf16.mxu0 0
        %838 = vmatpush1.bf16.msra.mxu0 0
        %839 = vmatprep.subr.bf16.mxu0 0
        %840 = vmatpush1.bf16.msra.mxu0 0
        %841 = vmatprep.subr.bf16.mxu0 0
        %842 = vmatpush1.bf16.msra.mxu0 0
        %843 = vmatprep.subr.bf16.mxu0 0
        %844 = vmatpush1.bf16.msra.mxu0 0
        %845 = vmatprep.subr.bf16.mxu0 0
        %846 = vmatpush1.bf16.msra.mxu0 0
        %847 = vmatprep.subr.bf16.mxu0 0
        %848 = vmatpush1.bf16.msra.mxu0 0
        %849 = vmatprep.subr.bf16.mxu0 0
        %850 = vmatpush1.bf16.msra.mxu0 0
        %851 = vmatprep.mubr.bf16.mxu0 0
        %852 = vmatmul.mubr.bf16.gmra.mrb[0].mxu0 %v814
        %v853 = vpop.f32.mrb[0].mxu0
        %v854 = vadd.f32 0.0, %v853
        %v855 = vpop.f32.mrb[0].mxu0
        %v856 = vpop.f32.mrb[0].mxu0
        %v857 = vpop.f32.mrb[0].mxu0
        %858 = vdwg.mxu0
        %v859 = vpack.c.bf16 %v806, %v806
        %v860 = vpack.c.bf16 %v854, %v854
        %861 = vrot.lane.b32.xlu0 %v626, 120
        %v862 = vpop.permute.xlu0 %861
        %863 = vrot.lane.b32.xlu0 %v626, 88
        %v864 = vpop.permute.xlu0 %863
        %v866 = vsel %vm643, %v862, 0
        %v869 = vsel %vm643, %v864, 0
        %871 = vmatprep.subr.bf16.mxu0 0
        %872 = vmatpush1.bf16.xpose.msra.mxu0 %v869
        %873 = vmatprep.subr.bf16.mxu0 0
        %874 = vmatpush1.bf16.xpose.msra.mxu0 0
        %875 = vmatprep.subr.bf16.mxu0 0
        %876 = vmatpush1.bf16.xpose.msra.mxu0 0
        %877 = vmatprep.subr.bf16.mxu0 0
        %878 = vmatpush1.bf16.xpose.msra.mxu0 0
        %879 = vmatprep.subr.bf16.mxu0 0
        %880 = vmatpush1.bf16.xpose.msra.mxu0 0
        %881 = vmatprep.subr.bf16.mxu0 0
        %882 = vmatpush1.bf16.xpose.msra.mxu0 0
        %883 = vmatprep.subr.bf16.mxu0 0
        %884 = vmatpush1.bf16.xpose.msra.mxu0 0
        %885 = vmatprep.subr.bf16.mxu0 0
        %886 = vmatpush1.bf16.xpose.msra.mxu0 0
        %887 = vmatprep.subr.bf16.mxu0 0
        %888 = vmatpush1.bf16.xpose.msra.mxu0 0
        %889 = vmatprep.subr.bf16.mxu0 0
        %890 = vmatpush1.bf16.xpose.msra.mxu0 0
        %891 = vmatprep.subr.bf16.mxu0 0
        %892 = vmatpush1.bf16.xpose.msra.mxu0 0
        %893 = vmatprep.subr.bf16.mxu0 0
        %894 = vmatpush1.bf16.xpose.msra.mxu0 0
        %895 = vmatprep.subr.bf16.mxu0 0
        %896 = vmatpush1.bf16.xpose.msra.mxu0 0
        %897 = vmatprep.subr.bf16.mxu0 0
        %898 = vmatpush1.bf16.xpose.msra.mxu0 0
        %899 = vmatprep.subr.bf16.mxu0 0
        %900 = vmatpush1.bf16.xpose.msra.mxu0 0
        %901 = vmatprep.subr.bf16.mxu0 0
        %902 = vmatpush1.bf16.xpose.msra.mxu0 0
        %903 = vmatprep.mubr.bf16.mxu0 0
        %904 = vmatmul.mubr.bf16.gmra.mrb[0].mxu0 %v866
        %v905 = vpop.f32.mrb[0].mxu0
        %v906 = vadd.f32 %v634, %v905
        %v907 = vpop.f32.mrb[0].mxu0
        %v908 = vpop.f32.mrb[0].mxu0
        %v909 = vpop.f32.mrb[0].mxu0
        %910 = vdwg.mxu0
        %911 = vrot.lane.b32.xlu0 %v627, 120
        %v912 = vpop.permute.xlu0 %911
        %913 = vrot.lane.b32.xlu0 %v627, 88
        %v914 = vpop.permute.xlu0 %913
        %v916 = vsel %vm643, %v912, 0
        %v919 = vsel %vm643, %v914, 0
        %921 = vmatprep.subr.bf16.mxu0 0
        %922 = vmatpush1.bf16.xpose.msra.mxu0 %v919
        %923 = vmatprep.subr.bf16.mxu0 0
        %924 = vmatpush1.bf16.xpose.msra.mxu0 0
        %925 = vmatprep.subr.bf16.mxu0 0
        %926 = vmatpush1.bf16.xpose.msra.mxu0 0
        %927 = vmatprep.subr.bf16.mxu0 0
        %928 = vmatpush1.bf16.xpose.msra.mxu0 0
        %929 = vmatprep.subr.bf16.mxu0 0
        %930 = vmatpush1.bf16.xpose.msra.mxu0 0
        %931 = vmatprep.subr.bf16.mxu0 0
        %932 = vmatpush1.bf16.xpose.msra.mxu0 0
        %933 = vmatprep.subr.bf16.mxu0 0
        %934 = vmatpush1.bf16.xpose.msra.mxu0 0
        %935 = vmatprep.subr.bf16.mxu0 0
        %936 = vmatpush1.bf16.xpose.msra.mxu0 0
        %937 = vmatprep.subr.bf16.mxu0 0
        %938 = vmatpush1.bf16.xpose.msra.mxu0 0
        %939 = vmatprep.subr.bf16.mxu0 0
        %940 = vmatpush1.bf16.xpose.msra.mxu0 0
        %941 = vmatprep.subr.bf16.mxu0 0
        %942 = vmatpush1.bf16.xpose.msra.mxu0 0
        %943 = vmatprep.subr.bf16.mxu0 0
        %944 = vmatpush1.bf16.xpose.msra.mxu0 0
        %945 = vmatprep.subr.bf16.mxu0 0
        %946 = vmatpush1.bf16.xpose.msra.mxu0 0
        %947 = vmatprep.subr.bf16.mxu0 0
        %948 = vmatpush1.bf16.xpose.msra.mxu0 0
        %949 = vmatprep.subr.bf16.mxu0 0
        %950 = vmatpush1.bf16.xpose.msra.mxu0 0
        %951 = vmatprep.subr.bf16.mxu0 0
        %952 = vmatpush1.bf16.xpose.msra.mxu0 0
        %953 = vmatprep.mubr.bf16.mxu0 0
        %954 = vmatmul.mubr.bf16.gmra.mrb[0].mxu0 %v916
        %v955 = vpop.f32.mrb[0].mxu0
        %v956 = vadd.f32 %v638, %v955
        %v957 = vpop.f32.mrb[0].mxu0
        %v958 = vpop.f32.mrb[0].mxu0
        %v959 = vpop.f32.mrb[0].mxu0
        %960 = vdwg.mxu0
        %v961 = vsel %vm643, %v906, -inf
        %962 = vmax.xlane.f32.xlu0 %v961
        %v963 = vpop.xlane.xlu0 %962
        %v964 = vsel %vm643, %v956, -inf
        %965 = vmax.xlane.f32.xlu0 %v964
        %v966 = vpop.xlane.xlu0 %965
        %v967 = vsub.f32 %v906, %v963
        %v968 = vsub.f32 %v956, %v966
        %v969 = vmul.f32 %v967, 1.442695
        %v970 = vpow.pop %v969
        %v971 = vmul.f32 %v968, 1.442695
        %v972 = vpow.pop %v971
        %v973 = vsel %vm643, %v970, 0.0
        %974 = vadd.xlane.f32.xlu0 %v973
        %v975 = vpop.xlane.xlu0 %974
        %v976 = vsel %vm643, %v972, 0.0
        %977 = vadd.xlane.f32.xlu0 %v976
        %v978 = vpop.xlane.xlu0 %977
        %v979 = vrcp.pop %v975
        %v980 = vrcp.pop %v978
        %v981 = vmul.f32 %v970, %v979
        %v982 = vmul.f32 %v972, %v980
        %v983 = vpack.c.bf16 %v981, %v981
        %v984 = vpack.c.bf16 %v982, %v982
        %985 = vrot.lane.b32.xlu0 %v626, 56
        %v986 = vpop.permute.xlu0 %985
        %v988 = vsel %vm643, %v983, 0
        %v991 = vsel %vm767, %v986, 0
        %993 = vmatprep.subr.bf16.mxu0 0
        %994 = vmatpush1.bf16.msra.mxu0 %v991
        %995 = vmatprep.subr.bf16.mxu0 0
        %996 = vmatpush1.bf16.msra.mxu0 0
        %997 = vmatprep.subr.bf16.mxu0 0
        %998 = vmatpush1.bf16.msra.mxu0 0
        %999 = vmatprep.subr.bf16.mxu0 0
        %1000 = vmatpush1.bf16.msra.mxu0 0
        %1001 = vmatprep.subr.bf16.mxu0 0
        %1002 = vmatpush1.bf16.msra.mxu0 0
        %1003 = vmatprep.subr.bf16.mxu0 0
        %1004 = vmatpush1.bf16.msra.mxu0 0
        %1005 = vmatprep.subr.bf16.mxu0 0
        %1006 = vmatpush1.bf16.msra.mxu0 0
        %1007 = vmatprep.subr.bf16.mxu0 0
        %1008 = vmatpush1.bf16.msra.mxu0 0
        %1009 = vmatprep.subr.bf16.mxu0 0
        %1010 = vmatpush1.bf16.msra.mxu0 0
        %1011 = vmatprep.subr.bf16.mxu0 0
        %1012 = vmatpush1.bf16.msra.mxu0 0
        %1013 = vmatprep.subr.bf16.mxu0 0
        %1014 = vmatpush1.bf16.msra.mxu0 0
        %1015 = vmatprep.subr.bf16.mxu0 0
        %1016 = vmatpush1.bf16.msra.mxu0 0
        %1017 = vmatprep.subr.bf16.mxu0 0
        %1018 = vmatpush1.bf16.msra.mxu0 0
        %1019 = vmatprep.subr.bf16.mxu0 0
        %1020 = vmatpush1.bf16.msra.mxu0 0
        %1021 = vmatprep.subr.bf16.mxu0 0
        %1022 = vmatpush1.bf16.msra.mxu0 0
        %1023 = vmatprep.subr.bf16.mxu0 0
        %1024 = vmatpush1.bf16.msra.mxu0 0
        %1025 = vmatprep.mubr.bf16.mxu0 0
        %1026 = vmatmul.mubr.bf16.gmra.mrb[0].mxu0 %v988
        %v1027 = vpop.f32.mrb[0].mxu0
        %v1028 = vadd.f32 0.0, %v1027
        %v1029 = vpop.f32.mrb[0].mxu0
        %v1030 = vpop.f32.mrb[0].mxu0
        %v1031 = vpop.f32.mrb[0].mxu0
        %1032 = vdwg.mxu0
        %1033 = vrot.lane.b32.xlu0 %v627, 56
        %v1034 = vpop.permute.xlu0 %1033
        %v1036 = vsel %vm643, %v984, 0
        %v1039 = vsel %vm767, %v1034, 0
        %1041 = vmatprep.subr.bf16.mxu0 0
        %1042 = vmatpush1.bf16.msra.mxu0 %v1039
        %1043 = vmatprep.subr.bf16.mxu0 0
        %1044 = vmatpush1.bf16.msra.mxu0 0
        %1045 = vmatprep.subr.bf16.mxu0 0
        %1046 = vmatpush1.bf16.msra.mxu0 0
        %1047 = vmatprep.subr.bf16.mxu0 0
        %1048 = vmatpush1.bf16.msra.mxu0 0
        %1049 = vmatprep.subr.bf16.mxu0 0
        %1050 = vmatpush1.bf16.msra.mxu0 0
        %1051 = vmatprep.subr.bf16.mxu0 0
        %1052 = vmatpush1.bf16.msra.mxu0 0
        %1053 = vmatprep.subr.bf16.mxu0 0
        %1054 = vmatpush1.bf16.msra.mxu0 0
        %1055 = vmatprep.subr.bf16.mxu0 0
        %1056 = vmatpush1.bf16.msra.mxu0 0
        %1057 = vmatprep.subr.bf16.mxu0 0
        %1058 = vmatpush1.bf16.msra.mxu0 0
        %1059 = vmatprep.subr.bf16.mxu0 0
        %1060 = vmatpush1.bf16.msra.mxu0 0
        %1061 = vmatprep.subr.bf16.mxu0 0
        %1062 = vmatpush1.bf16.msra.mxu0 0
        %1063 = vmatprep.subr.bf16.mxu0 0
        %1064 = vmatpush1.bf16.msra.mxu0 0
        %1065 = vmatprep.subr.bf16.mxu0 0
        %1066 = vmatpush1.bf16.msra.mxu0 0
        %1067 = vmatprep.subr.bf16.mxu0 0
        %1068 = vmatpush1.bf16.msra.mxu0 0
        %1069 = vmatprep.subr.bf16.mxu0 0
        %1070 = vmatpush1.bf16.msra.mxu0 0
        %1071 = vmatprep.subr.bf16.mxu0 0
        %1072 = vmatpush1.bf16.msra.mxu0 0
        %1073 = vmatprep.mubr.bf16.mxu0 0
        %1074 = vmatmul.mubr.bf16.gmra.mrb[0].mxu0 %v1036
        %v1075 = vpop.f32.mrb[0].mxu0
        %v1076 = vadd.f32 0.0, %v1075
        %v1077 = vpop.f32.mrb[0].mxu0
        %v1078 = vpop.f32.mrb[0].mxu0
        %v1079 = vpop.f32.mrb[0].mxu0
        %1080 = vdwg.mxu0
        %v1081 = vpack.c.bf16 %v1028, %v1028
        %v1082 = vpack.c.bf16 %v1076, %v1076
        %1083 = vrot.lane.b32.xlu0 %v626, 112
        %v1084 = vpop.permute.xlu0 %1083
        %1085 = vrot.lane.b32.xlu0 %v626, 80
        %v1086 = vpop.permute.xlu0 %1085
        %v1088 = vsel %vm643, %v1084, 0
        %v1091 = vsel %vm643, %v1086, 0
        %1093 = vmatprep.subr.bf16.mxu0 0
        %1094 = vmatpush1.bf16.xpose.msra.mxu0 %v1091
        %1095 = vmatprep.subr.bf16.mxu0 0
        %1096 = vmatpush1.bf16.xpose.msra.mxu0 0
        %1097 = vmatprep.subr.bf16.mxu0 0
        %1098 = vmatpush1.bf16.xpose.msra.mxu0 0
        %1099 = vmatprep.subr.bf16.mxu0 0
        %1100 = vmatpush1.bf16.xpose.msra.mxu0 0
        %1101 = vmatprep.subr.bf16.mxu0 0
        %1102 = vmatpush1.bf16.xpose.msra.mxu0 0
        %1103 = vmatprep.subr.bf16.mxu0 0
        %1104 = vmatpush1.bf16.xpose.msra.mxu0 0
        %1105 = vmatprep.subr.bf16.mxu0 0
        %1106 = vmatpush1.bf16.xpose.msra.mxu0 0
        %1107 = vmatprep.subr.bf16.mxu0 0
        %1108 = vmatpush1.bf16.xpose.msra.mxu0 0
        %1109 = vmatprep.subr.bf16.mxu0 0
        %1110 = vmatpush1.bf16.xpose.msra.mxu0 0
        %1111 = vmatprep.subr.bf16.mxu0 0
        %1112 = vmatpush1.bf16.xpose.msra.mxu0 0
        %1113 = vmatprep.subr.bf16.mxu0 0
        %1114 = vmatpush1.bf16.xpose.msra.mxu0 0
        %1115 = vmatprep.subr.bf16.mxu0 0
        %1116 = vmatpush1.bf16.xpose.msra.mxu0 0
        %1117 = vmatprep.subr.bf16.mxu0 0
        %1118 = vmatpush1.bf16.xpose.msra.mxu0 0
        %1119 = vmatprep.subr.bf16.mxu0 0
        %1120 = vmatpush1.bf16.xpose.msra.mxu0 0
        %1121 = vmatprep.subr.bf16.mxu0 0
        %1122 = vmatpush1.bf16.xpose.msra.mxu0 0
        %1123 = vmatprep.subr.bf16.mxu0 0
        %1124 = vmatpush1.bf16.xpose.msra.mxu0 0
        %1125 = vmatprep.mubr.bf16.mxu0 0
        %1126 = vmatmul.mubr.bf16.gmra.mrb[0].mxu0 %v1088
        %v1127 = vpop.f32.mrb[0].mxu0
        %v1128 = vadd.f32 %v634, %v1127
        %v1129 = vpop.f32.mrb[0].mxu0
        %v1130 = vpop.f32.mrb[0].mxu0
        %v1131 = vpop.f32.mrb[0].mxu0
        %1132 = vdwg.mxu0
        %1133 = vrot.lane.b32.xlu0 %v627, 112
        %v1134 = vpop.permute.xlu0 %1133
        %1135 = vrot.lane.b32.xlu0 %v627, 80
        %v1136 = vpop.permute.xlu0 %1135
        %v1138 = vsel %vm643, %v1134, 0
        %v1141 = vsel %vm643, %v1136, 0
        %1143 = vmatprep.subr.bf16.mxu0 0
        %1144 = vmatpush1.bf16.xpose.msra.mxu0 %v1141
        %1145 = vmatprep.subr.bf16.mxu0 0
        %1146 = vmatpush1.bf16.xpose.msra.mxu0 0
        %1147 = vmatprep.subr.bf16.mxu0 0
        %1148 = vmatpush1.bf16.xpose.msra.mxu0 0
        %1149 = vmatprep.subr.bf16.mxu0 0
        %1150 = vmatpush1.bf16.xpose.msra.mxu0 0
        %1151 = vmatprep.subr.bf16.mxu0 0
        %1152 = vmatpush1.bf16.xpose.msra.mxu0 0
        %1153 = vmatprep.subr.bf16.mxu0 0
        %1154 = vmatpush1.bf16.xpose.msra.mxu0 0
        %1155 = vmatprep.subr.bf16.mxu0 0
        %1156 = vmatpush1.bf16.xpose.msra.mxu0 0
        %1157 = vmatprep.subr.bf16.mxu0 0
        %1158 = vmatpush1.bf16.xpose.msra.mxu0 0
        %1159 = vmatprep.subr.bf16.mxu0 0
        %1160 = vmatpush1.bf16.xpose.msra.mxu0 0
        %1161 = vmatprep.subr.bf16.mxu0 0
        %1162 = vmatpush1.bf16.xpose.msra.mxu0 0
        %1163 = vmatprep.subr.bf16.mxu0 0
        %1164 = vmatpush1.bf16.xpose.msra.mxu0 0
        %1165 = vmatprep.subr.bf16.mxu0 0
        %1166 = vmatpush1.bf16.xpose.msra.mxu0 0
        %1167 = vmatprep.subr.bf16.mxu0 0
        %1168 = vmatpush1.bf16.xpose.msra.mxu0 0
        %1169 = vmatprep.subr.bf16.mxu0 0
        %1170 = vmatpush1.bf16.xpose.msra.mxu0 0
        %1171 = vmatprep.subr.bf16.mxu0 0
        %1172 = vmatpush1.bf16.xpose.msra.mxu0 0
        %1173 = vmatprep.subr.bf16.mxu0 0
        %1174 = vmatpush1.bf16.xpose.msra.mxu0 0
        %1175 = vmatprep.mubr.bf16.mxu0 0
        %1176 = vmatmul.mubr.bf16.gmra.mrb[0].mxu0 %v1138
        %v1177 = vpop.f32.mrb[0].mxu0
        %v1178 = vadd.f32 %v638, %v1177
        %v1179 = vpop.f32.mrb[0].mxu0
        %v1180 = vpop.f32.mrb[0].mxu0
        %v1181 = vpop.f32.mrb[0].mxu0
        %1182 = vdwg.mxu0
        %v1183 = vsel %vm643, %v1128, -inf
        %1184 = vmax.xlane.f32.xlu0 %v1183
        %v1185 = vpop.xlane.xlu0 %1184
        %v1186 = vsel %vm643, %v1178, -inf
        %1187 = vmax.xlane.f32.xlu0 %v1186
        %v1188 = vpop.xlane.xlu0 %1187
        %v1189 = vsub.f32 %v1128, %v1185
        %v1190 = vsub.f32 %v1178, %v1188
        %v1191 = vmul.f32 %v1189, 1.442695
        %v1192 = vpow.pop %v1191
        %v1193 = vmul.f32 %v1190, 1.442695
        %v1194 = vpow.pop %v1193
        %v1195 = vsel %vm643, %v1192, 0.0
        %1196 = vadd.xlane.f32.xlu0 %v1195
        %v1197 = vpop.xlane.xlu0 %1196
        %v1198 = vsel %vm643, %v1194, 0.0
        %1199 = vadd.xlane.f32.xlu0 %v1198
        %v1200 = vpop.xlane.xlu0 %1199
        %v1201 = vrcp.pop %v1197
        %v1202 = vrcp.pop %v1200
        %v1203 = vmul.f32 %v1192, %v1201
        %v1204 = vmul.f32 %v1194, %v1202
        %v1205 = vpack.c.bf16 %v1203, %v1203
        %v1206 = vpack.c.bf16 %v1204, %v1204
        %1207 = vrot.lane.b32.xlu0 %v626, 48
        %v1208 = vpop.permute.xlu0 %1207
        %v1210 = vsel %vm643, %v1205, 0
        %v1213 = vsel %vm767, %v1208, 0
        %1215 = vmatprep.subr.bf16.mxu0 0
        %1216 = vmatpush1.bf16.msra.mxu0 %v1213
        %1217 = vmatprep.subr.bf16.mxu0 0
        %1218 = vmatpush1.bf16.msra.mxu0 0
        %1219 = vmatprep.subr.bf16.mxu0 0
        %1220 = vmatpush1.bf16.msra.mxu0 0
        %1221 = vmatprep.subr.bf16.mxu0 0
        %1222 = vmatpush1.bf16.msra.mxu0 0
        %1223 = vmatprep.subr.bf16.mxu0 0
        %1224 = vmatpush1.bf16.msra.mxu0 0
        %1225 = vmatprep.subr.bf16.mxu0 0
        %1226 = vmatpush1.bf16.msra.mxu0 0
        %1227 = vmatprep.subr.bf16.mxu0 0
        %1228 = vmatpush1.bf16.msra.mxu0 0
        %1229 = vmatprep.subr.bf16.mxu0 0
        %1230 = vmatpush1.bf16.msra.mxu0 0
        %1231 = vmatprep.subr.bf16.mxu0 0
        %1232 = vmatpush1.bf16.msra.mxu0 0
        %1233 = vmatprep.subr.bf16.mxu0 0
        %1234 = vmatpush1.bf16.msra.mxu0 0
        %1235 = vmatprep.subr.bf16.mxu0 0
        %1236 = vmatpush1.bf16.msra.mxu0 0
        %1237 = vmatprep.subr.bf16.mxu0 0
        %1238 = vmatpush1.bf16.msra.mxu0 0
        %1239 = vmatprep.subr.bf16.mxu0 0
        %1240 = vmatpush1.bf16.msra.mxu0 0
        %1241 = vmatprep.subr.bf16.mxu0 0
        %1242 = vmatpush1.bf16.msra.mxu0 0
        %1243 = vmatprep.subr.bf16.mxu0 0
        %1244 = vmatpush1.bf16.msra.mxu0 0
        %1245 = vmatprep.subr.bf16.mxu0 0
        %1246 = vmatpush1.bf16.msra.mxu0 0
        %1247 = vmatprep.mubr.bf16.mxu0 0
        %1248 = vmatmul.mubr.bf16.gmra.mrb[0].mxu0 %v1210
        %v1249 = vpop.f32.mrb[0].mxu0
        %v1250 = vadd.f32 0.0, %v1249
        %v1251 = vpop.f32.mrb[0].mxu0
        %v1252 = vpop.f32.mrb[0].mxu0
        %v1253 = vpop.f32.mrb[0].mxu0
        %1254 = vdwg.mxu0
        %1255 = vrot.lane.b32.xlu0 %v627, 48
        %v1256 = vpop.permute.xlu0 %1255
        %v1258 = vsel %vm643, %v1206, 0
        %v1261 = vsel %vm767, %v1256, 0
        %1263 = vmatprep.subr.bf16.mxu0 0
        %1264 = vmatpush1.bf16.msra.mxu0 %v1261
        %1265 = vmatprep.subr.bf16.mxu0 0
        %1266 = vmatpush1.bf16.msra.mxu0 0
        %1267 = vmatprep.subr.bf16.mxu0 0
        %1268 = vmatpush1.bf16.msra.mxu0 0
        %1269 = vmatprep.subr.bf16.mxu0 0
        %1270 = vmatpush1.bf16.msra.mxu0 0
        %1271 = vmatprep.subr.bf16.mxu0 0
        %1272 = vmatpush1.bf16.msra.mxu0 0
        %1273 = vmatprep.subr.bf16.mxu0 0
        %1274 = vmatpush1.bf16.msra.mxu0 0
        %1275 = vmatprep.subr.bf16.mxu0 0
        %1276 = vmatpush1.bf16.msra.mxu0 0
        %1277 = vmatprep.subr.bf16.mxu0 0
        %1278 = vmatpush1.bf16.msra.mxu0 0
        %1279 = vmatprep.subr.bf16.mxu0 0
        %1280 = vmatpush1.bf16.msra.mxu0 0
        %1281 = vmatprep.subr.bf16.mxu0 0
        %1282 = vmatpush1.bf16.msra.mxu0 0
        %1283 = vmatprep.subr.bf16.mxu0 0
        %1284 = vmatpush1.bf16.msra.mxu0 0
        %1285 = vmatprep.subr.bf16.mxu0 0
        %1286 = vmatpush1.bf16.msra.mxu0 0
        %1287 = vmatprep.subr.bf16.mxu0 0
        %1288 = vmatpush1.bf16.msra.mxu0 0
        %1289 = vmatprep.subr.bf16.mxu0 0
        %1290 = vmatpush1.bf16.msra.mxu0 0
        %1291 = vmatprep.subr.bf16.mxu0 0
        %1292 = vmatpush1.bf16.msra.mxu0 0
        %1293 = vmatprep.subr.bf16.mxu0 0
        %1294 = vmatpush1.bf16.msra.mxu0 0
        %1295 = vmatprep.mubr.bf16.mxu0 0
        %1296 = vmatmul.mubr.bf16.gmra.mrb[0].mxu0 %v1258
        %v1297 = vpop.f32.mrb[0].mxu0
        %v1298 = vadd.f32 0.0, %v1297
        %v1299 = vpop.f32.mrb[0].mxu0
        %v1300 = vpop.f32.mrb[0].mxu0
        %v1301 = vpop.f32.mrb[0].mxu0
        %1302 = vdwg.mxu0
        %v1303 = vpack.c.bf16 %v1250, %v1250
        %v1304 = vpack.c.bf16 %v1298, %v1298
        %1305 = vrot.lane.b32.xlu0 %v626, 104
        %v1306 = vpop.permute.xlu0 %1305
        %1307 = vrot.lane.b32.xlu0 %v626, 72
        %v1308 = vpop.permute.xlu0 %1307
        %v1310 = vsel %vm643, %v1306, 0
        %v1313 = vsel %vm643, %v1308, 0
        %1315 = vmatprep.subr.bf16.mxu0 0
        %1316 = vmatpush1.bf16.xpose.msra.mxu0 %v1313
        %1317 = vmatprep.subr.bf16.mxu0 0
        %1318 = vmatpush1.bf16.xpose.msra.mxu0 0
        %1319 = vmatprep.subr.bf16.mxu0 0
        %1320 = vmatpush1.bf16.xpose.msra.mxu0 0
        %1321 = vmatprep.subr.bf16.mxu0 0
        %1322 = vmatpush1.bf16.xpose.msra.mxu0 0
        %1323 = vmatprep.subr.bf16.mxu0 0
        %1324 = vmatpush1.bf16.xpose.msra.mxu0 0
        %1325 = vmatprep.subr.bf16.mxu0 0
        %1326 = vmatpush1.bf16.xpose.msra.mxu0 0
        %1327 = vmatprep.subr.bf16.mxu0 0
        %1328 = vmatpush1.bf16.xpose.msra.mxu0 0
        %1329 = vmatprep.subr.bf16.mxu0 0
        %1330 = vmatpush1.bf16.xpose.msra.mxu0 0
        %1331 = vmatprep.subr.bf16.mxu0 0
        %1332 = vmatpush1.bf16.xpose.msra.mxu0 0
        %1333 = vmatprep.subr.bf16.mxu0 0
        %1334 = vmatpush1.bf16.xpose.msra.mxu0 0
        %1335 = vmatprep.subr.bf16.mxu0 0
        %1336 = vmatpush1.bf16.xpose.msra.mxu0 0
        %1337 = vmatprep.subr.bf16.mxu0 0
        %1338 = vmatpush1.bf16.xpose.msra.mxu0 0
        %1339 = vmatprep.subr.bf16.mxu0 0
        %1340 = vmatpush1.bf16.xpose.msra.mxu0 0
        %1341 = vmatprep.subr.bf16.mxu0 0
        %1342 = vmatpush1.bf16.xpose.msra.mxu0 0
        %1343 = vmatprep.subr.bf16.mxu0 0
        %1344 = vmatpush1.bf16.xpose.msra.mxu0 0
        %1345 = vmatprep.subr.bf16.mxu0 0
        %1346 = vmatpush1.bf16.xpose.msra.mxu0 0
        %1347 = vmatprep.mubr.bf16.mxu0 0
        %1348 = vmatmul.mubr.bf16.gmra.mrb[0].mxu0 %v1310
        %v1349 = vpop.f32.mrb[0].mxu0
        %v1350 = vadd.f32 %v634, %v1349
        %v1351 = vpop.f32.mrb[0].mxu0
        %v1352 = vpop.f32.mrb[0].mxu0
        %v1353 = vpop.f32.mrb[0].mxu0
        %1354 = vdwg.mxu0
        %1355 = vrot.lane.b32.xlu0 %v627, 104
        %v1356 = vpop.permute.xlu0 %1355
        %1357 = vrot.lane.b32.xlu0 %v627, 72
        %v1358 = vpop.permute.xlu0 %1357
        %v1360 = vsel %vm643, %v1356, 0
        %v1363 = vsel %vm643, %v1358, 0
        %1365 = vmatprep.subr.bf16.mxu0 0
        %1366 = vmatpush1.bf16.xpose.msra.mxu0 %v1363
        %1367 = vmatprep.subr.bf16.mxu0 0
        %1368 = vmatpush1.bf16.xpose.msra.mxu0 0
        %1369 = vmatprep.subr.bf16.mxu0 0
        %1370 = vmatpush1.bf16.xpose.msra.mxu0 0
        %1371 = vmatprep.subr.bf16.mxu0 0
        %1372 = vmatpush1.bf16.xpose.msra.mxu0 0
        %1373 = vmatprep.subr.bf16.mxu0 0
        %1374 = vmatpush1.bf16.xpose.msra.mxu0 0
        %1375 = vmatprep.subr.bf16.mxu0 0
        %1376 = vmatpush1.bf16.xpose.msra.mxu0 0
        %1377 = vmatprep.subr.bf16.mxu0 0
        %1378 = vmatpush1.bf16.xpose.msra.mxu0 0
        %1379 = vmatprep.subr.bf16.mxu0 0
        %1380 = vmatpush1.bf16.xpose.msra.mxu0 0
        %1381 = vmatprep.subr.bf16.mxu0 0
        %1382 = vmatpush1.bf16.xpose.msra.mxu0 0
        %1383 = vmatprep.subr.bf16.mxu0 0
        %1384 = vmatpush1.bf16.xpose.msra.mxu0 0
        %1385 = vmatprep.subr.bf16.mxu0 0
        %1386 = vmatpush1.bf16.xpose.msra.mxu0 0
        %1387 = vmatprep.subr.bf16.mxu0 0
        %1388 = vmatpush1.bf16.xpose.msra.mxu0 0
        %1389 = vmatprep.subr.bf16.mxu0 0
        %1390 = vmatpush1.bf16.xpose.msra.mxu0 0
        %1391 = vmatprep.subr.bf16.mxu0 0
        %1392 = vmatpush1.bf16.xpose.msra.mxu0 0
        %1393 = vmatprep.subr.bf16.mxu0 0
        %1394 = vmatpush1.bf16.xpose.msra.mxu0 0
        %1395 = vmatprep.subr.bf16.mxu0 0
        %1396 = vmatpush1.bf16.xpose.msra.mxu0 0
        %1397 = vmatprep.mubr.bf16.mxu0 0
        %1398 = vmatmul.mubr.bf16.gmra.mrb[0].mxu0 %v1360
        %v1399 = vpop.f32.mrb[0].mxu0
        %v1400 = vadd.f32 %v638, %v1399
        %v1401 = vpop.f32.mrb[0].mxu0
        %v1402 = vpop.f32.mrb[0].mxu0
        %v1403 = vpop.f32.mrb[0].mxu0
        %1404 = vdwg.mxu0
        %v1405 = vsel %vm643, %v1350, -inf
        %1406 = vmax.xlane.f32.xlu0 %v1405
        %v1407 = vpop.xlane.xlu0 %1406
        %v1408 = vsel %vm643, %v1400, -inf
        %1409 = vmax.xlane.f32.xlu0 %v1408
        %v1410 = vpop.xlane.xlu0 %1409
        %v1411 = vsub.f32 %v1350, %v1407
        %v1412 = vsub.f32 %v1400, %v1410
        %v1413 = vmul.f32 %v1411, 1.442695
        %v1414 = vpow.pop %v1413
        %v1415 = vmul.f32 %v1412, 1.442695
        %v1416 = vpow.pop %v1415
        %v1417 = vsel %vm643, %v1414, 0.0
        %1418 = vadd.xlane.f32.xlu0 %v1417
        %v1419 = vpop.xlane.xlu0 %1418
        %v1420 = vsel %vm643, %v1416, 0.0
        %1421 = vadd.xlane.f32.xlu0 %v1420
        %v1422 = vpop.xlane.xlu0 %1421
        %v1423 = vrcp.pop %v1419
        %v1424 = vrcp.pop %v1422
        %v1425 = vmul.f32 %v1414, %v1423
        %v1426 = vmul.f32 %v1416, %v1424
        %v1427 = vpack.c.bf16 %v1425, %v1425
        %v1428 = vpack.c.bf16 %v1426, %v1426
        %1429 = vrot.lane.b32.xlu0 %v626, 40
        %v1430 = vpop.permute.xlu0 %1429
        %v1432 = vsel %vm643, %v1427, 0
        %v1435 = vsel %vm767, %v1430, 0
        %1437 = vmatprep.subr.bf16.mxu0 0
        %1438 = vmatpush1.bf16.msra.mxu0 %v1435
        %1439 = vmatprep.subr.bf16.mxu0 0
        %1440 = vmatpush1.bf16.msra.mxu0 0
        %1441 = vmatprep.subr.bf16.mxu0 0
        %1442 = vmatpush1.bf16.msra.mxu0 0
        %1443 = vmatprep.subr.bf16.mxu0 0
        %1444 = vmatpush1.bf16.msra.mxu0 0
        %1445 = vmatprep.subr.bf16.mxu0 0
        %1446 = vmatpush1.bf16.msra.mxu0 0
        %1447 = vmatprep.subr.bf16.mxu0 0
        %1448 = vmatpush1.bf16.msra.mxu0 0
        %1449 = vmatprep.subr.bf16.mxu0 0
        %1450 = vmatpush1.bf16.msra.mxu0 0
        %1451 = vmatprep.subr.bf16.mxu0 0
        %1452 = vmatpush1.bf16.msra.mxu0 0
        %1453 = vmatprep.subr.bf16.mxu0 0
        %1454 = vmatpush1.bf16.msra.mxu0 0
        %1455 = vmatprep.subr.bf16.mxu0 0
        %1456 = vmatpush1.bf16.msra.mxu0 0
        %1457 = vmatprep.subr.bf16.mxu0 0
        %1458 = vmatpush1.bf16.msra.mxu0 0
        %1459 = vmatprep.subr.bf16.mxu0 0
        %1460 = vmatpush1.bf16.msra.mxu0 0
        %1461 = vmatprep.subr.bf16.mxu0 0
        %1462 = vmatpush1.bf16.msra.mxu0 0
        %1463 = vmatprep.subr.bf16.mxu0 0
        %1464 = vmatpush1.bf16.msra.mxu0 0
        %1465 = vmatprep.subr.bf16.mxu0 0
        %1466 = vmatpush1.bf16.msra.mxu0 0
        %1467 = vmatprep.subr.bf16.mxu0 0
        %1468 = vmatpush1.bf16.msra.mxu0 0
        %1469 = vmatprep.mubr.bf16.mxu0 0
        %1470 = vmatmul.mubr.bf16.gmra.mrb[0].mxu0 %v1432
        %v1471 = vpop.f32.mrb[0].mxu0
        %v1472 = vadd.f32 0.0, %v1471
        %v1473 = vpop.f32.mrb[0].mxu0
        %v1474 = vpop.f32.mrb[0].mxu0
        %v1475 = vpop.f32.mrb[0].mxu0
        %1476 = vdwg.mxu0
        %1477 = vrot.lane.b32.xlu0 %v627, 40
        %v1478 = vpop.permute.xlu0 %1477
        %v1480 = vsel %vm643, %v1428, 0
        %v1483 = vsel %vm767, %v1478, 0
        %1485 = vmatprep.subr.bf16.mxu0 0
        %1486 = vmatpush1.bf16.msra.mxu0 %v1483
        %1487 = vmatprep.subr.bf16.mxu0 0
        %1488 = vmatpush1.bf16.msra.mxu0 0
        %1489 = vmatprep.subr.bf16.mxu0 0
        %1490 = vmatpush1.bf16.msra.mxu0 0
        %1491 = vmatprep.subr.bf16.mxu0 0
        %1492 = vmatpush1.bf16.msra.mxu0 0
        %1493 = vmatprep.subr.bf16.mxu0 0
        %1494 = vmatpush1.bf16.msra.mxu0 0
        %1495 = vmatprep.subr.bf16.mxu0 0
        %1496 = vmatpush1.bf16.msra.mxu0 0
        %1497 = vmatprep.subr.bf16.mxu0 0
        %1498 = vmatpush1.bf16.msra.mxu0 0
        %1499 = vmatprep.subr.bf16.mxu0 0
        %1500 = vmatpush1.bf16.msra.mxu0 0
        %1501 = vmatprep.subr.bf16.mxu0 0
        %1502 = vmatpush1.bf16.msra.mxu0 0
        %1503 = vmatprep.subr.bf16.mxu0 0
        %1504 = vmatpush1.bf16.msra.mxu0 0
        %1505 = vmatprep.subr.bf16.mxu0 0
        %1506 = vmatpush1.bf16.msra.mxu0 0
        %1507 = vmatprep.subr.bf16.mxu0 0
        %1508 = vmatpush1.bf16.msra.mxu0 0
        %1509 = vmatprep.subr.bf16.mxu0 0
        %1510 = vmatpush1.bf16.msra.mxu0 0
        %1511 = vmatprep.subr.bf16.mxu0 0
        %1512 = vmatpush1.bf16.msra.mxu0 0
        %1513 = vmatprep.subr.bf16.mxu0 0
        %1514 = vmatpush1.bf16.msra.mxu0 0
        %1515 = vmatprep.subr.bf16.mxu0 0
        %1516 = vmatpush1.bf16.msra.mxu0 0
        %1517 = vmatprep.mubr.bf16.mxu0 0
        %1518 = vmatmul.mubr.bf16.gmra.mrb[0].mxu0 %v1480
        %v1519 = vpop.f32.mrb[0].mxu0
        %v1520 = vadd.f32 0.0, %v1519
        %v1521 = vpop.f32.mrb[0].mxu0
        %v1522 = vpop.f32.mrb[0].mxu0
        %v1523 = vpop.f32.mrb[0].mxu0
        %1524 = vdwg.mxu0
        %v1525 = vpack.c.bf16 %v1472, %v1472
        %v1526 = vpack.c.bf16 %v1520, %v1520
        %1529 = vrot.lane.b32.xlu0 %v1081, 8
        %v1530 = vpop.permute.xlu0 %1529
        %1531 = vrot.lane.b32.xlu0 %v1082, 8
        %v1532 = vpop.permute.xlu0 %1531
        %1535 = vrot.lane.b32.xlu0 %v1303, 16
        %v1536 = vpop.permute.xlu0 %1535
        %1537 = vrot.lane.b32.xlu0 %v1304, 16
        %v1538 = vpop.permute.xlu0 %1537
        %1541 = vrot.lane.b32.xlu0 %v1525, 24
        %v1542 = vpop.permute.xlu0 %1541
        %1543 = vrot.lane.b32.xlu0 %v1526, 24
        %v1544 = vpop.permute.xlu0 %1543
        %v1547 = vsel %vm643, %v859, %v1530
        %v1550 = vsel %vm643, %v860, %v1532
        %vm1551 = vcmask 130048
        %v1553 = vsel %vm1551, %v1547, %v1536
        %v1555 = vsel %vm1551, %v1550, %v1538
        %vm1556 = vcmask 195584
        %v1558 = vsel %vm1556, %v1553, %v1542
        %v1560 = vsel %vm1556, %v1555, %v1544
        %v1561 = vld [vmem:[%s520] sm:$0xf]
        %v1562 = vld [vmem:[%s520 + $0x4] sm:$0xf]
        %v1563 = vld [vmem:[%s520 + $0x8] sm:$0xf]
        %v1564 = vld [vmem:[%s520 + $0xc] sm:$0xf]
        %v1565 = vlaneseq
        %v1566 = vshrl.u32 %v1565, 7
        %v1567 = vsub.s32 0, %v1566
        %v1568 = vrot.slane %v628, %v1567
        %v1571 = vunpack.c.l.b16 %v1558
        %v1572 = vunpack.c.l.b16 %v1560
        %v1573 = vpack.c.b16 %v1572, %v1571
        %v1578 = vunpack.c.l.b16 %v1561
        %v1579 = vunpack.c.l.b16 %v1562
        %v1580 = vunpack.c.l.b16 %v1563
        %v1581 = vunpack.c.l.b16 %v1564
        %v1582 = vpack.c.b16 %v1579, %v1578
        %v1583 = vpack.c.b16 %v1581, %v1580
        %v1587 = vsel %vm577, %v1573, 0
        %1589 = vmatprep.subr.bf16.mxu0 0
        %1590 = vmatpush1.bf16.msra.mxu0 %v1582
        %1591 = vmatprep.subr.bf16.mxu0 0
        %1592 = vmatpush1.bf16.msra.mxu0 %v1583
        %1593 = vmatprep.subr.bf16.mxu0 0
        %1594 = vmatpush1.bf16.msra.mxu0 0
        %1595 = vmatprep.subr.bf16.mxu0 0
        %1596 = vmatpush1.bf16.msra.mxu0 0
        %1597 = vmatprep.subr.bf16.mxu0 0
        %1598 = vmatpush1.bf16.msra.mxu0 0
        %1599 = vmatprep.subr.bf16.mxu0 0
        %1600 = vmatpush1.bf16.msra.mxu0 0
        %1601 = vmatprep.subr.bf16.mxu0 0
        %1602 = vmatpush1.bf16.msra.mxu0 0
        %1603 = vmatprep.subr.bf16.mxu0 0
        %1604 = vmatpush1.bf16.msra.mxu0 0
        %1605 = vmatprep.subr.bf16.mxu0 0
        %1606 = vmatpush1.bf16.msra.mxu0 0
        %1607 = vmatprep.subr.bf16.mxu0 0
        %1608 = vmatpush1.bf16.msra.mxu0 0
        %1609 = vmatprep.subr.bf16.mxu0 0
        %1610 = vmatpush1.bf16.msra.mxu0 0
        %1611 = vmatprep.subr.bf16.mxu0 0
        %1612 = vmatpush1.bf16.msra.mxu0 0
        %1613 = vmatprep.subr.bf16.mxu0 0
        %1614 = vmatpush1.bf16.msra.mxu0 0
        %1615 = vmatprep.subr.bf16.mxu0 0
        %1616 = vmatpush1.bf16.msra.mxu0 0
        %1617 = vmatprep.subr.bf16.mxu0 0
        %1618 = vmatpush1.bf16.msra.mxu0 0
        %1619 = vmatprep.subr.bf16.mxu0 0
        %1620 = vmatpush1.bf16.msra.mxu0 0
        %1621 = vmatprep.mubr.bf16.mxu0 0
        %1622 = vmatmul.mubr.bf16.gmra.mrb[0].mxu0 %v1587
        %v1623 = vpop.f32.mrb[0].mxu0
        %v1624 = vadd.f32 %v1568, %v1623
        %v1625 = vpop.f32.mrb[0].mxu0
        %v1626 = vpop.f32.mrb[0].mxu0
        %v1627 = vadd.f32 %v1568, %v1626
        %v1628 = vpop.f32.mrb[0].mxu0
        %1629 = vdwg.mxu0
        %v1630 = vadd.f32 %v549, %v1624
        %v1631 = vadd.f32 %v550, %v1627
        %v1632 = vsel %vm577, %v1630, 0.0
        %1633 = vadd.xlane.f32.xlu0 %v1632
        %v1634 = vpop.xlane.xlu0 %1633
        %v1635 = vsel %vm577, %v1631, 0.0
        %1636 = vadd.xlane.f32.xlu0 %v1635
        %v1637 = vpop.xlane.xlu0 %1636
        %v1638 = vrcp.pop 32.0
        %v1639 = vmul.f32 %v1634, %v1638
        %v1640 = vmul.f32 %v1637, %v1638
        %v1641 = vsub.f32 %v1630, %v1639
        %v1642 = vsub.f32 %v1631, %v1640
        %v1643 = vmul.f32 %v1641, %v1641
        %v1644 = vmul.f32 %v1642, %v1642
        %v1645 = vsel %vm577, %v1643, 0.0
        %1646 = vadd.xlane.f32.xlu0 %v1645
        %v1647 = vpop.xlane.xlu0 %1646
        %v1648 = vsel %vm577, %v1644, 0.0
        %1649 = vadd.xlane.f32.xlu0 %v1648
        %v1650 = vpop.xlane.xlu0 %1649
        %v1651 = vmul.f32 %v1647, %v1638
        %v1652 = vmul.f32 %v1650, %v1638
        %v1653 = vadd.f32 %v1651, 1e-05
        %v1654 = vadd.f32 %v1652, 1e-05
        %v1655 = vrsqrt.pop %v1653
        %v1656 = vrsqrt.pop %v1654
        %v1657 = vmul.f32 %v1641, %v1655
        %v1658 = vmul.f32 %v1642, %v1656
        %v1659 = vlaneseq
        %v1660 = vshrl.u32 %v1659, 7
        %v1661 = vsub.s32 1, %v1660
        %v1662 = vrot.slane %v628, %v1661
        %v1663 = vmul.f32 %v1657, %v1662
        %v1664 = vmul.f32 %v1658, %v1662
        %v1665 = vlaneseq
        %v1666 = vshrl.u32 %v1665, 7
        %v1667 = vsub.s32 2, %v1666
        %v1668 = vrot.slane %v628, %v1667
        %v1669 = vadd.f32 %v1663, %v1668
        %v1670 = vadd.f32 %v1664, %v1668
        %v1671 = vpack.c.bf16 %v1670, %v1669
        %v1672 = vld [vmem:[%s525] sm:$0xff]
        %v1673 = vld [vmem:[%s525 + $0x8] sm:$0xff]
        %v1674 = vld [vmem:[%s525 + $0x10] sm:$0xff]
        %v1675 = vld [vmem:[%s525 + $0x18] sm:$0xff]
        %v1676 = vld [vmem:[%s525 + $0x20] sm:$0xff]
        %v1677 = vld [vmem:[%s525 + $0x28] sm:$0xff]
        %v1678 = vld [vmem:[%s525 + $0x30] sm:$0xff]
        %v1679 = vld [vmem:[%s525 + $0x38] sm:$0xff]
        %v1680 = vld [vmem:[%s525 + $0x40] sm:$0xff]
        %v1681 = vld [vmem:[%s525 + $0x48] sm:$0xff]
        %v1682 = vld [vmem:[%s525 + $0x50] sm:$0xff]
        %v1683 = vld [vmem:[%s525 + $0x58] sm:$0xff]
        %v1684 = vld [vmem:[%s525 + $0x60] sm:$0xff]
        %v1685 = vld [vmem:[%s525 + $0x68] sm:$0xff]
        %v1686 = vld [vmem:[%s525 + $0x70] sm:$0xff]
        %v1687 = vld [vmem:[%s525 + $0x78] sm:$0xff]
        %v1688 = vld [vmem:[%s525 + $0x80] sm:$0xff]
        %v1689 = vld [vmem:[%s525 + $0x88] sm:$0xff]
        %v1690 = vld [vmem:[%s525 + $0x90] sm:$0xff]
        %v1691 = vld [vmem:[%s525 + $0x98] sm:$0xff]
        %v1692 = vld [vmem:[%s525 + $0xa0] sm:$0xff]
        %v1693 = vld [vmem:[%s525 + $0xa8] sm:$0xff]
        %v1694 = vld [vmem:[%s525 + $0xb0] sm:$0xff]
        %v1695 = vld [vmem:[%s525 + $0xb8] sm:$0xff]
        %v1696 = vld [vmem:[%s525 + $0xc0] sm:$0xff]
        %v1697 = vld [vmem:[%s525 + $0xc8] sm:$0xff]
        %v1698 = vld [vmem:[%s525 + $0xd0] sm:$0xff]
        %v1699 = vld [vmem:[%s525 + $0xd8] sm:$0xff]
        %v1700 = vld [vmem:[%s525 + $0xe0] sm:$0xff]
        %v1701 = vld [vmem:[%s525 + $0xe8] sm:$0xff]
        %v1702 = vld [vmem:[%s525 + $0xf0] sm:$0xff]
        %v1703 = vld [vmem:[%s525 + $0xf8] sm:$0xff]
        %v1704 = vld [vmem:[%s529] sm:$0xff]
        %v1705 = vld [vmem:[%s529 + $0x8] sm:$0xff]
        %v1708 = vlaneseq
        %v1709 = vshrl.u32 %v1708, 7
        %v1710 = vsub.s32 0, %v1709
        %v1711 = vrot.slane %v1704, %v1710
        %v1712 = vlaneseq
        %v1713 = vshrl.u32 %v1712, 7
        %v1714 = vsub.s32 1, %v1713
        %v1715 = vrot.slane %v1704, %v1714
        %v1716 = vlaneseq
        %v1717 = vshrl.u32 %v1716, 7
        %v1718 = vsub.s32 2, %v1717
        %v1719 = vrot.slane %v1704, %v1718
        %v1720 = vlaneseq
        %v1721 = vshrl.u32 %v1720, 7
        %v1722 = vsub.s32 3, %v1721
        %v1723 = vrot.slane %v1704, %v1722
        %v1724 = vlaneseq
        %v1725 = vshrl.u32 %v1724, 7
        %v1726 = vsub.s32 4, %v1725
        %v1727 = vrot.slane %v1704, %v1726
        %v1728 = vlaneseq
        %v1729 = vshrl.u32 %v1728, 7
        %v1730 = vsub.s32 5, %v1729
        %v1731 = vrot.slane %v1704, %v1730
        %v1732 = vlaneseq
        %v1733 = vshrl.u32 %v1732, 7
        %v1734 = vsub.s32 6, %v1733
        %v1735 = vrot.slane %v1704, %v1734
        %v1736 = vlaneseq
        %v1737 = vshrl.u32 %v1736, 7
        %v1738 = vsub.s32 7, %v1737
        %v1739 = vrot.slane %v1704, %v1738
        %v1740 = vlaneseq
        %v1741 = vshrl.u32 %v1740, 7
        %v1742 = vsub.s32 0, %v1741
        %v1743 = vrot.slane %v1705, %v1742
        %v1744 = vlaneseq
        %v1745 = vshrl.u32 %v1744, 7
        %v1746 = vsub.s32 1, %v1745
        %v1747 = vrot.slane %v1705, %v1746
        %v1748 = vlaneseq
        %v1749 = vshrl.u32 %v1748, 7
        %v1750 = vsub.s32 2, %v1749
        %v1751 = vrot.slane %v1705, %v1750
        %v1752 = vlaneseq
        %v1753 = vshrl.u32 %v1752, 7
        %v1754 = vsub.s32 3, %v1753
        %v1755 = vrot.slane %v1705, %v1754
        %v1756 = vlaneseq
        %v1757 = vshrl.u32 %v1756, 7
        %v1758 = vsub.s32 4, %v1757
        %v1759 = vrot.slane %v1705, %v1758
        %v1760 = vlaneseq
        %v1761 = vshrl.u32 %v1760, 7
        %v1762 = vsub.s32 5, %v1761
        %v1763 = vrot.slane %v1705, %v1762
        %v1764 = vlaneseq
        %v1765 = vshrl.u32 %v1764, 7
        %v1766 = vsub.s32 6, %v1765
        %v1767 = vrot.slane %v1705, %v1766
        %v1768 = vlaneseq
        %v1769 = vshrl.u32 %v1768, 7
        %v1770 = vsub.s32 7, %v1769
        %v1771 = vrot.slane %v1705, %v1770
        %v1820 = vunpack.c.l.b16 %v1672
        %v1821 = vunpack.c.h.b16 %v1672
        %v1822 = vunpack.c.l.b16 %v1673
        %v1823 = vunpack.c.h.b16 %v1673
        %v1824 = vunpack.c.l.b16 %v1674
        %v1825 = vunpack.c.h.b16 %v1674
        %v1826 = vunpack.c.l.b16 %v1675
        %v1827 = vunpack.c.h.b16 %v1675
        %v1828 = vunpack.c.l.b16 %v1676
        %v1829 = vunpack.c.h.b16 %v1676
        %v1830 = vunpack.c.l.b16 %v1677
        %v1831 = vunpack.c.h.b16 %v1677
        %v1832 = vunpack.c.l.b16 %v1678
        %v1833 = vunpack.c.h.b16 %v1678
        %v1834 = vunpack.c.l.b16 %v1679
        %v1835 = vunpack.c.h.b16 %v1679
        %v1836 = vunpack.c.l.b16 %v1680
        %v1837 = vunpack.c.h.b16 %v1680
        %v1838 = vunpack.c.l.b16 %v1681
        %v1839 = vunpack.c.h.b16 %v1681
        %v1840 = vunpack.c.l.b16 %v1682
        %v1841 = vunpack.c.h.b16 %v1682
        %v1842 = vunpack.c.l.b16 %v1683
        %v1843 = vunpack.c.h.b16 %v1683
        %v1844 = vunpack.c.l.b16 %v1684
        %v1845 = vunpack.c.h.b16 %v1684
        %v1846 = vunpack.c.l.b16 %v1685
        %v1847 = vunpack.c.h.b16 %v1685
        %v1848 = vunpack.c.l.b16 %v1686
        %v1849 = vunpack.c.h.b16 %v1686
        %v1850 = vunpack.c.l.b16 %v1687
        %v1851 = vunpack.c.h.b16 %v1687
        %v1852 = vunpack.c.l.b16 %v1688
        %v1853 = vunpack.c.h.b16 %v1688
        %v1854 = vunpack.c.l.b16 %v1689
        %v1855 = vunpack.c.h.b16 %v1689
        %v1856 = vunpack.c.l.b16 %v1690
        %v1857 = vunpack.c.h.b16 %v1690
        %v1858 = vunpack.c.l.b16 %v1691
        %v1859 = vunpack.c.h.b16 %v1691
        %v1860 = vunpack.c.l.b16 %v1692
        %v1861 = vunpack.c.h.b16 %v1692
        %v1862 = vunpack.c.l.b16 %v1693
        %v1863 = vunpack.c.h.b16 %v1693
        %v1864 = vunpack.c.l.b16 %v1694
        %v1865 = vunpack.c.h.b16 %v1694
        %v1866 = vunpack.c.l.b16 %v1695
        %v1867 = vunpack.c.h.b16 %v1695
        %v1868 = vunpack.c.l.b16 %v1696
        %v1869 = vunpack.c.h.b16 %v1696
        %v1870 = vunpack.c.l.b16 %v1697
        %v1871 = vunpack.c.h.b16 %v1697
        %v1872 = vunpack.c.l.b16 %v1698
        %v1873 = vunpack.c.h.b16 %v1698
        %v1874 = vunpack.c.l.b16 %v1699
        %v1875 = vunpack.c.h.b16 %v1699
        %v1876 = vunpack.c.l.b16 %v1700
        %v1877 = vunpack.c.h.b16 %v1700
        %v1878 = vunpack.c.l.b16 %v1701
        %v1879 = vunpack.c.h.b16 %v1701
        %v1880 = vunpack.c.l.b16 %v1702
        %v1881 = vunpack.c.h.b16 %v1702
        %v1882 = vunpack.c.l.b16 %v1703
        %v1883 = vunpack.c.h.b16 %v1703
        %v1884 = vpack.c.b16 %v1836, %v1820
        %v1885 = vpack.c.b16 %v1837, %v1821
        %v1886 = vpack.c.b16 %v1838, %v1822
        %v1887 = vpack.c.b16 %v1839, %v1823
        %v1888 = vpack.c.b16 %v1840, %v1824
        %v1889 = vpack.c.b16 %v1841, %v1825
        %v1890 = vpack.c.b16 %v1842, %v1826
        %v1891 = vpack.c.b16 %v1843, %v1827
        %v1892 = vpack.c.b16 %v1844, %v1828
        %v1893 = vpack.c.b16 %v1845, %v1829
        %v1894 = vpack.c.b16 %v1846, %v1830
        %v1895 = vpack.c.b16 %v1847, %v1831
        %v1896 = vpack.c.b16 %v1848, %v1832
        %v1897 = vpack.c.b16 %v1849, %v1833
        %v1898 = vpack.c.b16 %v1850, %v1834
        %v1899 = vpack.c.b16 %v1851, %v1835
        %v1900 = vpack.c.b16 %v1868, %v1852
        %v1901 = vpack.c.b16 %v1869, %v1853
        %v1902 = vpack.c.b16 %v1870, %v1854
        %v1903 = vpack.c.b16 %v1871, %v1855
        %v1904 = vpack.c.b16 %v1872, %v1856
        %v1905 = vpack.c.b16 %v1873, %v1857
        %v1906 = vpack.c.b16 %v1874, %v1858
        %v1907 = vpack.c.b16 %v1875, %v1859
        %v1908 = vpack.c.b16 %v1876, %v1860
        %v1909 = vpack.c.b16 %v1877, %v1861
        %v1910 = vpack.c.b16 %v1878, %v1862
        %v1911 = vpack.c.b16 %v1879, %v1863
        %v1912 = vpack.c.b16 %v1880, %v1864
        %v1913 = vpack.c.b16 %v1881, %v1865
        %v1914 = vpack.c.b16 %v1882, %v1866
        %v1915 = vpack.c.b16 %v1883, %v1867
        %v1949 = vsel %vm577, %v1671, 0
        %1951 = vmatprep.subr.bf16.mxu0 %v1885
        %1952 = vmatpush1.bf16.msra.mxu0 %v1884
        %1953 = vmatprep.subr.bf16.mxu0 %v1901
        %1954 = vmatpush1.bf16.msra.mxu0 %v1900
        %1955 = vmatprep.subr.bf16.mxu0 0
        %1956 = vmatpush1.bf16.msra.mxu0 0
        %1957 = vmatprep.subr.bf16.mxu0 0
        %1958 = vmatpush1.bf16.msra.mxu0 0
        %1959 = vmatprep.subr.bf16.mxu0 0
        %1960 = vmatpush1.bf16.msra.mxu0 0
        %1961 = vmatprep.subr.bf16.mxu0 0
        %1962 = vmatpush1.bf16.msra.mxu0 0
        %1963 = vmatprep.subr.bf16.mxu0 0
        %1964 = vmatpush1.bf16.msra.mxu0 0
        %1965 = vmatprep.subr.bf16.mxu0 0
        %1966 = vmatpush1.bf16.msra.mxu0 0
        %1967 = vmatprep.subr.bf16.mxu0 0
        %1968 = vmatpush1.bf16.msra.mxu0 0
        %1969 = vmatprep.subr.bf16.mxu0 0
        %1970 = vmatpush1.bf16.msra.mxu0 0
        %1971 = vmatprep.subr.bf16.mxu0 0
        %1972 = vmatpush1.bf16.msra.mxu0 0
        %1973 = vmatprep.subr.bf16.mxu0 0
        %1974 = vmatpush1.bf16.msra.mxu0 0
        %1975 = vmatprep.subr.bf16.mxu0 0
        %1976 = vmatpush1.bf16.msra.mxu0 0
        %1977 = vmatprep.subr.bf16.mxu0 0
        %1978 = vmatpush1.bf16.msra.mxu0 0
        %1979 = vmatprep.subr.bf16.mxu0 0
        %1980 = vmatpush1.bf16.msra.mxu0 0
        %1981 = vmatprep.subr.bf16.mxu0 0
        %1982 = vmatpush1.bf16.msra.mxu0 0
        %1983 = vmatprep.mubr.bf16.mxu0 0
        %1984 = vmatmul.mubr.bf16.gmra.mrb[0].mxu0 %v1949
        %v1985 = vpop.f32.mrb[0].mxu0
        %v1986 = vadd.f32 %v1711, %v1985
        %v1987 = vpop.f32.mrb[0].mxu0
        %v1988 = vadd.f32 %v1715, %v1987
        %v1989 = vpop.f32.mrb[0].mxu0
        %v1990 = vadd.f32 %v1711, %v1989
        %v1991 = vpop.f32.mrb[0].mxu0
        %v1992 = vadd.f32 %v1715, %v1991
        %1993 = vdwg.mxu0
        %1994 = vmatprep.subr.bf16.mxu0 %v1887
        %1995 = vmatpush1.bf16.msra.mxu0 %v1886
        %1996 = vmatprep.subr.bf16.mxu0 %v1903
        %1997 = vmatpush1.bf16.msra.mxu0 %v1902
        %1998 = vmatprep.subr.bf16.mxu0 0
        %1999 = vmatpush1.bf16.msra.mxu0 0
        %2000 = vmatprep.subr.bf16.mxu0 0
        %2001 = vmatpush1.bf16.msra.mxu0 0
        %2002 = vmatprep.subr.bf16.mxu0 0
        %2003 = vmatpush1.bf16.msra.mxu0 0
        %2004 = vmatprep.subr.bf16.mxu0 0
        %2005 = vmatpush1.bf16.msra.mxu0 0
        %2006 = vmatprep.subr.bf16.mxu0 0
        %2007 = vmatpush1.bf16.msra.mxu0 0
        %2008 = vmatprep.subr.bf16.mxu0 0
        %2009 = vmatpush1.bf16.msra.mxu0 0
        %2010 = vmatprep.subr.bf16.mxu0 0
        %2011 = vmatpush1.bf16.msra.mxu0 0
        %2012 = vmatprep.subr.bf16.mxu0 0
        %2013 = vmatpush1.bf16.msra.mxu0 0
        %2014 = vmatprep.subr.bf16.mxu0 0
        %2015 = vmatpush1.bf16.msra.mxu0 0
        %2016 = vmatprep.subr.bf16.mxu0 0
        %2017 = vmatpush1.bf16.msra.mxu0 0
        %2018 = vmatprep.subr.bf16.mxu0 0
        %2019 = vmatpush1.bf16.msra.mxu0 0
        %2020 = vmatprep.subr.bf16.mxu0 0
        %2021 = vmatpush1.bf16.msra.mxu0 0
        %2022 = vmatprep.subr.bf16.mxu0 0
        %2023 = vmatpush1.bf16.msra.mxu0 0
        %2024 = vmatprep.subr.bf16.mxu0 0
        %2025 = vmatpush1.bf16.msra.mxu0 0
        %2026 = vmatprep.mubr.bf16.mxu0 0
        %2027 = vmatmul.mubr.bf16.gmra.mrb[0].mxu0 %v1949
        %v2028 = vpop.f32.mrb[0].mxu0
        %v2029 = vadd.f32 %v1719, %v2028
        %v2030 = vpop.f32.mrb[0].mxu0
        %v2031 = vadd.f32 %v1723, %v2030
        %v2032 = vpop.f32.mrb[0].mxu0
        %v2033 = vadd.f32 %v1719, %v2032
        %v2034 = vpop.f32.mrb[0].mxu0
        %v2035 = vadd.f32 %v1723, %v2034
        %2036 = vdwg.mxu0
        %2037 = vmatprep.subr.bf16.mxu0 %v1889
        %2038 = vmatpush1.bf16.msra.mxu0 %v1888
        %2039 = vmatprep.subr.bf16.mxu0 %v1905
        %2040 = vmatpush1.bf16.msra.mxu0 %v1904
        %2041 = vmatprep.subr.bf16.mxu0 0
        %2042 = vmatpush1.bf16.msra.mxu0 0
        %2043 = vmatprep.subr.bf16.mxu0 0
        %2044 = vmatpush1.bf16.msra.mxu0 0
        %2045 = vmatprep.subr.bf16.mxu0 0
        %2046 = vmatpush1.bf16.msra.mxu0 0
        %2047 = vmatprep.subr.bf16.mxu0 0
        %2048 = vmatpush1.bf16.msra.mxu0 0
        %2049 = vmatprep.subr.bf16.mxu0 0
        %2050 = vmatpush1.bf16.msra.mxu0 0
        %2051 = vmatprep.subr.bf16.mxu0 0
        %2052 = vmatpush1.bf16.msra.mxu0 0
        %2053 = vmatprep.subr.bf16.mxu0 0
        %2054 = vmatpush1.bf16.msra.mxu0 0
        %2055 = vmatprep.subr.bf16.mxu0 0
        %2056 = vmatpush1.bf16.msra.mxu0 0
        %2057 = vmatprep.subr.bf16.mxu0 0
        %2058 = vmatpush1.bf16.msra.mxu0 0
        %2059 = vmatprep.subr.bf16.mxu0 0
        %2060 = vmatpush1.bf16.msra.mxu0 0
        %2061 = vmatprep.subr.bf16.mxu0 0
        %2062 = vmatpush1.bf16.msra.mxu0 0
        %2063 = vmatprep.subr.bf16.mxu0 0
        %2064 = vmatpush1.bf16.msra.mxu0 0
        %2065 = vmatprep.subr.bf16.mxu0 0
        %2066 = vmatpush1.bf16.msra.mxu0 0
        %2067 = vmatprep.subr.bf16.mxu0 0
        %2068 = vmatpush1.bf16.msra.mxu0 0
        %2069 = vmatprep.mubr.bf16.mxu0 0
        %2070 = vmatmul.mubr.bf16.gmra.mrb[0].mxu0 %v1949
        %v2071 = vpop.f32.mrb[0].mxu0
        %v2072 = vadd.f32 %v1727, %v2071
        %v2073 = vpop.f32.mrb[0].mxu0
        %v2074 = vadd.f32 %v1731, %v2073
        %v2075 = vpop.f32.mrb[0].mxu0
        %v2076 = vadd.f32 %v1727, %v2075
        %v2077 = vpop.f32.mrb[0].mxu0
        %v2078 = vadd.f32 %v1731, %v2077
        %2079 = vdwg.mxu0
        %2080 = vmatprep.subr.bf16.mxu0 %v1891
        %2081 = vmatpush1.bf16.msra.mxu0 %v1890
        %2082 = vmatprep.subr.bf16.mxu0 %v1907
        %2083 = vmatpush1.bf16.msra.mxu0 %v1906
        %2084 = vmatprep.subr.bf16.mxu0 0
        %2085 = vmatpush1.bf16.msra.mxu0 0
        %2086 = vmatprep.subr.bf16.mxu0 0
        %2087 = vmatpush1.bf16.msra.mxu0 0
        %2088 = vmatprep.subr.bf16.mxu0 0
        %2089 = vmatpush1.bf16.msra.mxu0 0
        %2090 = vmatprep.subr.bf16.mxu0 0
        %2091 = vmatpush1.bf16.msra.mxu0 0
        %2092 = vmatprep.subr.bf16.mxu0 0
        %2093 = vmatpush1.bf16.msra.mxu0 0
        %2094 = vmatprep.subr.bf16.mxu0 0
        %2095 = vmatpush1.bf16.msra.mxu0 0
        %2096 = vmatprep.subr.bf16.mxu0 0
        %2097 = vmatpush1.bf16.msra.mxu0 0
        %2098 = vmatprep.subr.bf16.mxu0 0
        %2099 = vmatpush1.bf16.msra.mxu0 0
        %2100 = vmatprep.subr.bf16.mxu0 0
        %2101 = vmatpush1.bf16.msra.mxu0 0
        %2102 = vmatprep.subr.bf16.mxu0 0
        %2103 = vmatpush1.bf16.msra.mxu0 0
        %2104 = vmatprep.subr.bf16.mxu0 0
        %2105 = vmatpush1.bf16.msra.mxu0 0
        %2106 = vmatprep.subr.bf16.mxu0 0
        %2107 = vmatpush1.bf16.msra.mxu0 0
        %2108 = vmatprep.subr.bf16.mxu0 0
        %2109 = vmatpush1.bf16.msra.mxu0 0
        %2110 = vmatprep.subr.bf16.mxu0 0
        %2111 = vmatpush1.bf16.msra.mxu0 0
        %2112 = vmatprep.mubr.bf16.mxu0 0
        %2113 = vmatmul.mubr.bf16.gmra.mrb[0].mxu0 %v1949
        %v2114 = vpop.f32.mrb[0].mxu0
        %v2115 = vadd.f32 %v1735, %v2114
        %v2116 = vpop.f32.mrb[0].mxu0
        %v2117 = vadd.f32 %v1739, %v2116
        %v2118 = vpop.f32.mrb[0].mxu0
        %v2119 = vadd.f32 %v1735, %v2118
        %v2120 = vpop.f32.mrb[0].mxu0
        %v2121 = vadd.f32 %v1739, %v2120
        %2122 = vdwg.mxu0
        %2123 = vmatprep.subr.bf16.mxu0 %v1893
        %2124 = vmatpush1.bf16.msra.mxu0 %v1892
        %2125 = vmatprep.subr.bf16.mxu0 %v1909
        %2126 = vmatpush1.bf16.msra.mxu0 %v1908
        %2127 = vmatprep.subr.bf16.mxu0 0
        %2128 = vmatpush1.bf16.msra.mxu0 0
        %2129 = vmatprep.subr.bf16.mxu0 0
        %2130 = vmatpush1.bf16.msra.mxu0 0
        %2131 = vmatprep.subr.bf16.mxu0 0
        %2132 = vmatpush1.bf16.msra.mxu0 0
        %2133 = vmatprep.subr.bf16.mxu0 0
        %2134 = vmatpush1.bf16.msra.mxu0 0
        %2135 = vmatprep.subr.bf16.mxu0 0
        %2136 = vmatpush1.bf16.msra.mxu0 0
        %2137 = vmatprep.subr.bf16.mxu0 0
        %2138 = vmatpush1.bf16.msra.mxu0 0
        %2139 = vmatprep.subr.bf16.mxu0 0
        %2140 = vmatpush1.bf16.msra.mxu0 0
        %2141 = vmatprep.subr.bf16.mxu0 0
        %2142 = vmatpush1.bf16.msra.mxu0 0
        %2143 = vmatprep.subr.bf16.mxu0 0
        %2144 = vmatpush1.bf16.msra.mxu0 0
        %2145 = vmatprep.subr.bf16.mxu0 0
        %2146 = vmatpush1.bf16.msra.mxu0 0
        %2147 = vmatprep.subr.bf16.mxu0 0
        %2148 = vmatpush1.bf16.msra.mxu0 0
        %2149 = vmatprep.subr.bf16.mxu0 0
        %2150 = vmatpush1.bf16.msra.mxu0 0
        %2151 = vmatprep.subr.bf16.mxu0 0
        %2152 = vmatpush1.bf16.msra.mxu0 0
        %2153 = vmatprep.subr.bf16.mxu0 0
        %2154 = vmatpush1.bf16.msra.mxu0 0
        %2155 = vmatprep.mubr.bf16.mxu0 0
        %2156 = vmatmul.mubr.bf16.gmra.mrb[0].mxu0 %v1949
        %v2157 = vpop.f32.mrb[0].mxu0
        %v2158 = vadd.f32 %v1743, %v2157
        %v2159 = vpop.f32.mrb[0].mxu0
        %v2160 = vadd.f32 %v1747, %v2159
        %v2161 = vpop.f32.mrb[0].mxu0
        %v2162 = vadd.f32 %v1743, %v2161
        %v2163 = vpop.f32.mrb[0].mxu0
        %v2164 = vadd.f32 %v1747, %v2163
        %2165 = vdwg.mxu0
        %2166 = vmatprep.subr.bf16.mxu0 %v1895
        %2167 = vmatpush1.bf16.msra.mxu0 %v1894
        %2168 = vmatprep.subr.bf16.mxu0 %v1911
        %2169 = vmatpush1.bf16.msra.mxu0 %v1910
        %2170 = vmatprep.subr.bf16.mxu0 0
        %2171 = vmatpush1.bf16.msra.mxu0 0
        %2172 = vmatprep.subr.bf16.mxu0 0
        %2173 = vmatpush1.bf16.msra.mxu0 0
        %2174 = vmatprep.subr.bf16.mxu0 0
        %2175 = vmatpush1.bf16.msra.mxu0 0
        %2176 = vmatprep.subr.bf16.mxu0 0
        %2177 = vmatpush1.bf16.msra.mxu0 0
        %2178 = vmatprep.subr.bf16.mxu0 0
        %2179 = vmatpush1.bf16.msra.mxu0 0
        %2180 = vmatprep.subr.bf16.mxu0 0
        %2181 = vmatpush1.bf16.msra.mxu0 0
        %2182 = vmatprep.subr.bf16.mxu0 0
        %2183 = vmatpush1.bf16.msra.mxu0 0
        %2184 = vmatprep.subr.bf16.mxu0 0
        %2185 = vmatpush1.bf16.msra.mxu0 0
        %2186 = vmatprep.subr.bf16.mxu0 0
        %2187 = vmatpush1.bf16.msra.mxu0 0
        %2188 = vmatprep.subr.bf16.mxu0 0
        %2189 = vmatpush1.bf16.msra.mxu0 0
        %2190 = vmatprep.subr.bf16.mxu0 0
        %2191 = vmatpush1.bf16.msra.mxu0 0
        %2192 = vmatprep.subr.bf16.mxu0 0
        %2193 = vmatpush1.bf16.msra.mxu0 0
        %2194 = vmatprep.subr.bf16.mxu0 0
        %2195 = vmatpush1.bf16.msra.mxu0 0
        %2196 = vmatprep.subr.bf16.mxu0 0
        %2197 = vmatpush1.bf16.msra.mxu0 0
        %2198 = vmatprep.mubr.bf16.mxu0 0
        %2199 = vmatmul.mubr.bf16.gmra.mrb[0].mxu0 %v1949
        %v2200 = vpop.f32.mrb[0].mxu0
        %v2201 = vadd.f32 %v1751, %v2200
        %v2202 = vpop.f32.mrb[0].mxu0
        %v2203 = vadd.f32 %v1755, %v2202
        %v2204 = vpop.f32.mrb[0].mxu0
        %v2205 = vadd.f32 %v1751, %v2204
        %v2206 = vpop.f32.mrb[0].mxu0
        %v2207 = vadd.f32 %v1755, %v2206
        %2208 = vdwg.mxu0
        %2209 = vmatprep.subr.bf16.mxu0 %v1897
        %2210 = vmatpush1.bf16.msra.mxu0 %v1896
        %2211 = vmatprep.subr.bf16.mxu0 %v1913
        %2212 = vmatpush1.bf16.msra.mxu0 %v1912
        %2213 = vmatprep.subr.bf16.mxu0 0
        %2214 = vmatpush1.bf16.msra.mxu0 0
        %2215 = vmatprep.subr.bf16.mxu0 0
        %2216 = vmatpush1.bf16.msra.mxu0 0
        %2217 = vmatprep.subr.bf16.mxu0 0
        %2218 = vmatpush1.bf16.msra.mxu0 0
        %2219 = vmatprep.subr.bf16.mxu0 0
        %2220 = vmatpush1.bf16.msra.mxu0 0
        %2221 = vmatprep.subr.bf16.mxu0 0
        %2222 = vmatpush1.bf16.msra.mxu0 0
        %2223 = vmatprep.subr.bf16.mxu0 0
        %2224 = vmatpush1.bf16.msra.mxu0 0
        %2225 = vmatprep.subr.bf16.mxu0 0
        %2226 = vmatpush1.bf16.msra.mxu0 0
        %2227 = vmatprep.subr.bf16.mxu0 0
        %2228 = vmatpush1.bf16.msra.mxu0 0
        %2229 = vmatprep.subr.bf16.mxu0 0
        %2230 = vmatpush1.bf16.msra.mxu0 0
        %2231 = vmatprep.subr.bf16.mxu0 0
        %2232 = vmatpush1.bf16.msra.mxu0 0
        %2233 = vmatprep.subr.bf16.mxu0 0
        %2234 = vmatpush1.bf16.msra.mxu0 0
        %2235 = vmatprep.subr.bf16.mxu0 0
        %2236 = vmatpush1.bf16.msra.mxu0 0
        %2237 = vmatprep.subr.bf16.mxu0 0
        %2238 = vmatpush1.bf16.msra.mxu0 0
        %2239 = vmatprep.subr.bf16.mxu0 0
        %2240 = vmatpush1.bf16.msra.mxu0 0
        %2241 = vmatprep.mubr.bf16.mxu0 0
        %2242 = vmatmul.mubr.bf16.gmra.mrb[0].mxu0 %v1949
        %v2243 = vpop.f32.mrb[0].mxu0
        %v2244 = vadd.f32 %v1759, %v2243
        %v2245 = vpop.f32.mrb[0].mxu0
        %v2246 = vadd.f32 %v1763, %v2245
        %v2247 = vpop.f32.mrb[0].mxu0
        %v2248 = vadd.f32 %v1759, %v2247
        %v2249 = vpop.f32.mrb[0].mxu0
        %v2250 = vadd.f32 %v1763, %v2249
        %2251 = vdwg.mxu0
        %2252 = vmatprep.subr.bf16.mxu0 %v1899
        %2253 = vmatpush1.bf16.msra.mxu0 %v1898
        %2254 = vmatprep.subr.bf16.mxu0 %v1915
        %2255 = vmatpush1.bf16.msra.mxu0 %v1914
        %2256 = vmatprep.subr.bf16.mxu0 0
        %2257 = vmatpush1.bf16.msra.mxu0 0
        %2258 = vmatprep.subr.bf16.mxu0 0
        %2259 = vmatpush1.bf16.msra.mxu0 0
        %2260 = vmatprep.subr.bf16.mxu0 0
        %2261 = vmatpush1.bf16.msra.mxu0 0
        %2262 = vmatprep.subr.bf16.mxu0 0
        %2263 = vmatpush1.bf16.msra.mxu0 0
        %2264 = vmatprep.subr.bf16.mxu0 0
        %2265 = vmatpush1.bf16.msra.mxu0 0
        %2266 = vmatprep.subr.bf16.mxu0 0
        %2267 = vmatpush1.bf16.msra.mxu0 0
        %2268 = vmatprep.subr.bf16.mxu0 0
        %2269 = vmatpush1.bf16.msra.mxu0 0
        %2270 = vmatprep.subr.bf16.mxu0 0
        %2271 = vmatpush1.bf16.msra.mxu0 0
        %2272 = vmatprep.subr.bf16.mxu0 0
        %2273 = vmatpush1.bf16.msra.mxu0 0
        %2274 = vmatprep.subr.bf16.mxu0 0
        %2275 = vmatpush1.bf16.msra.mxu0 0
        %2276 = vmatprep.subr.bf16.mxu0 0
        %2277 = vmatpush1.bf16.msra.mxu0 0
        %2278 = vmatprep.subr.bf16.mxu0 0
        %2279 = vmatpush1.bf16.msra.mxu0 0
        %2280 = vmatprep.subr.bf16.mxu0 0
        %2281 = vmatpush1.bf16.msra.mxu0 0
        %2282 = vmatprep.subr.bf16.mxu0 0
        %2283 = vmatpush1.bf16.msra.mxu0 0
        %2284 = vmatprep.mubr.bf16.mxu0 0
        %2285 = vmatmul.mubr.bf16.gmra.mrb[0].mxu0 %v1949
        %v2286 = vpop.f32.mrb[0].mxu0
        %v2287 = vadd.f32 %v1767, %v2286
        %v2288 = vpop.f32.mrb[0].mxu0
        %v2289 = vadd.f32 %v1771, %v2288
        %v2290 = vpop.f32.mrb[0].mxu0
        %v2291 = vadd.f32 %v1767, %v2290
        %v2292 = vpop.f32.mrb[0].mxu0
        %v2293 = vadd.f32 %v1771, %v2292
        %2294 = vdwg.mxu0
        %v2295 = vmax.f32 %v1986, 0.0
        %v2296 = vmax.f32 %v1988, 0.0
        %v2297 = vmax.f32 %v2029, 0.0
        %v2298 = vmax.f32 %v2031, 0.0
        %v2299 = vmax.f32 %v2072, 0.0
        %v2300 = vmax.f32 %v2074, 0.0
        %v2301 = vmax.f32 %v2115, 0.0
        %v2302 = vmax.f32 %v2117, 0.0
        %v2303 = vmax.f32 %v2158, 0.0
        %v2304 = vmax.f32 %v2160, 0.0
        %v2305 = vmax.f32 %v2201, 0.0
        %v2306 = vmax.f32 %v2203, 0.0
        %v2307 = vmax.f32 %v2244, 0.0
        %v2308 = vmax.f32 %v2246, 0.0
        %v2309 = vmax.f32 %v2287, 0.0
        %v2310 = vmax.f32 %v2289, 0.0
        %v2311 = vmax.f32 %v1990, 0.0
        %v2312 = vmax.f32 %v1992, 0.0
        %v2313 = vmax.f32 %v2033, 0.0
        %v2314 = vmax.f32 %v2035, 0.0
        %v2315 = vmax.f32 %v2076, 0.0
        %v2316 = vmax.f32 %v2078, 0.0
        %v2317 = vmax.f32 %v2119, 0.0
        %v2318 = vmax.f32 %v2121, 0.0
        %v2319 = vmax.f32 %v2162, 0.0
        %v2320 = vmax.f32 %v2164, 0.0
        %v2321 = vmax.f32 %v2205, 0.0
        %v2322 = vmax.f32 %v2207, 0.0
        %v2323 = vmax.f32 %v2248, 0.0
        %v2324 = vmax.f32 %v2250, 0.0
        %v2325 = vmax.f32 %v2291, 0.0
        %v2326 = vmax.f32 %v2293, 0.0
        %v2327 = vpack.c.bf16 %v2311, %v2295
        %v2328 = vpack.c.bf16 %v2312, %v2296
        %v2329 = vpack.c.bf16 %v2313, %v2297
        %v2330 = vpack.c.bf16 %v2314, %v2298
        %v2331 = vpack.c.bf16 %v2315, %v2299
        %v2332 = vpack.c.bf16 %v2316, %v2300
        %v2333 = vpack.c.bf16 %v2317, %v2301
        %v2334 = vpack.c.bf16 %v2318, %v2302
        %v2335 = vpack.c.bf16 %v2319, %v2303
        %v2336 = vpack.c.bf16 %v2320, %v2304
        %v2337 = vpack.c.bf16 %v2321, %v2305
        %v2338 = vpack.c.bf16 %v2322, %v2306
        %v2339 = vpack.c.bf16 %v2323, %v2307
        %v2340 = vpack.c.bf16 %v2324, %v2308
        %v2341 = vpack.c.bf16 %v2325, %v2309
        %v2342 = vpack.c.bf16 %v2326, %v2310
        %v2343 = vld [vmem:[%s534] sm:$0xf]
        %v2344 = vld [vmem:[%s534 + $0x4] sm:$0xf]
        %v2345 = vld [vmem:[%s534 + $0x8] sm:$0xf]
        %v2346 = vld [vmem:[%s534 + $0xc] sm:$0xf]
        %v2347 = vld [vmem:[%s534 + $0x10] sm:$0xf]
        %v2348 = vld [vmem:[%s534 + $0x14] sm:$0xf]
        %v2349 = vld [vmem:[%s534 + $0x18] sm:$0xf]
        %v2350 = vld [vmem:[%s534 + $0x1c] sm:$0xf]
        %v2351 = vld [vmem:[%s534 + $0x20] sm:$0xf]
        %v2352 = vld [vmem:[%s534 + $0x24] sm:$0xf]
        %v2353 = vld [vmem:[%s534 + $0x28] sm:$0xf]
        %v2354 = vld [vmem:[%s534 + $0x2c] sm:$0xf]
        %v2355 = vld [vmem:[%s534 + $0x30] sm:$0xf]
        %v2356 = vld [vmem:[%s534 + $0x34] sm:$0xf]
        %v2357 = vld [vmem:[%s534 + $0x38] sm:$0xf]
        %v2358 = vld [vmem:[%s534 + $0x3c] sm:$0xf]
        %v2359 = vld [vmem:[%s534 + $0x40] sm:$0xf]
        %v2360 = vld [vmem:[%s534 + $0x44] sm:$0xf]
        %v2361 = vld [vmem:[%s534 + $0x48] sm:$0xf]
        %v2362 = vld [vmem:[%s534 + $0x4c] sm:$0xf]
        %v2363 = vld [vmem:[%s534 + $0x50] sm:$0xf]
        %v2364 = vld [vmem:[%s534 + $0x54] sm:$0xf]
        %v2365 = vld [vmem:[%s534 + $0x58] sm:$0xf]
        %v2366 = vld [vmem:[%s534 + $0x5c] sm:$0xf]
        %v2367 = vld [vmem:[%s534 + $0x60] sm:$0xf]
        %v2368 = vld [vmem:[%s534 + $0x64] sm:$0xf]
        %v2369 = vld [vmem:[%s534 + $0x68] sm:$0xf]
        %v2370 = vld [vmem:[%s534 + $0x6c] sm:$0xf]
        %v2371 = vld [vmem:[%s534 + $0x70] sm:$0xf]
        %v2372 = vld [vmem:[%s534 + $0x74] sm:$0xf]
        %v2373 = vld [vmem:[%s534 + $0x78] sm:$0xf]
        %v2374 = vld [vmem:[%s534 + $0x7c] sm:$0xf]
        %v2375 = vld [vmem:[%s534 + $0x80] sm:$0xf]
        %v2376 = vld [vmem:[%s534 + $0x84] sm:$0xf]
        %v2377 = vld [vmem:[%s534 + $0x88] sm:$0xf]
        %v2378 = vld [vmem:[%s534 + $0x8c] sm:$0xf]
        %v2379 = vld [vmem:[%s534 + $0x90] sm:$0xf]
        %v2380 = vld [vmem:[%s534 + $0x94] sm:$0xf]
        %v2381 = vld [vmem:[%s534 + $0x98] sm:$0xf]
        %v2382 = vld [vmem:[%s534 + $0x9c] sm:$0xf]
        %v2383 = vld [vmem:[%s534 + $0xa0] sm:$0xf]
        %v2384 = vld [vmem:[%s534 + $0xa4] sm:$0xf]
        %v2385 = vld [vmem:[%s534 + $0xa8] sm:$0xf]
        %v2386 = vld [vmem:[%s534 + $0xac] sm:$0xf]
        %v2387 = vld [vmem:[%s534 + $0xb0] sm:$0xf]
        %v2388 = vld [vmem:[%s534 + $0xb4] sm:$0xf]
        %v2389 = vld [vmem:[%s534 + $0xb8] sm:$0xf]
        %v2390 = vld [vmem:[%s534 + $0xbc] sm:$0xf]
        %v2391 = vld [vmem:[%s534 + $0xc0] sm:$0xf]
        %v2392 = vld [vmem:[%s534 + $0xc4] sm:$0xf]
        %v2393 = vld [vmem:[%s534 + $0xc8] sm:$0xf]
        %v2394 = vld [vmem:[%s534 + $0xcc] sm:$0xf]
        %v2395 = vld [vmem:[%s534 + $0xd0] sm:$0xf]
        %v2396 = vld [vmem:[%s534 + $0xd4] sm:$0xf]
        %v2397 = vld [vmem:[%s534 + $0xd8] sm:$0xf]
        %v2398 = vld [vmem:[%s534 + $0xdc] sm:$0xf]
        %v2399 = vld [vmem:[%s534 + $0xe0] sm:$0xf]
        %v2400 = vld [vmem:[%s534 + $0xe4] sm:$0xf]
        %v2401 = vld [vmem:[%s534 + $0xe8] sm:$0xf]
        %v2402 = vld [vmem:[%s534 + $0xec] sm:$0xf]
        %v2403 = vld [vmem:[%s534 + $0xf0] sm:$0xf]
        %v2404 = vld [vmem:[%s534 + $0xf4] sm:$0xf]
        %v2405 = vld [vmem:[%s534 + $0xf8] sm:$0xf]
        %v2406 = vld [vmem:[%s534 + $0xfc] sm:$0xf]
        %v2407 = vld [vmem:[%s534 + $0x100] sm:$0xf]
        %v2408 = vld [vmem:[%s534 + $0x104] sm:$0xf]
        %v2409 = vld [vmem:[%s534 + $0x108] sm:$0xf]
        %v2410 = vld [vmem:[%s534 + $0x10c] sm:$0xf]
        %v2411 = vld [vmem:[%s534 + $0x110] sm:$0xf]
        %v2412 = vld [vmem:[%s534 + $0x114] sm:$0xf]
        %v2413 = vld [vmem:[%s534 + $0x118] sm:$0xf]
        %v2414 = vld [vmem:[%s534 + $0x11c] sm:$0xf]
        %v2415 = vld [vmem:[%s534 + $0x120] sm:$0xf]
        %v2416 = vld [vmem:[%s534 + $0x124] sm:$0xf]
        %v2417 = vld [vmem:[%s534 + $0x128] sm:$0xf]
        %v2418 = vld [vmem:[%s534 + $0x12c] sm:$0xf]
        %v2419 = vld [vmem:[%s534 + $0x130] sm:$0xf]
        %v2420 = vld [vmem:[%s534 + $0x134] sm:$0xf]
        %v2421 = vld [vmem:[%s534 + $0x138] sm:$0xf]
        %v2422 = vld [vmem:[%s534 + $0x13c] sm:$0xf]
        %v2423 = vld [vmem:[%s534 + $0x140] sm:$0xf]
        %v2424 = vld [vmem:[%s534 + $0x144] sm:$0xf]
        %v2425 = vld [vmem:[%s534 + $0x148] sm:$0xf]
        %v2426 = vld [vmem:[%s534 + $0x14c] sm:$0xf]
        %v2427 = vld [vmem:[%s534 + $0x150] sm:$0xf]
        %v2428 = vld [vmem:[%s534 + $0x154] sm:$0xf]
        %v2429 = vld [vmem:[%s534 + $0x158] sm:$0xf]
        %v2430 = vld [vmem:[%s534 + $0x15c] sm:$0xf]
        %v2431 = vld [vmem:[%s534 + $0x160] sm:$0xf]
        %v2432 = vld [vmem:[%s534 + $0x164] sm:$0xf]
        %v2433 = vld [vmem:[%s534 + $0x168] sm:$0xf]
        %v2434 = vld [vmem:[%s534 + $0x16c] sm:$0xf]
        %v2435 = vld [vmem:[%s534 + $0x170] sm:$0xf]
        %v2436 = vld [vmem:[%s534 + $0x174] sm:$0xf]
        %v2437 = vld [vmem:[%s534 + $0x178] sm:$0xf]
        %v2438 = vld [vmem:[%s534 + $0x17c] sm:$0xf]
        %v2439 = vld [vmem:[%s534 + $0x180] sm:$0xf]
        %v2440 = vld [vmem:[%s534 + $0x184] sm:$0xf]
        %v2441 = vld [vmem:[%s534 + $0x188] sm:$0xf]
        %v2442 = vld [vmem:[%s534 + $0x18c] sm:$0xf]
        %v2443 = vld [vmem:[%s534 + $0x190] sm:$0xf]
        %v2444 = vld [vmem:[%s534 + $0x194] sm:$0xf]
        %v2445 = vld [vmem:[%s534 + $0x198] sm:$0xf]
        %v2446 = vld [vmem:[%s534 + $0x19c] sm:$0xf]
        %v2447 = vld [vmem:[%s534 + $0x1a0] sm:$0xf]
        %v2448 = vld [vmem:[%s534 + $0x1a4] sm:$0xf]
        %v2449 = vld [vmem:[%s534 + $0x1a8] sm:$0xf]
        %v2450 = vld [vmem:[%s534 + $0x1ac] sm:$0xf]
        %v2451 = vld [vmem:[%s534 + $0x1b0] sm:$0xf]
        %v2452 = vld [vmem:[%s534 + $0x1b4] sm:$0xf]
        %v2453 = vld [vmem:[%s534 + $0x1b8] sm:$0xf]
        %v2454 = vld [vmem:[%s534 + $0x1bc] sm:$0xf]
        %v2455 = vld [vmem:[%s534 + $0x1c0] sm:$0xf]
        %v2456 = vld [vmem:[%s534 + $0x1c4] sm:$0xf]
        %v2457 = vld [vmem:[%s534 + $0x1c8] sm:$0xf]
        %v2458 = vld [vmem:[%s534 + $0x1cc] sm:$0xf]
        %v2459 = vld [vmem:[%s534 + $0x1d0] sm:$0xf]
        %v2460 = vld [vmem:[%s534 + $0x1d4] sm:$0xf]
        %v2461 = vld [vmem:[%s534 + $0x1d8] sm:$0xf]
        %v2462 = vld [vmem:[%s534 + $0x1dc] sm:$0xf]
        %v2463 = vld [vmem:[%s534 + $0x1e0] sm:$0xf]
        %v2464 = vld [vmem:[%s534 + $0x1e4] sm:$0xf]
        %v2465 = vld [vmem:[%s534 + $0x1e8] sm:$0xf]
        %v2466 = vld [vmem:[%s534 + $0x1ec] sm:$0xf]
        %v2467 = vld [vmem:[%s534 + $0x1f0] sm:$0xf]
        %v2468 = vld [vmem:[%s534 + $0x1f4] sm:$0xf]
        %v2469 = vld [vmem:[%s534 + $0x1f8] sm:$0xf]
        %v2470 = vld [vmem:[%s534 + $0x1fc] sm:$0xf]
        %v2471 = vld [vmem:[%s534 + $0x200] sm:$0xf]
        %v2472 = vld [vmem:[%s534 + $0x204] sm:$0xf]
        %v2473 = vld [vmem:[%s534 + $0x208] sm:$0xf]
        %v2474 = vld [vmem:[%s534 + $0x20c] sm:$0xf]
        %v2475 = vld [vmem:[%s534 + $0x210] sm:$0xf]
        %v2476 = vld [vmem:[%s534 + $0x214] sm:$0xf]
        %v2477 = vld [vmem:[%s534 + $0x218] sm:$0xf]
        %v2478 = vld [vmem:[%s534 + $0x21c] sm:$0xf]
        %v2479 = vld [vmem:[%s534 + $0x220] sm:$0xf]
        %v2480 = vld [vmem:[%s534 + $0x224] sm:$0xf]
        %v2481 = vld [vmem:[%s534 + $0x228] sm:$0xf]
        %v2482 = vld [vmem:[%s534 + $0x22c] sm:$0xf]
        %v2483 = vld [vmem:[%s534 + $0x230] sm:$0xf]
        %v2484 = vld [vmem:[%s534 + $0x234] sm:$0xf]
        %v2485 = vld [vmem:[%s534 + $0x238] sm:$0xf]
        %v2486 = vld [vmem:[%s534 + $0x23c] sm:$0xf]
        %v2487 = vld [vmem:[%s534 + $0x240] sm:$0xf]
        %v2488 = vld [vmem:[%s534 + $0x244] sm:$0xf]
        %v2489 = vld [vmem:[%s534 + $0x248] sm:$0xf]
        %v2490 = vld [vmem:[%s534 + $0x24c] sm:$0xf]
        %v2491 = vld [vmem:[%s534 + $0x250] sm:$0xf]
        %v2492 = vld [vmem:[%s534 + $0x254] sm:$0xf]
        %v2493 = vld [vmem:[%s534 + $0x258] sm:$0xf]
        %v2494 = vld [vmem:[%s534 + $0x25c] sm:$0xf]
        %v2495 = vld [vmem:[%s534 + $0x260] sm:$0xf]
        %v2496 = vld [vmem:[%s534 + $0x264] sm:$0xf]
        %v2497 = vld [vmem:[%s534 + $0x268] sm:$0xf]
        %v2498 = vld [vmem:[%s534 + $0x26c] sm:$0xf]
        %v2499 = vld [vmem:[%s534 + $0x270] sm:$0xf]
        %v2500 = vld [vmem:[%s534 + $0x274] sm:$0xf]
        %v2501 = vld [vmem:[%s534 + $0x278] sm:$0xf]
        %v2502 = vld [vmem:[%s534 + $0x27c] sm:$0xf]
        %v2503 = vld [vmem:[%s534 + $0x280] sm:$0xf]
        %v2504 = vld [vmem:[%s534 + $0x284] sm:$0xf]
        %v2505 = vld [vmem:[%s534 + $0x288] sm:$0xf]
        %v2506 = vld [vmem:[%s534 + $0x28c] sm:$0xf]
        %v2507 = vld [vmem:[%s534 + $0x290] sm:$0xf]
        %v2508 = vld [vmem:[%s534 + $0x294] sm:$0xf]
        %v2509 = vld [vmem:[%s534 + $0x298] sm:$0xf]
        %v2510 = vld [vmem:[%s534 + $0x29c] sm:$0xf]
        %v2511 = vld [vmem:[%s534 + $0x2a0] sm:$0xf]
        %v2512 = vld [vmem:[%s534 + $0x2a4] sm:$0xf]
        %v2513 = vld [vmem:[%s534 + $0x2a8] sm:$0xf]
        %v2514 = vld [vmem:[%s534 + $0x2ac] sm:$0xf]
        %v2515 = vld [vmem:[%s534 + $0x2b0] sm:$0xf]
        %v2516 = vld [vmem:[%s534 + $0x2b4] sm:$0xf]
        %v2517 = vld [vmem:[%s534 + $0x2b8] sm:$0xf]
        %v2518 = vld [vmem:[%s534 + $0x2bc] sm:$0xf]
        %v2519 = vld [vmem:[%s534 + $0x2c0] sm:$0xf]
        %v2520 = vld [vmem:[%s534 + $0x2c4] sm:$0xf]
        %v2521 = vld [vmem:[%s534 + $0x2c8] sm:$0xf]
        %v2522 = vld [vmem:[%s534 + $0x2cc] sm:$0xf]
        %v2523 = vld [vmem:[%s534 + $0x2d0] sm:$0xf]
        %v2524 = vld [vmem:[%s534 + $0x2d4] sm:$0xf]
        %v2525 = vld [vmem:[%s534 + $0x2d8] sm:$0xf]
        %v2526 = vld [vmem:[%s534 + $0x2dc] sm:$0xf]
        %v2527 = vld [vmem:[%s534 + $0x2e0] sm:$0xf]
        %v2528 = vld [vmem:[%s534 + $0x2e4] sm:$0xf]
        %v2529 = vld [vmem:[%s534 + $0x2e8] sm:$0xf]
        %v2530 = vld [vmem:[%s534 + $0x2ec] sm:$0xf]
        %v2531 = vld [vmem:[%s534 + $0x2f0] sm:$0xf]
        %v2532 = vld [vmem:[%s534 + $0x2f4] sm:$0xf]
        %v2533 = vld [vmem:[%s534 + $0x2f8] sm:$0xf]
        %v2534 = vld [vmem:[%s534 + $0x2fc] sm:$0xf]
        %v2535 = vld [vmem:[%s534 + $0x300] sm:$0xf]
        %v2536 = vld [vmem:[%s534 + $0x304] sm:$0xf]
        %v2537 = vld [vmem:[%s534 + $0x308] sm:$0xf]
        %v2538 = vld [vmem:[%s534 + $0x30c] sm:$0xf]
        %v2539 = vld [vmem:[%s534 + $0x310] sm:$0xf]
        %v2540 = vld [vmem:[%s534 + $0x314] sm:$0xf]
        %v2541 = vld [vmem:[%s534 + $0x318] sm:$0xf]
        %v2542 = vld [vmem:[%s534 + $0x31c] sm:$0xf]
        %v2543 = vld [vmem:[%s534 + $0x320] sm:$0xf]
        %v2544 = vld [vmem:[%s534 + $0x324] sm:$0xf]
        %v2545 = vld [vmem:[%s534 + $0x328] sm:$0xf]
        %v2546 = vld [vmem:[%s534 + $0x32c] sm:$0xf]
        %v2547 = vld [vmem:[%s534 + $0x330] sm:$0xf]
        %v2548 = vld [vmem:[%s534 + $0x334] sm:$0xf]
        %v2549 = vld [vmem:[%s534 + $0x338] sm:$0xf]
        %v2550 = vld [vmem:[%s534 + $0x33c] sm:$0xf]
        %v2551 = vld [vmem:[%s534 + $0x340] sm:$0xf]
        %v2552 = vld [vmem:[%s534 + $0x344] sm:$0xf]
        %v2553 = vld [vmem:[%s534 + $0x348] sm:$0xf]
        %v2554 = vld [vmem:[%s534 + $0x34c] sm:$0xf]
        %v2555 = vld [vmem:[%s534 + $0x350] sm:$0xf]
        %v2556 = vld [vmem:[%s534 + $0x354] sm:$0xf]
        %v2557 = vld [vmem:[%s534 + $0x358] sm:$0xf]
        %v2558 = vld [vmem:[%s534 + $0x35c] sm:$0xf]
        %v2559 = vld [vmem:[%s534 + $0x360] sm:$0xf]
        %v2560 = vld [vmem:[%s534 + $0x364] sm:$0xf]
        %v2561 = vld [vmem:[%s534 + $0x368] sm:$0xf]
        %v2562 = vld [vmem:[%s534 + $0x36c] sm:$0xf]
        %v2563 = vld [vmem:[%s534 + $0x370] sm:$0xf]
        %v2564 = vld [vmem:[%s534 + $0x374] sm:$0xf]
        %v2565 = vld [vmem:[%s534 + $0x378] sm:$0xf]
        %v2566 = vld [vmem:[%s534 + $0x37c] sm:$0xf]
        %v2567 = vld [vmem:[%s534 + $0x380] sm:$0xf]
        %v2568 = vld [vmem:[%s534 + $0x384] sm:$0xf]
        %v2569 = vld [vmem:[%s534 + $0x388] sm:$0xf]
        %v2570 = vld [vmem:[%s534 + $0x38c] sm:$0xf]
        %v2571 = vld [vmem:[%s534 + $0x390] sm:$0xf]
        %v2572 = vld [vmem:[%s534 + $0x394] sm:$0xf]
        %v2573 = vld [vmem:[%s534 + $0x398] sm:$0xf]
        %v2574 = vld [vmem:[%s534 + $0x39c] sm:$0xf]
        %v2575 = vld [vmem:[%s534 + $0x3a0] sm:$0xf]
        %v2576 = vld [vmem:[%s534 + $0x3a4] sm:$0xf]
        %v2577 = vld [vmem:[%s534 + $0x3a8] sm:$0xf]
        %v2578 = vld [vmem:[%s534 + $0x3ac] sm:$0xf]
        %v2579 = vld [vmem:[%s534 + $0x3b0] sm:$0xf]
        %v2580 = vld [vmem:[%s534 + $0x3b4] sm:$0xf]
        %v2581 = vld [vmem:[%s534 + $0x3b8] sm:$0xf]
        %v2582 = vld [vmem:[%s534 + $0x3bc] sm:$0xf]
        %v2583 = vld [vmem:[%s534 + $0x3c0] sm:$0xf]
        %v2584 = vld [vmem:[%s534 + $0x3c4] sm:$0xf]
        %v2585 = vld [vmem:[%s534 + $0x3c8] sm:$0xf]
        %v2586 = vld [vmem:[%s534 + $0x3cc] sm:$0xf]
        %v2587 = vld [vmem:[%s534 + $0x3d0] sm:$0xf]
        %v2588 = vld [vmem:[%s534 + $0x3d4] sm:$0xf]
        %v2589 = vld [vmem:[%s534 + $0x3d8] sm:$0xf]
        %v2590 = vld [vmem:[%s534 + $0x3dc] sm:$0xf]
        %v2591 = vld [vmem:[%s534 + $0x3e0] sm:$0xf]
        %v2592 = vld [vmem:[%s534 + $0x3e4] sm:$0xf]
        %v2593 = vld [vmem:[%s534 + $0x3e8] sm:$0xf]
        %v2594 = vld [vmem:[%s534 + $0x3ec] sm:$0xf]
        %v2595 = vld [vmem:[%s534 + $0x3f0] sm:$0xf]
        %v2596 = vld [vmem:[%s534 + $0x3f4] sm:$0xf]
        %v2597 = vld [vmem:[%s534 + $0x3f8] sm:$0xf]
        %v2598 = vld [vmem:[%s534 + $0x3fc] sm:$0xf]
        %v2599 = vlaneseq
        %v2600 = vshrl.u32 %v2599, 7
        %v2601 = vsub.s32 3, %v2600
        %v2602 = vrot.slane %v628, %v2601
        %v2859 = vunpack.c.l.b16 %v2343
        %v2860 = vunpack.c.l.b16 %v2344
        %v2861 = vunpack.c.l.b16 %v2345
        %v2862 = vunpack.c.l.b16 %v2346
        %v2863 = vunpack.c.l.b16 %v2347
        %v2864 = vunpack.c.l.b16 %v2348
        %v2865 = vunpack.c.l.b16 %v2349
        %v2866 = vunpack.c.l.b16 %v2350
        %v2867 = vunpack.c.l.b16 %v2351
        %v2868 = vunpack.c.l.b16 %v2352
        %v2869 = vunpack.c.l.b16 %v2353
        %v2870 = vunpack.c.l.b16 %v2354
        %v2871 = vunpack.c.l.b16 %v2355
        %v2872 = vunpack.c.l.b16 %v2356
        %v2873 = vunpack.c.l.b16 %v2357
        %v2874 = vunpack.c.l.b16 %v2358
        %v2875 = vunpack.c.l.b16 %v2359
        %v2876 = vunpack.c.l.b16 %v2360
        %v2877 = vunpack.c.l.b16 %v2361
        %v2878 = vunpack.c.l.b16 %v2362
        %v2879 = vunpack.c.l.b16 %v2363
        %v2880 = vunpack.c.l.b16 %v2364
        %v2881 = vunpack.c.l.b16 %v2365
        %v2882 = vunpack.c.l.b16 %v2366
        %v2883 = vunpack.c.l.b16 %v2367
        %v2884 = vunpack.c.l.b16 %v2368
        %v2885 = vunpack.c.l.b16 %v2369
        %v2886 = vunpack.c.l.b16 %v2370
        %v2887 = vunpack.c.l.b16 %v2371
        %v2888 = vunpack.c.l.b16 %v2372
        %v2889 = vunpack.c.l.b16 %v2373
        %v2890 = vunpack.c.l.b16 %v2374
        %v2891 = vunpack.c.l.b16 %v2375
        %v2892 = vunpack.c.l.b16 %v2376
        %v2893 = vunpack.c.l.b16 %v2377
        %v2894 = vunpack.c.l.b16 %v2378
        %v2895 = vunpack.c.l.b16 %v2379
        %v2896 = vunpack.c.l.b16 %v2380
        %v2897 = vunpack.c.l.b16 %v2381
        %v2898 = vunpack.c.l.b16 %v2382
        %v2899 = vunpack.c.l.b16 %v2383
        %v2900 = vunpack.c.l.b16 %v2384
        %v2901 = vunpack.c.l.b16 %v2385
        %v2902 = vunpack.c.l.b16 %v2386
        %v2903 = vunpack.c.l.b16 %v2387
        %v2904 = vunpack.c.l.b16 %v2388
        %v2905 = vunpack.c.l.b16 %v2389
        %v2906 = vunpack.c.l.b16 %v2390
        %v2907 = vunpack.c.l.b16 %v2391
        %v2908 = vunpack.c.l.b16 %v2392
        %v2909 = vunpack.c.l.b16 %v2393
        %v2910 = vunpack.c.l.b16 %v2394
        %v2911 = vunpack.c.l.b16 %v2395
        %v2912 = vunpack.c.l.b16 %v2396
        %v2913 = vunpack.c.l.b16 %v2397
        %v2914 = vunpack.c.l.b16 %v2398
        %v2915 = vunpack.c.l.b16 %v2399
        %v2916 = vunpack.c.l.b16 %v2400
        %v2917 = vunpack.c.l.b16 %v2401
        %v2918 = vunpack.c.l.b16 %v2402
        %v2919 = vunpack.c.l.b16 %v2403
        %v2920 = vunpack.c.l.b16 %v2404
        %v2921 = vunpack.c.l.b16 %v2405
        %v2922 = vunpack.c.l.b16 %v2406
        %v2923 = vunpack.c.l.b16 %v2407
        %v2924 = vunpack.c.l.b16 %v2408
        %v2925 = vunpack.c.l.b16 %v2409
        %v2926 = vunpack.c.l.b16 %v2410
        %v2927 = vunpack.c.l.b16 %v2411
        %v2928 = vunpack.c.l.b16 %v2412
        %v2929 = vunpack.c.l.b16 %v2413
        %v2930 = vunpack.c.l.b16 %v2414
        %v2931 = vunpack.c.l.b16 %v2415
        %v2932 = vunpack.c.l.b16 %v2416
        %v2933 = vunpack.c.l.b16 %v2417
        %v2934 = vunpack.c.l.b16 %v2418
        %v2935 = vunpack.c.l.b16 %v2419
        %v2936 = vunpack.c.l.b16 %v2420
        %v2937 = vunpack.c.l.b16 %v2421
        %v2938 = vunpack.c.l.b16 %v2422
        %v2939 = vunpack.c.l.b16 %v2423
        %v2940 = vunpack.c.l.b16 %v2424
        %v2941 = vunpack.c.l.b16 %v2425
        %v2942 = vunpack.c.l.b16 %v2426
        %v2943 = vunpack.c.l.b16 %v2427
        %v2944 = vunpack.c.l.b16 %v2428
        %v2945 = vunpack.c.l.b16 %v2429
        %v2946 = vunpack.c.l.b16 %v2430
        %v2947 = vunpack.c.l.b16 %v2431
        %v2948 = vunpack.c.l.b16 %v2432
        %v2949 = vunpack.c.l.b16 %v2433
        %v2950 = vunpack.c.l.b16 %v2434
        %v2951 = vunpack.c.l.b16 %v2435
        %v2952 = vunpack.c.l.b16 %v2436
        %v2953 = vunpack.c.l.b16 %v2437
        %v2954 = vunpack.c.l.b16 %v2438
        %v2955 = vunpack.c.l.b16 %v2439
        %v2956 = vunpack.c.l.b16 %v2440
        %v2957 = vunpack.c.l.b16 %v2441
        %v2958 = vunpack.c.l.b16 %v2442
        %v2959 = vunpack.c.l.b16 %v2443
        %v2960 = vunpack.c.l.b16 %v2444
        %v2961 = vunpack.c.l.b16 %v2445
        %v2962 = vunpack.c.l.b16 %v2446
        %v2963 = vunpack.c.l.b16 %v2447
        %v2964 = vunpack.c.l.b16 %v2448
        %v2965 = vunpack.c.l.b16 %v2449
        %v2966 = vunpack.c.l.b16 %v2450
        %v2967 = vunpack.c.l.b16 %v2451
        %v2968 = vunpack.c.l.b16 %v2452
        %v2969 = vunpack.c.l.b16 %v2453
        %v2970 = vunpack.c.l.b16 %v2454
        %v2971 = vunpack.c.l.b16 %v2455
        %v2972 = vunpack.c.l.b16 %v2456
        %v2973 = vunpack.c.l.b16 %v2457
        %v2974 = vunpack.c.l.b16 %v2458
        %v2975 = vunpack.c.l.b16 %v2459
        %v2976 = vunpack.c.l.b16 %v2460
        %v2977 = vunpack.c.l.b16 %v2461
        %v2978 = vunpack.c.l.b16 %v2462
        %v2979 = vunpack.c.l.b16 %v2463
        %v2980 = vunpack.c.l.b16 %v2464
        %v2981 = vunpack.c.l.b16 %v2465
        %v2982 = vunpack.c.l.b16 %v2466
        %v2983 = vunpack.c.l.b16 %v2467
        %v2984 = vunpack.c.l.b16 %v2468
        %v2985 = vunpack.c.l.b16 %v2469
        %v2986 = vunpack.c.l.b16 %v2470
        %v2987 = vunpack.c.l.b16 %v2471
        %v2988 = vunpack.c.l.b16 %v2472
        %v2989 = vunpack.c.l.b16 %v2473
        %v2990 = vunpack.c.l.b16 %v2474
        %v2991 = vunpack.c.l.b16 %v2475
        %v2992 = vunpack.c.l.b16 %v2476
        %v2993 = vunpack.c.l.b16 %v2477
        %v2994 = vunpack.c.l.b16 %v2478
        %v2995 = vunpack.c.l.b16 %v2479
        %v2996 = vunpack.c.l.b16 %v2480
        %v2997 = vunpack.c.l.b16 %v2481
        %v2998 = vunpack.c.l.b16 %v2482
        %v2999 = vunpack.c.l.b16 %v2483
        %v3000 = vunpack.c.l.b16 %v2484
        %v3001 = vunpack.c.l.b16 %v2485
        %v3002 = vunpack.c.l.b16 %v2486
        %v3003 = vunpack.c.l.b16 %v2487
        %v3004 = vunpack.c.l.b16 %v2488
        %v3005 = vunpack.c.l.b16 %v2489
        %v3006 = vunpack.c.l.b16 %v2490
        %v3007 = vunpack.c.l.b16 %v2491
        %v3008 = vunpack.c.l.b16 %v2492
        %v3009 = vunpack.c.l.b16 %v2493
        %v3010 = vunpack.c.l.b16 %v2494
        %v3011 = vunpack.c.l.b16 %v2495
        %v3012 = vunpack.c.l.b16 %v2496
        %v3013 = vunpack.c.l.b16 %v2497
        %v3014 = vunpack.c.l.b16 %v2498
        %v3015 = vunpack.c.l.b16 %v2499
        %v3016 = vunpack.c.l.b16 %v2500
        %v3017 = vunpack.c.l.b16 %v2501
        %v3018 = vunpack.c.l.b16 %v2502
        %v3019 = vunpack.c.l.b16 %v2503
        %v3020 = vunpack.c.l.b16 %v2504
        %v3021 = vunpack.c.l.b16 %v2505
        %v3022 = vunpack.c.l.b16 %v2506
        %v3023 = vunpack.c.l.b16 %v2507
        %v3024 = vunpack.c.l.b16 %v2508
        %v3025 = vunpack.c.l.b16 %v2509
        %v3026 = vunpack.c.l.b16 %v2510
        %v3027 = vunpack.c.l.b16 %v2511
        %v3028 = vunpack.c.l.b16 %v2512
        %v3029 = vunpack.c.l.b16 %v2513
        %v3030 = vunpack.c.l.b16 %v2514
        %v3031 = vunpack.c.l.b16 %v2515
        %v3032 = vunpack.c.l.b16 %v2516
        %v3033 = vunpack.c.l.b16 %v2517
        %v3034 = vunpack.c.l.b16 %v2518
        %v3035 = vunpack.c.l.b16 %v2519
        %v3036 = vunpack.c.l.b16 %v2520
        %v3037 = vunpack.c.l.b16 %v2521
        %v3038 = vunpack.c.l.b16 %v2522
        %v3039 = vunpack.c.l.b16 %v2523
        %v3040 = vunpack.c.l.b16 %v2524
        %v3041 = vunpack.c.l.b16 %v2525
        %v3042 = vunpack.c.l.b16 %v2526
        %v3043 = vunpack.c.l.b16 %v2527
        %v3044 = vunpack.c.l.b16 %v2528
        %v3045 = vunpack.c.l.b16 %v2529
        %v3046 = vunpack.c.l.b16 %v2530
        %v3047 = vunpack.c.l.b16 %v2531
        %v3048 = vunpack.c.l.b16 %v2532
        %v3049 = vunpack.c.l.b16 %v2533
        %v3050 = vunpack.c.l.b16 %v2534
        %v3051 = vunpack.c.l.b16 %v2535
        %v3052 = vunpack.c.l.b16 %v2536
        %v3053 = vunpack.c.l.b16 %v2537
        %v3054 = vunpack.c.l.b16 %v2538
        %v3055 = vunpack.c.l.b16 %v2539
        %v3056 = vunpack.c.l.b16 %v2540
        %v3057 = vunpack.c.l.b16 %v2541
        %v3058 = vunpack.c.l.b16 %v2542
        %v3059 = vunpack.c.l.b16 %v2543
        %v3060 = vunpack.c.l.b16 %v2544
        %v3061 = vunpack.c.l.b16 %v2545
        %v3062 = vunpack.c.l.b16 %v2546
        %v3063 = vunpack.c.l.b16 %v2547
        %v3064 = vunpack.c.l.b16 %v2548
        %v3065 = vunpack.c.l.b16 %v2549
        %v3066 = vunpack.c.l.b16 %v2550
        %v3067 = vunpack.c.l.b16 %v2551
        %v3068 = vunpack.c.l.b16 %v2552
        %v3069 = vunpack.c.l.b16 %v2553
        %v3070 = vunpack.c.l.b16 %v2554
        %v3071 = vunpack.c.l.b16 %v2555
        %v3072 = vunpack.c.l.b16 %v2556
        %v3073 = vunpack.c.l.b16 %v2557
        %v3074 = vunpack.c.l.b16 %v2558
        %v3075 = vunpack.c.l.b16 %v2559
        %v3076 = vunpack.c.l.b16 %v2560
        %v3077 = vunpack.c.l.b16 %v2561
        %v3078 = vunpack.c.l.b16 %v2562
        %v3079 = vunpack.c.l.b16 %v2563
        %v3080 = vunpack.c.l.b16 %v2564
        %v3081 = vunpack.c.l.b16 %v2565
        %v3082 = vunpack.c.l.b16 %v2566
        %v3083 = vunpack.c.l.b16 %v2567
        %v3084 = vunpack.c.l.b16 %v2568
        %v3085 = vunpack.c.l.b16 %v2569
        %v3086 = vunpack.c.l.b16 %v2570
        %v3087 = vunpack.c.l.b16 %v2571
        %v3088 = vunpack.c.l.b16 %v2572
        %v3089 = vunpack.c.l.b16 %v2573
        %v3090 = vunpack.c.l.b16 %v2574
        %v3091 = vunpack.c.l.b16 %v2575
        %v3092 = vunpack.c.l.b16 %v2576
        %v3093 = vunpack.c.l.b16 %v2577
        %v3094 = vunpack.c.l.b16 %v2578
        %v3095 = vunpack.c.l.b16 %v2579
        %v3096 = vunpack.c.l.b16 %v2580
        %v3097 = vunpack.c.l.b16 %v2581
        %v3098 = vunpack.c.l.b16 %v2582
        %v3099 = vunpack.c.l.b16 %v2583
        %v3100 = vunpack.c.l.b16 %v2584
        %v3101 = vunpack.c.l.b16 %v2585
        %v3102 = vunpack.c.l.b16 %v2586
        %v3103 = vunpack.c.l.b16 %v2587
        %v3104 = vunpack.c.l.b16 %v2588
        %v3105 = vunpack.c.l.b16 %v2589
        %v3106 = vunpack.c.l.b16 %v2590
        %v3107 = vunpack.c.l.b16 %v2591
        %v3108 = vunpack.c.l.b16 %v2592
        %v3109 = vunpack.c.l.b16 %v2593
        %v3110 = vunpack.c.l.b16 %v2594
        %v3111 = vunpack.c.l.b16 %v2595
        %v3112 = vunpack.c.l.b16 %v2596
        %v3113 = vunpack.c.l.b16 %v2597
        %v3114 = vunpack.c.l.b16 %v2598
        %v3115 = vpack.c.b16 %v2860, %v2859
        %v3116 = vpack.c.b16 %v2862, %v2861
        %v3117 = vpack.c.b16 %v2864, %v2863
        %v3118 = vpack.c.b16 %v2866, %v2865
        %v3119 = vpack.c.b16 %v2868, %v2867
        %v3120 = vpack.c.b16 %v2870, %v2869
        %v3121 = vpack.c.b16 %v2872, %v2871
        %v3122 = vpack.c.b16 %v2874, %v2873
        %v3123 = vpack.c.b16 %v2876, %v2875
        %v3124 = vpack.c.b16 %v2878, %v2877
        %v3125 = vpack.c.b16 %v2880, %v2879
        %v3126 = vpack.c.b16 %v2882, %v2881
        %v3127 = vpack.c.b16 %v2884, %v2883
        %v3128 = vpack.c.b16 %v2886, %v2885
        %v3129 = vpack.c.b16 %v2888, %v2887
        %v3130 = vpack.c.b16 %v2890, %v2889
        %v3131 = vpack.c.b16 %v2892, %v2891
        %v3132 = vpack.c.b16 %v2894, %v2893
        %v3133 = vpack.c.b16 %v2896, %v2895
        %v3134 = vpack.c.b16 %v2898, %v2897
        %v3135 = vpack.c.b16 %v2900, %v2899
        %v3136 = vpack.c.b16 %v2902, %v2901
        %v3137 = vpack.c.b16 %v2904, %v2903
        %v3138 = vpack.c.b16 %v2906, %v2905
        %v3139 = vpack.c.b16 %v2908, %v2907
        %v3140 = vpack.c.b16 %v2910, %v2909
        %v3141 = vpack.c.b16 %v2912, %v2911
        %v3142 = vpack.c.b16 %v2914, %v2913
        %v3143 = vpack.c.b16 %v2916, %v2915
        %v3144 = vpack.c.b16 %v2918, %v2917
        %v3145 = vpack.c.b16 %v2920, %v2919
        %v3146 = vpack.c.b16 %v2922, %v2921
        %v3147 = vpack.c.b16 %v2924, %v2923
        %v3148 = vpack.c.b16 %v2926, %v2925
        %v3149 = vpack.c.b16 %v2928, %v2927
        %v3150 = vpack.c.b16 %v2930, %v2929
        %v3151 = vpack.c.b16 %v2932, %v2931
        %v3152 = vpack.c.b16 %v2934, %v2933
        %v3153 = vpack.c.b16 %v2936, %v2935
        %v3154 = vpack.c.b16 %v2938, %v2937
        %v3155 = vpack.c.b16 %v2940, %v2939
        %v3156 = vpack.c.b16 %v2942, %v2941
        %v3157 = vpack.c.b16 %v2944, %v2943
        %v3158 = vpack.c.b16 %v2946, %v2945
        %v3159 = vpack.c.b16 %v2948, %v2947
        %v3160 = vpack.c.b16 %v2950, %v2949
        %v3161 = vpack.c.b16 %v2952, %v2951
        %v3162 = vpack.c.b16 %v2954, %v2953
        %v3163 = vpack.c.b16 %v2956, %v2955
        %v3164 = vpack.c.b16 %v2958, %v2957
        %v3165 = vpack.c.b16 %v2960, %v2959
        %v3166 = vpack.c.b16 %v2962, %v2961
        %v3167 = vpack.c.b16 %v2964, %v2963
        %v3168 = vpack.c.b16 %v2966, %v2965
        %v3169 = vpack.c.b16 %v2968, %v2967
        %v3170 = vpack.c.b16 %v2970, %v2969
        %v3171 = vpack.c.b16 %v2972, %v2971
        %v3172 = vpack.c.b16 %v2974, %v2973
        %v3173 = vpack.c.b16 %v2976, %v2975
        %v3174 = vpack.c.b16 %v2978, %v2977
        %v3175 = vpack.c.b16 %v2980, %v2979
        %v3176 = vpack.c.b16 %v2982, %v2981
        %v3177 = vpack.c.b16 %v2984, %v2983
        %v3178 = vpack.c.b16 %v2986, %v2985
        %v3179 = vpack.c.b16 %v2988, %v2987
        %v3180 = vpack.c.b16 %v2990, %v2989
        %v3181 = vpack.c.b16 %v2992, %v2991
        %v3182 = vpack.c.b16 %v2994, %v2993
        %v3183 = vpack.c.b16 %v2996, %v2995
        %v3184 = vpack.c.b16 %v2998, %v2997
        %v3185 = vpack.c.b16 %v3000, %v2999
        %v3186 = vpack.c.b16 %v3002, %v3001
        %v3187 = vpack.c.b16 %v3004, %v3003
        %v3188 = vpack.c.b16 %v3006, %v3005
        %v3189 = vpack.c.b16 %v3008, %v3007
        %v3190 = vpack.c.b16 %v3010, %v3009
        %v3191 = vpack.c.b16 %v3012, %v3011
        %v3192 = vpack.c.b16 %v3014, %v3013
        %v3193 = vpack.c.b16 %v3016, %v3015
        %v3194 = vpack.c.b16 %v3018, %v3017
        %v3195 = vpack.c.b16 %v3020, %v3019
        %v3196 = vpack.c.b16 %v3022, %v3021
        %v3197 = vpack.c.b16 %v3024, %v3023
        %v3198 = vpack.c.b16 %v3026, %v3025
        %v3199 = vpack.c.b16 %v3028, %v3027
        %v3200 = vpack.c.b16 %v3030, %v3029
        %v3201 = vpack.c.b16 %v3032, %v3031
        %v3202 = vpack.c.b16 %v3034, %v3033
        %v3203 = vpack.c.b16 %v3036, %v3035
        %v3204 = vpack.c.b16 %v3038, %v3037
        %v3205 = vpack.c.b16 %v3040, %v3039
        %v3206 = vpack.c.b16 %v3042, %v3041
        %v3207 = vpack.c.b16 %v3044, %v3043
        %v3208 = vpack.c.b16 %v3046, %v3045
        %v3209 = vpack.c.b16 %v3048, %v3047
        %v3210 = vpack.c.b16 %v3050, %v3049
        %v3211 = vpack.c.b16 %v3052, %v3051
        %v3212 = vpack.c.b16 %v3054, %v3053
        %v3213 = vpack.c.b16 %v3056, %v3055
        %v3214 = vpack.c.b16 %v3058, %v3057
        %v3215 = vpack.c.b16 %v3060, %v3059
        %v3216 = vpack.c.b16 %v3062, %v3061
        %v3217 = vpack.c.b16 %v3064, %v3063
        %v3218 = vpack.c.b16 %v3066, %v3065
        %v3219 = vpack.c.b16 %v3068, %v3067
        %v3220 = vpack.c.b16 %v3070, %v3069
        %v3221 = vpack.c.b16 %v3072, %v3071
        %v3222 = vpack.c.b16 %v3074, %v3073
        %v3223 = vpack.c.b16 %v3076, %v3075
        %v3224 = vpack.c.b16 %v3078, %v3077
        %v3225 = vpack.c.b16 %v3080, %v3079
        %v3226 = vpack.c.b16 %v3082, %v3081
        %v3227 = vpack.c.b16 %v3084, %v3083
        %v3228 = vpack.c.b16 %v3086, %v3085
        %v3229 = vpack.c.b16 %v3088, %v3087
        %v3230 = vpack.c.b16 %v3090, %v3089
        %v3231 = vpack.c.b16 %v3092, %v3091
        %v3232 = vpack.c.b16 %v3094, %v3093
        %v3233 = vpack.c.b16 %v3096, %v3095
        %v3234 = vpack.c.b16 %v3098, %v3097
        %v3235 = vpack.c.b16 %v3100, %v3099
        %v3236 = vpack.c.b16 %v3102, %v3101
        %v3237 = vpack.c.b16 %v3104, %v3103
        %v3238 = vpack.c.b16 %v3106, %v3105
        %v3239 = vpack.c.b16 %v3108, %v3107
        %v3240 = vpack.c.b16 %v3110, %v3109
        %v3241 = vpack.c.b16 %v3112, %v3111
        %v3242 = vpack.c.b16 %v3114, %v3113
        %3371 = vmatprep.subr.bf16.mxu0 0
        %3372 = vmatpush1.bf16.msra.mxu0 %v3115
        %3373 = vmatprep.subr.bf16.mxu0 0
        %3374 = vmatpush1.bf16.msra.mxu0 %v3116
        %3375 = vmatprep.subr.bf16.mxu0 0
        %3376 = vmatpush1.bf16.msra.mxu0 %v3117
        %3377 = vmatprep.subr.bf16.mxu0 0
        %3378 = vmatpush1.bf16.msra.mxu0 %v3118
        %3379 = vmatprep.subr.bf16.mxu0 0
        %3380 = vmatpush1.bf16.msra.mxu0 %v3119
        %3381 = vmatprep.subr.bf16.mxu0 0
        %3382 = vmatpush1.bf16.msra.mxu0 %v3120
        %3383 = vmatprep.subr.bf16.mxu0 0
        %3384 = vmatpush1.bf16.msra.mxu0 %v3121
        %3385 = vmatprep.subr.bf16.mxu0 0
        %3386 = vmatpush1.bf16.msra.mxu0 %v3122
        %3387 = vmatprep.subr.bf16.mxu0 0
        %3388 = vmatpush1.bf16.msra.mxu0 %v3123
        %3389 = vmatprep.subr.bf16.mxu0 0
        %3390 = vmatpush1.bf16.msra.mxu0 %v3124
        %3391 = vmatprep.subr.bf16.mxu0 0
        %3392 = vmatpush1.bf16.msra.mxu0 %v3125
        %3393 = vmatprep.subr.bf16.mxu0 0
        %3394 = vmatpush1.bf16.msra.mxu0 %v3126
        %3395 = vmatprep.subr.bf16.mxu0 0
        %3396 = vmatpush1.bf16.msra.mxu0 %v3127
        %3397 = vmatprep.subr.bf16.mxu0 0
        %3398 = vmatpush1.bf16.msra.mxu0 %v3128
        %3399 = vmatprep.subr.bf16.mxu0 0
        %3400 = vmatpush1.bf16.msra.mxu0 %v3129
        %3401 = vmatprep.subr.bf16.mxu0 0
        %3402 = vmatpush1.bf16.msra.mxu0 %v3130
        %3403 = vmatprep.mubr.bf16.mxu0 %v2328
        %3404 = vmatmul.mubr.bf16.gmra.mrb[0].mxu0 %v2327
        %v3405 = vpop.f32.mrb[0].mxu0
        %v3406 = vadd.f32 %v2602, %v3405
        %v3407 = vpop.f32.mrb[0].mxu0
        %v3408 = vpop.f32.mrb[0].mxu0
        %v3409 = vadd.f32 %v2602, %v3408
        %v3410 = vpop.f32.mrb[0].mxu0
        %3411 = vdwg.mxu0
        %3412 = vmatprep.subr.bf16.mxu0 0
        %3413 = vmatpush1.bf16.msra.mxu0 %v3131
        %3414 = vmatprep.subr.bf16.mxu0 0
        %3415 = vmatpush1.bf16.msra.mxu0 %v3132
        %3416 = vmatprep.subr.bf16.mxu0 0
        %3417 = vmatpush1.bf16.msra.mxu0 %v3133
        %3418 = vmatprep.subr.bf16.mxu0 0
        %3419 = vmatpush1.bf16.msra.mxu0 %v3134
        %3420 = vmatprep.subr.bf16.mxu0 0
        %3421 = vmatpush1.bf16.msra.mxu0 %v3135
        %3422 = vmatprep.subr.bf16.mxu0 0
        %3423 = vmatpush1.bf16.msra.mxu0 %v3136
        %3424 = vmatprep.subr.bf16.mxu0 0
        %3425 = vmatpush1.bf16.msra.mxu0 %v3137
        %3426 = vmatprep.subr.bf16.mxu0 0
        %3427 = vmatpush1.bf16.msra.mxu0 %v3138
        %3428 = vmatprep.subr.bf16.mxu0 0
        %3429 = vmatpush1.bf16.msra.mxu0 %v3139
        %3430 = vmatprep.subr.bf16.mxu0 0
        %3431 = vmatpush1.bf16.msra.mxu0 %v3140
        %3432 = vmatprep.subr.bf16.mxu0 0
        %3433 = vmatpush1.bf16.msra.mxu0 %v3141
        %3434 = vmatprep.subr.bf16.mxu0 0
        %3435 = vmatpush1.bf16.msra.mxu0 %v3142
        %3436 = vmatprep.subr.bf16.mxu0 0
        %3437 = vmatpush1.bf16.msra.mxu0 %v3143
        %3438 = vmatprep.subr.bf16.mxu0 0
        %3439 = vmatpush1.bf16.msra.mxu0 %v3144
        %3440 = vmatprep.subr.bf16.mxu0 0
        %3441 = vmatpush1.bf16.msra.mxu0 %v3145
        %3442 = vmatprep.subr.bf16.mxu0 0
        %3443 = vmatpush1.bf16.msra.mxu0 %v3146
        %3444 = vmatprep.mubr.bf16.mxu0 %v2330
        %3445 = vmatmul.mubr.bf16.gmra.mrb[0].mxu0 %v2329
        %v3446 = vpop.f32.mrb[0].mxu0
        %v3447 = vadd.f32 %v3406, %v3446
        %v3448 = vpop.f32.mrb[0].mxu0
        %v3449 = vpop.f32.mrb[0].mxu0
        %v3450 = vadd.f32 %v3409, %v3449
        %v3451 = vpop.f32.mrb[0].mxu0
        %3452 = vdwg.mxu0
        %3453 = vmatprep.subr.bf16.mxu0 0
        %3454 = vmatpush1.bf16.msra.mxu0 %v3147
        %3455 = vmatprep.subr.bf16.mxu0 0
        %3456 = vmatpush1.bf16.msra.mxu0 %v3148
        %3457 = vmatprep.subr.bf16.mxu0 0
        %3458 = vmatpush1.bf16.msra.mxu0 %v3149
        %3459 = vmatprep.subr.bf16.mxu0 0
        %3460 = vmatpush1.bf16.msra.mxu0 %v3150
        %3461 = vmatprep.subr.bf16.mxu0 0
        %3462 = vmatpush1.bf16.msra.mxu0 %v3151
        %3463 = vmatprep.subr.bf16.mxu0 0
        %3464 = vmatpush1.bf16.msra.mxu0 %v3152
        %3465 = vmatprep.subr.bf16.mxu0 0
        %3466 = vmatpush1.bf16.msra.mxu0 %v3153
        %3467 = vmatprep.subr.bf16.mxu0 0
        %3468 = vmatpush1.bf16.msra.mxu0 %v3154
        %3469 = vmatprep.subr.bf16.mxu0 0
        %3470 = vmatpush1.bf16.msra.mxu0 %v3155
        %3471 = vmatprep.subr.bf16.mxu0 0
        %3472 = vmatpush1.bf16.msra.mxu0 %v3156
        %3473 = vmatprep.subr.bf16.mxu0 0
        %3474 = vmatpush1.bf16.msra.mxu0 %v3157
        %3475 = vmatprep.subr.bf16.mxu0 0
        %3476 = vmatpush1.bf16.msra.mxu0 %v3158
        %3477 = vmatprep.subr.bf16.mxu0 0
        %3478 = vmatpush1.bf16.msra.mxu0 %v3159
        %3479 = vmatprep.subr.bf16.mxu0 0
        %3480 = vmatpush1.bf16.msra.mxu0 %v3160
        %3481 = vmatprep.subr.bf16.mxu0 0
        %3482 = vmatpush1.bf16.msra.mxu0 %v3161
        %3483 = vmatprep.subr.bf16.mxu0 0
        %3484 = vmatpush1.bf16.msra.mxu0 %v3162
        %3485 = vmatprep.mubr.bf16.mxu0 %v2332
        %3486 = vmatmul.mubr.bf16.gmra.mrb[0].mxu0 %v2331
        %v3487 = vpop.f32.mrb[0].mxu0
        %v3488 = vadd.f32 %v3447, %v3487
        %v3489 = vpop.f32.mrb[0].mxu0
        %v3490 = vpop.f32.mrb[0].mxu0
        %v3491 = vadd.f32 %v3450, %v3490
        %v3492 = vpop.f32.mrb[0].mxu0
        %3493 = vdwg.mxu0
        %3494 = vmatprep.subr.bf16.mxu0 0
        %3495 = vmatpush1.bf16.msra.mxu0 %v3163
        %3496 = vmatprep.subr.bf16.mxu0 0
        %3497 = vmatpush1.bf16.msra.mxu0 %v3164
        %3498 = vmatprep.subr.bf16.mxu0 0
        %3499 = vmatpush1.bf16.msra.mxu0 %v3165
        %3500 = vmatprep.subr.bf16.mxu0 0
        %3501 = vmatpush1.bf16.msra.mxu0 %v3166
        %3502 = vmatprep.subr.bf16.mxu0 0
        %3503 = vmatpush1.bf16.msra.mxu0 %v3167
        %3504 = vmatprep.subr.bf16.mxu0 0
        %3505 = vmatpush1.bf16.msra.mxu0 %v3168
        %3506 = vmatprep.subr.bf16.mxu0 0
        %3507 = vmatpush1.bf16.msra.mxu0 %v3169
        %3508 = vmatprep.subr.bf16.mxu0 0
        %3509 = vmatpush1.bf16.msra.mxu0 %v3170
        %3510 = vmatprep.subr.bf16.mxu0 0
        %3511 = vmatpush1.bf16.msra.mxu0 %v3171
        %3512 = vmatprep.subr.bf16.mxu0 0
        %3513 = vmatpush1.bf16.msra.mxu0 %v3172
        %3514 = vmatprep.subr.bf16.mxu0 0
        %3515 = vmatpush1.bf16.msra.mxu0 %v3173
        %3516 = vmatprep.subr.bf16.mxu0 0
        %3517 = vmatpush1.bf16.msra.mxu0 %v3174
        %3518 = vmatprep.subr.bf16.mxu0 0
        %3519 = vmatpush1.bf16.msra.mxu0 %v3175
        %3520 = vmatprep.subr.bf16.mxu0 0
        %3521 = vmatpush1.bf16.msra.mxu0 %v3176
        %3522 = vmatprep.subr.bf16.mxu0 0
        %3523 = vmatpush1.bf16.msra.mxu0 %v3177
        %3524 = vmatprep.subr.bf16.mxu0 0
        %3525 = vmatpush1.bf16.msra.mxu0 %v3178
        %3526 = vmatprep.mubr.bf16.mxu0 %v2334
        %3527 = vmatmul.mubr.bf16.gmra.mrb[0].mxu0 %v2333
        %v3528 = vpop.f32.mrb[0].mxu0
        %v3529 = vadd.f32 %v3488, %v3528
        %v3530 = vpop.f32.mrb[0].mxu0
        %v3531 = vpop.f32.mrb[0].mxu0
        %v3532 = vadd.f32 %v3491, %v3531
        %v3533 = vpop.f32.mrb[0].mxu0
        %3534 = vdwg.mxu0
        %3535 = vmatprep.subr.bf16.mxu0 0
        %3536 = vmatpush1.bf16.msra.mxu0 %v3179
        %3537 = vmatprep.subr.bf16.mxu0 0
        %3538 = vmatpush1.bf16.msra.mxu0 %v3180
        %3539 = vmatprep.subr.bf16.mxu0 0
        %3540 = vmatpush1.bf16.msra.mxu0 %v3181
        %3541 = vmatprep.subr.bf16.mxu0 0
        %3542 = vmatpush1.bf16.msra.mxu0 %v3182
        %3543 = vmatprep.subr.bf16.mxu0 0
        %3544 = vmatpush1.bf16.msra.mxu0 %v3183
        %3545 = vmatprep.subr.bf16.mxu0 0
        %3546 = vmatpush1.bf16.msra.mxu0 %v3184
        %3547 = vmatprep.subr.bf16.mxu0 0
        %3548 = vmatpush1.bf16.msra.mxu0 %v3185
        %3549 = vmatprep.subr.bf16.mxu0 0
        %3550 = vmatpush1.bf16.msra.mxu0 %v3186
        %3551 = vmatprep.subr.bf16.mxu0 0
        %3552 = vmatpush1.bf16.msra.mxu0 %v3187
        %3553 = vmatprep.subr.bf16.mxu0 0
        %3554 = vmatpush1.bf16.msra.mxu0 %v3188
        %3555 = vmatprep.subr.bf16.mxu0 0
        %3556 = vmatpush1.bf16.msra.mxu0 %v3189
        %3557 = vmatprep.subr.bf16.mxu0 0
        %3558 = vmatpush1.bf16.msra.mxu0 %v3190
        %3559 = vmatprep.subr.bf16.mxu0 0
        %3560 = vmatpush1.bf16.msra.mxu0 %v3191
        %3561 = vmatprep.subr.bf16.mxu0 0
        %3562 = vmatpush1.bf16.msra.mxu0 %v3192
        %3563 = vmatprep.subr.bf16.mxu0 0
        %3564 = vmatpush1.bf16.msra.mxu0 %v3193
        %3565 = vmatprep.subr.bf16.mxu0 0
        %3566 = vmatpush1.bf16.msra.mxu0 %v3194
        %3567 = vmatprep.mubr.bf16.mxu0 %v2336
        %3568 = vmatmul.mubr.bf16.gmra.mrb[0].mxu0 %v2335
        %v3569 = vpop.f32.mrb[0].mxu0
        %v3570 = vadd.f32 %v3529, %v3569
        %v3571 = vpop.f32.mrb[0].mxu0
        %v3572 = vpop.f32.mrb[0].mxu0
        %v3573 = vadd.f32 %v3532, %v3572
        %v3574 = vpop.f32.mrb[0].mxu0
        %3575 = vdwg.mxu0
        %3576 = vmatprep.subr.bf16.mxu0 0
        %3577 = vmatpush1.bf16.msra.mxu0 %v3195
        %3578 = vmatprep.subr.bf16.mxu0 0
        %3579 = vmatpush1.bf16.msra.mxu0 %v3196
        %3580 = vmatprep.subr.bf16.mxu0 0
        %3581 = vmatpush1.bf16.msra.mxu0 %v3197
        %3582 = vmatprep.subr.bf16.mxu0 0
        %3583 = vmatpush1.bf16.msra.mxu0 %v3198
        %3584 = vmatprep.subr.bf16.mxu0 0
        %3585 = vmatpush1.bf16.msra.mxu0 %v3199
        %3586 = vmatprep.subr.bf16.mxu0 0
        %3587 = vmatpush1.bf16.msra.mxu0 %v3200
        %3588 = vmatprep.subr.bf16.mxu0 0
        %3589 = vmatpush1.bf16.msra.mxu0 %v3201
        %3590 = vmatprep.subr.bf16.mxu0 0
        %3591 = vmatpush1.bf16.msra.mxu0 %v3202
        %3592 = vmatprep.subr.bf16.mxu0 0
        %3593 = vmatpush1.bf16.msra.mxu0 %v3203
        %3594 = vmatprep.subr.bf16.mxu0 0
        %3595 = vmatpush1.bf16.msra.mxu0 %v3204
        %3596 = vmatprep.subr.bf16.mxu0 0
        %3597 = vmatpush1.bf16.msra.mxu0 %v3205
        %3598 = vmatprep.subr.bf16.mxu0 0
        %3599 = vmatpush1.bf16.msra.mxu0 %v3206
        %3600 = vmatprep.subr.bf16.mxu0 0
        %3601 = vmatpush1.bf16.msra.mxu0 %v3207
        %3602 = vmatprep.subr.bf16.mxu0 0
        %3603 = vmatpush1.bf16.msra.mxu0 %v3208
        %3604 = vmatprep.subr.bf16.mxu0 0
        %3605 = vmatpush1.bf16.msra.mxu0 %v3209
        %3606 = vmatprep.subr.bf16.mxu0 0
        %3607 = vmatpush1.bf16.msra.mxu0 %v3210
        %3608 = vmatprep.mubr.bf16.mxu0 %v2338
        %3609 = vmatmul.mubr.bf16.gmra.mrb[0].mxu0 %v2337
        %v3610 = vpop.f32.mrb[0].mxu0
        %v3611 = vadd.f32 %v3570, %v3610
        %v3612 = vpop.f32.mrb[0].mxu0
        %v3613 = vpop.f32.mrb[0].mxu0
        %v3614 = vadd.f32 %v3573, %v3613
        %v3615 = vpop.f32.mrb[0].mxu0
        %3616 = vdwg.mxu0
        %3617 = vmatprep.subr.bf16.mxu0 0
        %3618 = vmatpush1.bf16.msra.mxu0 %v3211
        %3619 = vmatprep.subr.bf16.mxu0 0
        %3620 = vmatpush1.bf16.msra.mxu0 %v3212
        %3621 = vmatprep.subr.bf16.mxu0 0
        %3622 = vmatpush1.bf16.msra.mxu0 %v3213
        %3623 = vmatprep.subr.bf16.mxu0 0
        %3624 = vmatpush1.bf16.msra.mxu0 %v3214
        %3625 = vmatprep.subr.bf16.mxu0 0
        %3626 = vmatpush1.bf16.msra.mxu0 %v3215
        %3627 = vmatprep.subr.bf16.mxu0 0
        %3628 = vmatpush1.bf16.msra.mxu0 %v3216
        %3629 = vmatprep.subr.bf16.mxu0 0
        %3630 = vmatpush1.bf16.msra.mxu0 %v3217
        %3631 = vmatprep.subr.bf16.mxu0 0
        %3632 = vmatpush1.bf16.msra.mxu0 %v3218
        %3633 = vmatprep.subr.bf16.mxu0 0
        %3634 = vmatpush1.bf16.msra.mxu0 %v3219
        %3635 = vmatprep.subr.bf16.mxu0 0
        %3636 = vmatpush1.bf16.msra.mxu0 %v3220
        %3637 = vmatprep.subr.bf16.mxu0 0
        %3638 = vmatpush1.bf16.msra.mxu0 %v3221
        %3639 = vmatprep.subr.bf16.mxu0 0
        %3640 = vmatpush1.bf16.msra.mxu0 %v3222
        %3641 = vmatprep.subr.bf16.mxu0 0
        %3642 = vmatpush1.bf16.msra.mxu0 %v3223
        %3643 = vmatprep.subr.bf16.mxu0 0
        %3644 = vmatpush1.bf16.msra.mxu0 %v3224
        %3645 = vmatprep.subr.bf16.mxu0 0
        %3646 = vmatpush1.bf16.msra.mxu0 %v3225
        %3647 = vmatprep.subr.bf16.mxu0 0
        %3648 = vmatpush1.bf16.msra.mxu0 %v3226
        %3649 = vmatprep.mubr.bf16.mxu0 %v2340
        %3650 = vmatmul.mubr.bf16.gmra.mrb[0].mxu0 %v2339
        %v3651 = vpop.f32.mrb[0].mxu0
        %v3652 = vadd.f32 %v3611, %v3651
        %v3653 = vpop.f32.mrb[0].mxu0
        %v3654 = vpop.f32.mrb[0].mxu0
        %v3655 = vadd.f32 %v3614, %v3654
        %v3656 = vpop.f32.mrb[0].mxu0
        %3657 = vdwg.mxu0
        %3658 = vmatprep.subr.bf16.mxu0 0
        %3659 = vmatpush1.bf16.msra.mxu0 %v3227
        %3660 = vmatprep.subr.bf16.mxu0 0
        %3661 = vmatpush1.bf16.msra.mxu0 %v3228
        %3662 = vmatprep.subr.bf16.mxu0 0
        %3663 = vmatpush1.bf16.msra.mxu0 %v3229
        %3664 = vmatprep.subr.bf16.mxu0 0
        %3665 = vmatpush1.bf16.msra.mxu0 %v3230
        %3666 = vmatprep.subr.bf16.mxu0 0
        %3667 = vmatpush1.bf16.msra.mxu0 %v3231
        %3668 = vmatprep.subr.bf16.mxu0 0
        %3669 = vmatpush1.bf16.msra.mxu0 %v3232
        %3670 = vmatprep.subr.bf16.mxu0 0
        %3671 = vmatpush1.bf16.msra.mxu0 %v3233
        %3672 = vmatprep.subr.bf16.mxu0 0
        %3673 = vmatpush1.bf16.msra.mxu0 %v3234
        %3674 = vmatprep.subr.bf16.mxu0 0
        %3675 = vmatpush1.bf16.msra.mxu0 %v3235
        %3676 = vmatprep.subr.bf16.mxu0 0
        %3677 = vmatpush1.bf16.msra.mxu0 %v3236
        %3678 = vmatprep.subr.bf16.mxu0 0
        %3679 = vmatpush1.bf16.msra.mxu0 %v3237
        %3680 = vmatprep.subr.bf16.mxu0 0
        %3681 = vmatpush1.bf16.msra.mxu0 %v3238
        %3682 = vmatprep.subr.bf16.mxu0 0
        %3683 = vmatpush1.bf16.msra.mxu0 %v3239
        %3684 = vmatprep.subr.bf16.mxu0 0
        %3685 = vmatpush1.bf16.msra.mxu0 %v3240
        %3686 = vmatprep.subr.bf16.mxu0 0
        %3687 = vmatpush1.bf16.msra.mxu0 %v3241
        %3688 = vmatprep.subr.bf16.mxu0 0
        %3689 = vmatpush1.bf16.msra.mxu0 %v3242
        %3690 = vmatprep.mubr.bf16.mxu0 %v2342
        %3691 = vmatmul.mubr.bf16.gmra.mrb[0].mxu0 %v2341
        %v3692 = vpop.f32.mrb[0].mxu0
        %v3693 = vadd.f32 %v3652, %v3692
        %v3694 = vpop.f32.mrb[0].mxu0
        %v3695 = vpop.f32.mrb[0].mxu0
        %v3696 = vadd.f32 %v3655, %v3695
        %v3697 = vpop.f32.mrb[0].mxu0
        %3698 = vdwg.mxu0
        %v3699 = vadd.f32 %v1669, %v3693
        %v3700 = vadd.f32 %v1670, %v3696
        %v3701 = vsel %vm577, %v3699, 0.0
        %3702 = vadd.xlane.f32.xlu0 %v3701
        %v3703 = vpop.xlane.xlu0 %3702
        %v3704 = vsel %vm577, %v3700, 0.0
        %3705 = vadd.xlane.f32.xlu0 %v3704
        %v3706 = vpop.xlane.xlu0 %3705
        %v3707 = vmul.f32 %v3703, %v1638
        %v3708 = vmul.f32 %v3706, %v1638
        %v3709 = vsub.f32 %v3699, %v3707
        %v3710 = vsub.f32 %v3700, %v3708
        %v3711 = vmul.f32 %v3709, %v3709
        %v3712 = vmul.f32 %v3710, %v3710
        %v3713 = vsel %vm577, %v3711, 0.0
        %3714 = vadd.xlane.f32.xlu0 %v3713
        %v3715 = vpop.xlane.xlu0 %3714
        %v3716 = vsel %vm577, %v3712, 0.0
        %3717 = vadd.xlane.f32.xlu0 %v3716
        %v3718 = vpop.xlane.xlu0 %3717
        %v3719 = vmul.f32 %v3715, %v1638
        %v3720 = vmul.f32 %v3718, %v1638
        %v3721 = vadd.f32 %v3719, 1e-05
        %v3722 = vadd.f32 %v3720, 1e-05
        %v3723 = vrsqrt.pop %v3721
        %v3724 = vrsqrt.pop %v3722
        %v3725 = vmul.f32 %v3709, %v3723
        %v3726 = vmul.f32 %v3710, %v3724
        %v3727 = vlaneseq
        %v3728 = vshrl.u32 %v3727, 7
        %v3729 = vsub.s32 4, %v3728
        %v3730 = vrot.slane %v628, %v3729
        %v3731 = vmul.f32 %v3725, %v3730
        %v3732 = vmul.f32 %v3726, %v3730
        %v3733 = vlaneseq
        %v3734 = vshrl.u32 %v3733, 7
        %v3735 = vsub.s32 5, %v3734
        %v3736 = vrot.slane %v628, %v3735
        %v3737 = vadd.f32 %v3731, %v3736
        %v3738 = vadd.f32 %v3732, %v3736
        %3739 = vst.msk [vmem:[#allocation2] sm:$0xff] %vm577, %v3737
        %3740 = vst.msk [vmem:[#allocation2 + $0x8] sm:$0xff] %vm577, %v3738
        %p3741 = scmp.eq.s32.totalorder %s28, 1
        // Predicated region
        $region69: #{dronelog_forward.1} parent=63 // pred_check
          %p3742 = pneg %p3741
        $region70: #{dronelog_forward.1} parent=63 // pred_check_branch
          %3744 = sbr.rel (%p3742) target = $region72
        $region71: #{dronelog_forward.1} parent=63 // pred_region
          %v3745 = vsel %vm577, %v3737, 0.0
          %v3746 = vrot.slane %v3745, 4
          %v3747 = vadd.f32 %v3745, %v3746
          %v3748 = vrot.slane %v3747, 2
          %v3749 = vadd.f32 %v3747, %v3748
          %v3750 = vrot.slane %v3749, 1
          %v3751 = vadd.f32 %v3749, %v3750
          %v3752 = vsel %vm577, %v3738, 0.0
          %v3753 = vrot.slane %v3752, 4
          %v3754 = vadd.f32 %v3752, %v3753
          %v3755 = vrot.slane %v3754, 2
          %v3756 = vadd.f32 %v3754, %v3755
          %v3757 = vrot.slane %v3756, 1
          %v3758 = vadd.f32 %v3756, %v3757
          %v3759 = vsub.f32 %v3751, %v3737
          %v3760 = vsub.f32 %v3758, %v3738
          %v3761 = vmul.f32 %v3759, 0.14285715
          %v3762 = vmul.f32 %v3760, 0.14285715
          %v3763 = vpack.c.bf16 %v3761, %v3761
          %v3764 = vpack.c.bf16 %v3762, %v3762
          %v3765 = vld [vmem:[%s9] sm:$0xf]
          %v3766 = vld [vmem:[%s9 + $0x4] sm:$0xf]
          %v3767 = vld [vmem:[%s9 + $0x8] sm:$0xf]
          %v3768 = vld [vmem:[%s9 + $0xc] sm:$0xf]
          %v3769 = vld [vmem:[%s10] sm:$0x1]
          %v3771 = vlaneseq
          %v3772 = vshrl.u32 %v3771, 7
          %v3773 = vsub.s32 0, %v3772
          %v3774 = vrot.slane %v3769, %v3773
          %v3778 = vunpack.c.l.b16 %v3763
          %v3779 = vunpack.c.l.b16 %v3764
          %v3780 = vrot.slane %v3779, 7
          %vm3781 = vcmask 1041409
          %v3782 = vsel %vm3781, %v3780, %v3778
          %v3783 = vpack.c.b16 %v3782, %v3782
          %v3788 = vunpack.c.l.b16 %v3765
          %v3789 = vunpack.c.l.b16 %v3766
          %v3790 = vunpack.c.l.b16 %v3767
          %v3791 = vunpack.c.l.b16 %v3768
          %v3792 = vpack.c.b16 %v3789, %v3788
          %v3793 = vpack.c.b16 %v3791, %v3790
          %v3797 = vsel %vm577, %v3783, 0
          %3799 = vmatprep.subr.bf16.mxu0 0
          %3800 = vmatpush1.bf16.msra.mxu0 %v3792
          %3801 = vmatprep.subr.bf16.mxu0 0
          %3802 = vmatpush1.bf16.msra.mxu0 %v3793
          %3803 = vmatprep.subr.bf16.mxu0 0
          %3804 = vmatpush1.bf16.msra.mxu0 0
          %3805 = vmatprep.subr.bf16.mxu0 0
          %3806 = vmatpush1.bf16.msra.mxu0 0
          %3807 = vmatprep.subr.bf16.mxu0 0
          %3808 = vmatpush1.bf16.msra.mxu0 0
          %3809 = vmatprep.subr.bf16.mxu0 0
          %3810 = vmatpush1.bf16.msra.mxu0 0
          %3811 = vmatprep.subr.bf16.mxu0 0
          %3812 = vmatpush1.bf16.msra.mxu0 0
          %3813 = vmatprep.subr.bf16.mxu0 0
          %3814 = vmatpush1.bf16.msra.mxu0 0
          %3815 = vmatprep.subr.bf16.mxu0 0
          %3816 = vmatpush1.bf16.msra.mxu0 0
          %3817 = vmatprep.subr.bf16.mxu0 0
          %3818 = vmatpush1.bf16.msra.mxu0 0
          %3819 = vmatprep.subr.bf16.mxu0 0
          %3820 = vmatpush1.bf16.msra.mxu0 0
          %3821 = vmatprep.subr.bf16.mxu0 0
          %3822 = vmatpush1.bf16.msra.mxu0 0
          %3823 = vmatprep.subr.bf16.mxu0 0
          %3824 = vmatpush1.bf16.msra.mxu0 0
          %3825 = vmatprep.subr.bf16.mxu0 0
          %3826 = vmatpush1.bf16.msra.mxu0 0
          %3827 = vmatprep.subr.bf16.mxu0 0
          %3828 = vmatpush1.bf16.msra.mxu0 0
          %3829 = vmatprep.subr.bf16.mxu0 0
          %3830 = vmatpush1.bf16.msra.mxu0 0
          %3831 = vmatprep.mubr.bf16.mxu0 0
          %3832 = vmatmul.mubr.bf16.gmra.mrb[0].mxu0 %v3797
          %v3833 = vpop.f32.mrb[0].mxu0
          %v3834 = vadd.f32 %v3774, %v3833
          %v3835 = vpop.f32.mrb[0].mxu0
          %v3836 = vpop.f32.mrb[0].mxu0
          %v3837 = vpop.f32.mrb[0].mxu0
          %3838 = vdwg.mxu0
          %3839 = vst [vmem:[#allocation3] sm:$0x3] %v3834
        $region72: #{dronelog_forward.1} parent=63 // pred_fallthru
          _
        // Predicated region
        $region73: #{dronelog_forward.1} parent=63 // pred_check
          %p3840 = pneg %p329
        $region74: #{dronelog_forward.1} parent=63 // pred_check_branch
          %3842 = sbr.rel (%p3840) target = $region76
        $region75: #{dronelog_forward.1} parent=63 // pred_region
          %s3844 = ssub.s32 32, 32
          %3845 = vsyncadd [#allocation4], %s3844
          %s3846 = smul.addr %s27, 32
          %s3847 = scalar_lea.hbm %s11, %s3846
          %s3849 = sshll.u32 [#allocation3], 4
          %s3850 = int_to_ptr.vmem [resolvable:$true] %s3849
          %3852 = dma.vmem_to_hbm [thread:$0]  %s3850, 32, %s3847, [#allocation4]
        $region76: #{dronelog_forward.1} parent=63 // pred_fallthru
          _
        // Predicated region
        $region77: #{dronelog_forward.1} parent=63 // pred_check
          %p3853 = pneg %p329
        $region78: #{dronelog_forward.1} parent=63 // pred_check_branch
          %3855 = sbr.rel (%p3853) target = $region80
        $region79: #{dronelog_forward.1} parent=63 // pred_region
          %3856 = dma.done [#allocation4], 32
        $region80: #{dronelog_forward.1} parent=63 // pred_fallthru
          _
      $region64: #{dronelog_forward.1} parent=5 // pred_fallthru
        _
      %p3857 = scmp.le.s32.totalorder 2, %s18
      // Predicated region
      $region81: #{dronelog_forward.1} parent=5 // pred_check
        %p3858 = pneg %p3857
      $region82: #{dronelog_forward.1} parent=5 // pred_check_branch
        %3860 = sbr.rel (%p3858) target = $region84
      $region83: #{dronelog_forward.1} parent=5 // pred_region
        %s3861 = ssub.s32 %s18, 2
      $region84: #{dronelog_forward.1} parent=5 // pred_fallthru
        _
    $region6: #{dronelog_forward.1} parent=1 // loop_footer
      %s22 = sadd.s32 1, %s18
    $region7: #{dronelog_forward.1} parent=1 // loop_footer_branch
      %17 = sbr.rel target = $region3
    $region8: #{dronelog_forward.1} parent=1 // loop_exit
      _
    %3862 = vsyncpa [#allocation4], 1
    %s3863 = scalar_lea.sflag [#allocation4], 1
    %3864 = vsyncpa %s3863, 1

</llo_original>
